<compile_context>
chip_gen: v6e
topology: v6e:2x2x1
jax: 0.10.0
libtpu: 0.0.40
codegen_flags: <defaults>
</compile_context>

<pallas_src>
import jax
import jax.numpy as jnp
from jax import lax
from jax.experimental import pallas as pl
from jax.experimental.pallas import tpu as pltpu


# ---------------------------------------------------------------------------
# 1x1 conv (pointwise channel matmul): y = x @ w.T + b, tiled over rows.
# ---------------------------------------------------------------------------
def _dense1x1_kernel(x_ref, w_ref, b_ref, o_ref):
    x = x_ref[...].astype(jnp.bfloat16)
    w = w_ref[...].astype(jnp.bfloat16)
    y = lax.dot_general(x, w, (((1,), (1,)), ((), ())),
                        preferred_element_type=jnp.float32)
    o_ref[...] = y + b_ref[...]


def conv1x1(xm, w, b, *, block_m=1024):
    # xm: (M, Cin) f32, w: (Cout, Cin) f32, b: (Cout,) f32 -> (M, Cout) f32
    m, cin = xm.shape
    cout = w.shape[0]
    tm = m if m <= block_m else block_m
    grid = pl.cdiv(m, tm)
    return pl.pallas_call(
        _dense1x1_kernel,
        out_shape=jax.ShapeDtypeStruct((m, cout), jnp.float32),
        grid=(grid,),
        in_specs=[pl.BlockSpec((tm, cin), lambda i: (i, 0)),
                  pl.BlockSpec((cout, cin), lambda i: (0, 0)),
                  pl.BlockSpec((1, cout), lambda i: (0, 0))],
        out_specs=pl.BlockSpec((tm, cout), lambda i: (i, 0)),
        compiler_params=pltpu.CompilerParams(
            dimension_semantics=("parallel",),
            vmem_limit_bytes=32 * 1024 * 1024),
    )(xm, w, b.reshape(1, cout))


# ---------------------------------------------------------------------------
# Fused Attention stack kernel: all layers, G slabs per grid step.
# ---------------------------------------------------------------------------
def _choose_group(bn, t, max_lanes=1024):
    """Slabs per block G: prefer lane-dense blocks (G*t multiple of 128) with
    >= 2 grid steps (v7x dual TensorCore), capped for VMEM; otherwise fall
    back to one full block (block dims equal to array dims are always legal)."""
    best = None
    for g in range(1, bn):
        if bn % g == 0 and (g * t) % 128 == 0 and g * t <= max_lanes:
            best = g
    return best if best is not None else bn


def attention_stack(xt, wq3, wk3, wv, wo, w1, b1, w2, b2, *, t, g):
    # xt: (C, BN*T) f32, slab-major / time-minor along the lane axis.
    c, total = xt.shape
    lw = g * t
    n_blocks = total // lw
    n_layers, h, _ = wq3.shape

    # Constants, hoisted out of the kernel (constant index_map -> DMA'd once).
    idx = jnp.arange(lw, dtype=jnp.int32)
    tmod = idx % t
    shift_mask = jnp.stack([(tmod >= 1), (tmod >= 2)], axis=0).astype(jnp.float32)
    same = (idx[:, None] // t) == (idx[None, :] // t)
    upper = idx[None, :] > idx[:, None]
    # In-slab future positions: -1000 (matches reference); cross-slab: -1e30
    # so their softmax weight is exactly 0 (different bmm batch in reference).
    attn_bias = jnp.where(same, jnp.where(upper, -1000.0, 0.0),
                          -1e30).astype(jnp.float32)

    def kernel(mask_ref, bias_ref, x_ref, wq_ref, wk_ref, wv_ref, wo_ref,
               w1_ref, b1_ref, w2_ref, b2_ref, o_ref):
        f32, bf16 = jnp.float32, jnp.bfloat16
        masks = mask_ref[...]
        m1 = masks[0:1, :]                              # (1, Lw)
        m2 = masks[1:2, :]
        bias = bias_ref[...]                            # (Lw, Lw)
        x = x_ref[...]                                  # (C, Lw) f32
        for l in range(n_layers):                       # unrolled, static L
            # causal shifts via XLU roll; first s columns of each slab masked
            x1 = pltpu.roll(x, 1, 1) * m1
            x2 = pltpu.roll(x, 2, 1) * m2
            xa = jnp.concatenate([x, x1, x2], axis=0).astype(bf16)   # (3C, Lw)
            q = jnp.dot(wq_ref[l].astype(bf16), xa,
                        preferred_element_type=f32)                  # (H, Lw)
            k = jnp.dot(wk_ref[l].astype(bf16), xa,
                        preferred_element_type=f32)                  # (H, Lw)
            v = jnp.dot(wv_ref[l].astype(bf16), x.astype(bf16),
                        preferred_element_type=f32)                  # (H, Lw)
            # block-diagonal scores: s[i, j] = sum_h q[h, i] * k[h, j]
            s = lax.dot_general(q.astype(bf16), k.astype(bf16),
                                (((0,), (0,)), ((), ())),
                                preferred_element_type=f32)          # (Lw, Lw)
            s = s + bias
            s = s - jnp.max(s, axis=-1, keepdims=True)
            p = jnp.exp(s)
            p = p * pl.reciprocal(jnp.sum(p, axis=-1, keepdims=True),
                                  approx=True)
            # attn[h, i] = sum_j p[i, j] * v[h, j]
            attn = lax.dot_general(v.astype(bf16), p.astype(bf16),
                                   (((1,), (1,)), ((), ())),
                                   preferred_element_type=f32)       # (H, Lw)
            o = jnp.dot(wo_ref[l].astype(bf16), attn.astype(bf16),
                        preferred_element_type=f32)                  # (C, Lw)
            out1 = x + o                                             # residual 1
            h1 = jnp.maximum(
                jnp.dot(w1_ref[l].astype(bf16), out1.astype(bf16),
                        preferred_element_type=f32) + b1_ref[l], 0.0)
            ff = jnp.dot(w2_ref[l].astype(bf16), h1.astype(bf16),
                         preferred_element_type=f32) + b2_ref[l]
            x = out1 + ff                                            # residual 2
        o_ref[...] = x

    return pl.pallas_call(
        kernel,
        out_shape=jax.ShapeDtypeStruct((c, total), jnp.float32),
        grid=(n_blocks,),
        in_specs=[
            pl.BlockSpec((2, lw), lambda i: (0, 0)),                 # roll masks
            pl.BlockSpec((lw, lw), lambda i: (0, 0)),                # attn bias
            pl.BlockSpec((c, lw), lambda i: (0, i)),                 # activations
            pl.BlockSpec((n_layers, h, 3 * c), lambda i: (0, 0, 0)),  # wq (fused)
            pl.BlockSpec((n_layers, h, 3 * c), lambda i: (0, 0, 0)),  # wk (fused)
            pl.BlockSpec((n_layers, h, c), lambda i: (0, 0, 0)),      # wv
            pl.BlockSpec((n_layers, c, h), lambda i: (0, 0, 0)),      # wo
            pl.BlockSpec((n_layers, c, c), lambda i: (0, 0, 0)),      # ff w1
            pl.BlockSpec((n_layers, c, 1), lambda i: (0, 0, 0)),      # ff b1
            pl.BlockSpec((n_layers, c, c), lambda i: (0, 0, 0)),      # ff w2
            pl.BlockSpec((n_layers, c, 1), lambda i: (0, 0, 0)),      # ff b2
        ],
        out_specs=pl.BlockSpec((c, lw), lambda i: (0, i)),
        compiler_params=pltpu.CompilerParams(
            dimension_semantics=("parallel",),
            vmem_limit_bytes=32 * 1024 * 1024),
    )(shift_mask, attn_bias, xt, wq3, wk3, wv, wo, w1, b1, w2, b2)


# ---------------------------------------------------------------------------
# Full Transformer forward (wrapper glue in plain JAX, jit-able).
# ---------------------------------------------------------------------------
def transformer_forward(x, params, *, n_pred):
    b, t, n, ic = x.shape
    hc = params['in_w'].shape[0]
    ocn = params['out_w'].shape[0]
    bn = b * n

    # input 1x1 conv (pointwise over channels)
    xh = conv1x1(x.reshape(b * t * n, ic), params['in_w'], params['in_b'])
    xh = xh.reshape(b, t, n, hc)
    # (C, BN, T) slab-major layout for the attention stack
    xh = jnp.transpose(xh, (3, 0, 2, 1)).reshape(hc, bn, t)

    # Fuse the 3 causal-conv taps: column blocks multiply [x ; shift1 ; shift2].
    wq3 = jnp.concatenate([params['wq'][:, 2], params['wq'][:, 1],
                           params['wq'][:, 0]], axis=-1)              # (L, H, 3C)
    wk3 = jnp.concatenate([params['wk'][:, 2], params['wk'][:, 1],
                           params['wk'][:, 0]], axis=-1)

    cols = []
    for ts in range(n_pred):
        # In the reference, x_out[timestep:] is always empty at this point, so
        # the concatenation is exactly a time slice of x_in (exact semantics
        # kept; full recompute per step as in the original module).
        t_cur = t - ts
        xt = xh[:, :, ts:].reshape(hc, bn * t_cur)
        g = _choose_group(bn, t_cur)
        out = attention_stack(xt, wq3, wk3, params['wv'], params['wo'],
                              params['w1'], params['b1'],
                              params['w2'], params['b2'], t=t_cur, g=g)
        cols.append(out.reshape(hc, bn, t_cur)[:, :, -1])             # (hc, bn)
    xo = jnp.stack(cols, axis=-1)                                     # (hc, bn, n_pred)

    # output 1x1 conv
    om = conv1x1(jnp.transpose(xo, (1, 2, 0)).reshape(bn * n_pred, hc),
                 params['out_w'], params['out_b'])                    # (bn*np, oc)
    out = om.reshape(b, n, n_pred, ocn)
    return jnp.transpose(out, (0, 2, 1, 3))                           # (b, np, n, oc)


def init_params(key, ic, oc, hc, n_layers):
    h = hc // 2
    ks = jax.random.split(key, 12)

    def rnd(k, shape, scale=0.1):
        return scale * jax.random.normal(k, shape, dtype=jnp.float32)

    return {
        'in_w': rnd(ks[0], (hc, ic)),              # Conv2d(ic, hc, 1) (squeezed)
        'in_b': rnd(ks[1], (hc,)),
        'out_w': rnd(ks[2], (oc, hc)),             # Conv2d(hc, oc, 1) (squeezed)
        'out_b': rnd(ks[3], (oc,)),
        'wq': rnd(ks[4], (n_layers, 3, h, hc)),    # Conv1d(hc, h, 3), taps-major
        'wk': rnd(ks[5], (n_layers, 3, h, hc)),
        'wv': rnd(ks[6], (n_layers, h, hc)),       # Conv1d(hc, h, 1)
        'wo': rnd(ks[7], (n_layers, hc, h)),       # Conv1d(h, hc, 1)
        'w1': rnd(ks[8], (n_layers, hc, hc)),      # ff_W[0]
        'b1': rnd(ks[9], (n_layers, hc, 1)),
        'w2': rnd(ks[10], (n_layers, hc, hc)),     # ff_W[2]
        'b2': rnd(ks[11], (n_layers, hc, 1)),
    }


# ---------------------------------------------------------------------------
# Pure-JAX reference (mirrors the PyTorch module) for a numerical check.
# ---------------------------------------------------------------------------
def _ref_attention(xf, wq, wk, wv, wo, w1, b1, w2, b2):
    bn, c, t = xf.shape

    def shift(v, s):
        pad = jnp.zeros((bn, c, s), v.dtype)
        return jnp.concatenate([pad, v[..., :t - s]], axis=-1)

    def cconv(w3):
        return (jnp.einsum('hc,gct->ght', w3[2], xf)
                + jnp.einsum('hc,gct->ght', w3[1], shift(xf, 1))
                + jnp.einsum('hc,gct->ght', w3[0], shift(xf, 2)))

    q, k = cconv(wq), cconv(wk)
    v = jnp.einsum('hc,gct->ght', wv, xf)
    s = jnp.einsum('ghi,ghj->gij', q, k)
    s = s - 1000.0 * jnp.triu(jnp.ones((t, t), jnp.float32), k=1)
    p = jax.nn.softmax(s, axis=-1)
    attn = jnp.einsum('gij,ghj->ghi', p, v)
    out1 = xf + jnp.einsum('ch,ght->gct', wo, attn)
    h1 = jnp.maximum(jnp.einsum('dc,gct->gdt', w1, out1) + b1, 0.0)
    return out1 + jnp.einsum('cd,gdt->gct', w2, h1) + b2


def reference_forward(x, params, *, n_pred):
    b, t, n, ic = x.shape
    hc = params['in_w'].shape[0]
    n_layers = params['wq'].shape[0]
    xh = jnp.einsum('btni,oi->btno', x, params['in_w']) + params['in_b']
    xf = jnp.transpose(xh, (0, 2, 3, 1)).reshape(b * n, hc, t)
    cols = []
    for ts in range(n_pred):
        xt = xf[..., ts:]
        for l in range(n_layers):
            xt = _ref_attention(xt, params['wq'][l], params['wk'][l],
                                params['wv'][l], params['wo'][l],
                                params['w1'][l], params['b1'][l],
                                params['w2'][l], params['b2'][l])
        cols.append(xt[..., -1])                                      # (bn, hc)
    xo = jnp.stack(cols, axis=-1)                                     # (bn, hc, np)
    om = jnp.einsum('oc,gcp->gop', params['out_w'], xo) \
        + params['out_b'][None, :, None]
    out = om.reshape(b, n, -1, n_pred)
    return jnp.transpose(out, (0, 3, 1, 2))


if __name__ == "__main__":
    # x: (batch, n_his, num_nodes, in_channels)
    B, T, N, IC = 2, 8, 4, 2
    OC, HC, NL, NP = 2, 8, 2, 2

    key = jax.random.PRNGKey(0)
    kx, kp = jax.random.split(key)
    x = jax.random.normal(kx, (B, T, N, IC), dtype=jnp.float32)
    params = init_params(kp, IC, OC, HC, NL)

    fwd = jax.jit(transformer_forward, static_argnames=("n_pred",))
    out = jax.block_until_ready(fwd(x, params, n_pred=NP))

    assert out.shape == (B, NP, N, OC), out.shape
    assert bool(jnp.all(jnp.isfinite(out)))

    # Numerical check against a pure-JAX reference of the same module
    # (kernel uses bf16 MXU operands, hence the loose tolerance).
    ref = jax.block_until_ready(
        jax.jit(reference_forward, static_argnames=("n_pred",))(
            x, params, n_pred=NP))
    max_err = float(jnp.max(jnp.abs(out - ref)))
    assert max_err < 2e-2, f"max abs err vs reference: {max_err}"

    print("KERNEL_OK")
</pallas_src>

<mosaic_0001>
module attributes {stable_mosaic.version = 11 : i64} {
  func.func @_dense1x1_kernel(%arg0: i32, %arg1: memref<64x2xf32, #tpu.memory_space<vmem>>, %arg2: memref<8x2xf32, #tpu.memory_space<vmem>>, %arg3: memref<1x8xf32, #tpu.memory_space<vmem>>, %arg4: memref<64x8xf32, #tpu.memory_space<vmem>>) attributes {dimension_semantics = [#tpu.dimension_semantics<parallel>], iteration_bounds = array<i64: 1>, scalar_prefetch = 0 : i64, scratch_operands = 0 : i64, tpu.core_type = #tpu.core_type<tc>, window_params = [{transform_indices = @transform_0, window_bounds = array<i64: 64, 2>}, {pipeline_mode = #tpu.pipeline_mode<synchronous>, transform_indices = @transform_1, window_bounds = array<i64: 8, 2>}, {pipeline_mode = #tpu.pipeline_mode<synchronous>, transform_indices = @transform_2, window_bounds = array<i64: 1, 8>}, {transform_indices = @transform_3, window_bounds = array<i64: 64, 8>}]} {
    %c0 = arith.constant 0 : index
    %c0_0 = arith.constant 0 : index
    %0 = vector.load %arg1[%c0, %c0_0] : memref<64x2xf32, #tpu.memory_space<vmem>>, vector<64x2xf32>
    %1 = arith.truncf %0 : vector<64x2xf32> to vector<64x2xbf16>
    %c0_1 = arith.constant 0 : index
    %c0_2 = arith.constant 0 : index
    %2 = vector.load %arg2[%c0_1, %c0_2] : memref<8x2xf32, #tpu.memory_space<vmem>>, vector<8x2xf32>
    %3 = arith.truncf %2 : vector<8x2xf32> to vector<8x2xbf16>
    %cst = arith.constant dense<0.000000e+00> : vector<64x8xf32>
    %4 = tpu.matmul %1, %3, %cst {dimension_numbers = #tpu.dot_dimension_numbers<[1], [1], [0], [0], [0, 0, 1, 0], [], []>} : vector<64x2xbf16>, vector<8x2xbf16>, vector<64x8xf32> -> vector<64x8xf32>
    %c0_3 = arith.constant 0 : index
    %c0_4 = arith.constant 0 : index
    %5 = vector.load %arg3[%c0_3, %c0_4] : memref<1x8xf32, #tpu.memory_space<vmem>>, vector<1x8xf32>
    %6 = vector.broadcast %5 : vector<1x8xf32> to vector<64x8xf32>
    %7 = arith.addf %4, %6 : vector<64x8xf32>
    %c0_5 = arith.constant 0 : index
    %c0_6 = arith.constant 0 : index
    %8 = vector.load %arg4[%c0_5, %c0_6] : memref<64x8xf32, #tpu.memory_space<vmem>>, vector<64x8xf32>
    tpu.vector_store %arg4[%c0_5, %c0_6], %7 {strides = array<i32>} : memref<64x8xf32, #tpu.memory_space<vmem>>, vector<64x8xf32>,
    return
  }
  func.func @transform_0(%arg0: i32) -> (i32, i32) {
    %c0_i32 = arith.constant 0 : i32
    %c0_i32_0 = arith.constant 0 : i32
    return %arg0, %c0_i32 : i32, i32
  }
  func.func @transform_1(%arg0: i32) -> (i32, i32) {
    %c0_i32 = arith.constant 0 : i32
    %c0_i32_0 = arith.constant 0 : i32
    %c0_i32_1 = arith.constant 0 : i32
    return %c0_i32, %c0_i32_0 : i32, i32
  }
  func.func @transform_2(%arg0: i32) -> (i32, i32) {
    %c0_i32 = arith.constant 0 : i32
    %c0_i32_0 = arith.constant 0 : i32
    %c0_i32_1 = arith.constant 0 : i32
    return %c0_i32, %c0_i32_0 : i32, i32
  }
  func.func @transform_3(%arg0: i32) -> (i32, i32) {
    %c0_i32 = arith.constant 0 : i32
    %c0_i32_0 = arith.constant 0 : i32
    return %arg0, %c0_i32 : i32, i32
  }
}

module attributes {stable_mosaic.version = 11 : i64} {
  func.func @kernel(%arg0: i32, %arg1: memref<2x64xf32, #tpu.memory_space<vmem>>, %arg2: memref<64x64xf32, #tpu.memory_space<vmem>>, %arg3: memref<8x64xf32, #tpu.memory_space<vmem>>, %arg4: memref<2x4x24xf32, #tpu.memory_space<vmem>>, %arg5: memref<2x4x24xf32, #tpu.memory_space<vmem>>, %arg6: memref<2x4x8xf32, #tpu.memory_space<vmem>>, %arg7: memref<2x8x4xf32, #tpu.memory_space<vmem>>, %arg8: memref<2x8x8xf32, #tpu.memory_space<vmem>>, %arg9: memref<2x8x1xf32, #tpu.memory_space<vmem>>, %arg10: memref<2x8x8xf32, #tpu.memory_space<vmem>>, %arg11: memref<2x8x1xf32, #tpu.memory_space<vmem>>, %arg12: memref<8x64xf32, #tpu.memory_space<vmem>>) attributes {dimension_semantics = [#tpu.dimension_semantics<parallel>], iteration_bounds = array<i64: 1>, scalar_prefetch = 0 : i64, scratch_operands = 0 : i64, tpu.core_type = #tpu.core_type<tc>, window_params = [{pipeline_mode = #tpu.pipeline_mode<synchronous>, transform_indices = @transform_0, window_bounds = array<i64: 2, 64>}, {pipeline_mode = #tpu.pipeline_mode<synchronous>, transform_indices = @transform_1, window_bounds = array<i64: 64, 64>}, {transform_indices = @transform_2, window_bounds = array<i64: 8, 64>}, {pipeline_mode = #tpu.pipeline_mode<synchronous>, transform_indices = @transform_3, window_bounds = array<i64: 2, 4, 24>}, {pipeline_mode = #tpu.pipeline_mode<synchronous>, transform_indices = @transform_4, window_bounds = array<i64: 2, 4, 24>}, {pipeline_mode = #tpu.pipeline_mode<synchronous>, transform_indices = @transform_5, window_bounds = array<i64: 2, 4, 8>}, {pipeline_mode = #tpu.pipeline_mode<synchronous>, transform_indices = @transform_6, window_bounds = array<i64: 2, 8, 4>}, {pipeline_mode = #tpu.pipeline_mode<synchronous>, transform_indices = @transform_7, window_bounds = array<i64: 2, 8, 8>}, {pipeline_mode = #tpu.pipeline_mode<synchronous>, transform_indices = @transform_8, window_bounds = array<i64: 2, 8, 1>}, {pipeline_mode = #tpu.pipeline_mode<synchronous>, transform_indices = @transform_9, window_bounds = array<i64: 2, 8, 8>}, {pipeline_mode = #tpu.pipeline_mode<synchronous>, transform_indices = @transform_10, window_bounds = array<i64: 2, 8, 1>}, {transform_indices = @transform_11, window_bounds = array<i64: 8, 64>}]} {
    %c0 = arith.constant 0 : index
    %c0_0 = arith.constant 0 : index
    %0 = vector.load %arg1[%c0, %c0_0] : memref<2x64xf32, #tpu.memory_space<vmem>>, vector<2x64xf32>
    %1 = vector.extract_strided_slice %0 {offsets = [0, 0], sizes = [1, 64], strides = [1, 1]} : vector<2x64xf32> to vector<1x64xf32>
    %2 = vector.extract_strided_slice %0 {offsets = [1, 0], sizes = [1, 64], strides = [1, 1]} : vector<2x64xf32> to vector<1x64xf32>
    %c0_1 = arith.constant 0 : index
    %c0_2 = arith.constant 0 : index
    %3 = vector.load %arg2[%c0_1, %c0_2] : memref<64x64xf32, #tpu.memory_space<vmem>>, vector<64x64xf32>
    %c0_3 = arith.constant 0 : index
    %c0_4 = arith.constant 0 : index
    %4 = vector.load %arg3[%c0_3, %c0_4] : memref<8x64xf32, #tpu.memory_space<vmem>>, vector<8x64xf32>
    %c1_i32 = arith.constant 1 : i32
    %5 = tpu.dynamic_rotate %4 by %c1_i32 dim 1 : vector<8x64xf32>, i32 -> vector<8x64xf32>
    %6 = vector.broadcast %1 : vector<1x64xf32> to vector<8x64xf32>
    %7 = arith.mulf %5, %6 : vector<8x64xf32>
    %c2_i32 = arith.constant 2 : i32
    %8 = tpu.dynamic_rotate %4 by %c2_i32 dim 1 : vector<8x64xf32>, i32 -> vector<8x64xf32>
    %9 = vector.broadcast %2 : vector<1x64xf32> to vector<8x64xf32>
    %10 = arith.mulf %8, %9 : vector<8x64xf32>
    %11 = tpu.concatenate %4, %7, %10 in 0 : vector<8x64xf32>, vector<8x64xf32>, vector<8x64xf32> -> vector<24x64xf32>
    %12 = arith.truncf %11 : vector<24x64xf32> to vector<24x64xbf16>
    %c0_5 = arith.constant 0 : index
    %c0_6 = arith.constant 0 : index
    %c0_7 = arith.constant 0 : index
    %13 = vector.load %arg4[%c0_5, %c0_6, %c0_7] : memref<2x4x24xf32, #tpu.memory_space<vmem>>, vector<1x4x24xf32>
    %14 = vector.shape_cast %13 : vector<1x4x24xf32> to vector<4x24xf32>
    %15 = arith.truncf %14 : vector<4x24xf32> to vector<4x24xbf16>
    %cst = arith.constant dense<0.000000e+00> : vector<4x64xf32>
    %16 = tpu.matmul %15, %12, %cst {dimension_numbers = #tpu.dot_dimension_numbers<[1], [0], [0], [1], [0, 0, 1, 1], [], []>} : vector<4x24xbf16>, vector<24x64xbf16>, vector<4x64xf32> -> vector<4x64xf32>
    %c0_8 = arith.constant 0 : index
    %c0_9 = arith.constant 0 : index
    %c0_10 = arith.constant 0 : index
    %17 = vector.load %arg5[%c0_8, %c0_9, %c0_10] : memref<2x4x24xf32, #tpu.memory_space<vmem>>, vector<1x4x24xf32>
    %18 = vector.shape_cast %17 : vector<1x4x24xf32> to vector<4x24xf32>
    %19 = arith.truncf %18 : vector<4x24xf32> to vector<4x24xbf16>
    %cst_11 = arith.constant dense<0.000000e+00> : vector<4x64xf32>
    %20 = tpu.matmul %19, %12, %cst_11 {dimension_numbers = #tpu.dot_dimension_numbers<[1], [0], [0], [1], [0, 0, 1, 1], [], []>} : vector<4x24xbf16>, vector<24x64xbf16>, vector<4x64xf32> -> vector<4x64xf32>
    %c0_12 = arith.constant 0 : index
    %c0_13 = arith.constant 0 : index
    %c0_14 = arith.constant 0 : index
    %21 = vector.load %arg6[%c0_12, %c0_13, %c0_14] : memref<2x4x8xf32, #tpu.memory_space<vmem>>, vector<1x4x8xf32>
    %22 = vector.shape_cast %21 : vector<1x4x8xf32> to vector<4x8xf32>
    %23 = arith.truncf %22 : vector<4x8xf32> to vector<4x8xbf16>
    %24 = arith.truncf %4 : vector<8x64xf32> to vector<8x64xbf16>
    %cst_15 = arith.constant dense<0.000000e+00> : vector<4x64xf32>
    %25 = tpu.matmul %23, %24, %cst_15 {dimension_numbers = #tpu.dot_dimension_numbers<[1], [0], [0], [1], [0, 0, 1, 1], [], []>} : vector<4x8xbf16>, vector<8x64xbf16>, vector<4x64xf32> -> vector<4x64xf32>
    %26 = arith.truncf %16 : vector<4x64xf32> to vector<4x64xbf16>
    %27 = arith.truncf %20 : vector<4x64xf32> to vector<4x64xbf16>
    %cst_16 = arith.constant dense<0.000000e+00> : vector<64x64xf32>
    %28 = tpu.matmul %26, %27, %cst_16 {dimension_numbers = #tpu.dot_dimension_numbers<[0], [0], [1], [1], [0, 1, 1, 1], [], []>} : vector<4x64xbf16>, vector<4x64xbf16>, vector<64x64xf32> -> vector<64x64xf32>
    %29 = arith.addf %28, %3 : vector<64x64xf32>
    %cst_17 = arith.constant dense<0xFF800000> : vector<64xf32>
    %30 = vector.multi_reduction <maximumf>, %29, %cst_17 [1] : vector<64x64xf32> to vector<64xf32>
    %31 = vector.shape_cast %30 : vector<64xf32> to vector<64x1xf32>
    %32 = vector.broadcast %31 : vector<64x1xf32> to vector<64x64xf32>
    %33 = arith.subf %29, %32 : vector<64x64xf32>
    %34 = math.exp %33 : vector<64x64xf32>
    %cst_18 = arith.constant dense<0.000000e+00> : vector<64xf32>
    %35 = vector.multi_reduction <add>, %34, %cst_18 [1] : vector<64x64xf32> to vector<64xf32>
    %36 = vector.shape_cast %35 : vector<64xf32> to vector<64x1xf32>
    %37 = tpu.reciprocal %36 {approx = true} : vector<64x1xf32> -> vector<64x1xf32>
    %38 = vector.broadcast %37 : vector<64x1xf32> to vector<64x64xf32>
    %39 = arith.mulf %34, %38 : vector<64x64xf32>
    %40 = arith.truncf %25 : vector<4x64xf32> to vector<4x64xbf16>
    %41 = arith.truncf %39 : vector<64x64xf32> to vector<64x64xbf16>
    %cst_19 = arith.constant dense<0.000000e+00> : vector<4x64xf32>
    %42 = tpu.matmul %40, %41, %cst_19 {dimension_numbers = #tpu.dot_dimension_numbers<[1], [1], [0], [0], [0, 0, 1, 0], [], []>} : vector<4x64xbf16>, vector<64x64xbf16>, vector<4x64xf32> -> vector<4x64xf32>
    %c0_20 = arith.constant 0 : index
    %c0_21 = arith.constant 0 : index
    %c0_22 = arith.constant 0 : index
    %43 = vector.load %arg7[%c0_20, %c0_21, %c0_22] : memref<2x8x4xf32, #tpu.memory_space<vmem>>, vector<1x8x4xf32>
    %44 = vector.shape_cast %43 : vector<1x8x4xf32> to vector<8x4xf32>
    %45 = arith.truncf %44 : vector<8x4xf32> to vector<8x4xbf16>
    %46 = arith.truncf %42 : vector<4x64xf32> to vector<4x64xbf16>
    %cst_23 = arith.constant dense<0.000000e+00> : vector<8x64xf32>
    %47 = tpu.matmul %45, %46, %cst_23 {dimension_numbers = #tpu.dot_dimension_numbers<[1], [0], [0], [1], [0, 0, 1, 1], [], []>} : vector<8x4xbf16>, vector<4x64xbf16>, vector<8x64xf32> -> vector<8x64xf32>
    %48 = arith.addf %4, %47 : vector<8x64xf32>
    %c0_24 = arith.constant 0 : index
    %c0_25 = arith.constant 0 : index
    %c0_26 = arith.constant 0 : index
    %49 = vector.load %arg8[%c0_24, %c0_25, %c0_26] : memref<2x8x8xf32, #tpu.memory_space<vmem>>, vector<1x8x8xf32>
    %50 = vector.shape_cast %49 : vector<1x8x8xf32> to vector<8x8xf32>
    %51 = arith.truncf %50 : vector<8x8xf32> to vector<8x8xbf16>
    %52 = arith.truncf %48 : vector<8x64xf32> to vector<8x64xbf16>
    %cst_27 = arith.constant dense<0.000000e+00> : vector<8x64xf32>
    %53 = tpu.matmul %51, %52, %cst_27 {dimension_numbers = #tpu.dot_dimension_numbers<[1], [0], [0], [1], [0, 0, 1, 1], [], []>} : vector<8x8xbf16>, vector<8x64xbf16>, vector<8x64xf32> -> vector<8x64xf32>
    %c0_28 = arith.constant 0 : index
    %c0_29 = arith.constant 0 : index
    %c0_30 = arith.constant 0 : index
    %54 = vector.load %arg9[%c0_28, %c0_29, %c0_30] : memref<2x8x1xf32, #tpu.memory_space<vmem>>, vector<1x8x1xf32>
    %55 = vector.shape_cast %54 : vector<1x8x1xf32> to vector<8x1xf32>
    %56 = vector.broadcast %55 : vector<8x1xf32> to vector<8x64xf32>
    %57 = arith.addf %53, %56 : vector<8x64xf32>
    %cst_31 = arith.constant 0.000000e+00 : f32
    %58 = vector.broadcast %cst_31 : f32 to vector<8x64xf32>
    %59 = arith.maximumf %57, %58 : vector<8x64xf32>
    %c0_32 = arith.constant 0 : index
    %c0_33 = arith.constant 0 : index
    %c0_34 = arith.constant 0 : index
    %60 = vector.load %arg10[%c0_32, %c0_33, %c0_34] : memref<2x8x8xf32, #tpu.memory_space<vmem>>, vector<1x8x8xf32>
    %61 = vector.shape_cast %60 : vector<1x8x8xf32> to vector<8x8xf32>
    %62 = arith.truncf %61 : vector<8x8xf32> to vector<8x8xbf16>
    %63 = arith.truncf %59 : vector<8x64xf32> to vector<8x64xbf16>
    %cst_35 = arith.constant dense<0.000000e+00> : vector<8x64xf32>
    %64 = tpu.matmul %62, %63, %cst_35 {dimension_numbers = #tpu.dot_dimension_numbers<[1], [0], [0], [1], [0, 0, 1, 1], [], []>} : vector<8x8xbf16>, vector<8x64xbf16>, vector<8x64xf32> -> vector<8x64xf32>
    %c0_36 = arith.constant 0 : index
    %c0_37 = arith.constant 0 : index
    %c0_38 = arith.constant 0 : index
    %65 = vector.load %arg11[%c0_36, %c0_37, %c0_38] : memref<2x8x1xf32, #tpu.memory_space<vmem>>, vector<1x8x1xf32>
    %66 = vector.shape_cast %65 : vector<1x8x1xf32> to vector<8x1xf32>
    %67 = vector.broadcast %66 : vector<8x1xf32> to vector<8x64xf32>
    %68 = arith.addf %64, %67 : vector<8x64xf32>
    %69 = arith.addf %48, %68 : vector<8x64xf32>
    %c1_i32_39 = arith.constant 1 : i32
    %70 = tpu.dynamic_rotate %69 by %c1_i32_39 dim 1 : vector<8x64xf32>, i32 -> vector<8x64xf32>
    %71 = vector.broadcast %1 : vector<1x64xf32> to vector<8x64xf32>
    %72 = arith.mulf %70, %71 : vector<8x64xf32>
    %c2_i32_40 = arith.constant 2 : i32
    %73 = tpu.dynamic_rotate %69 by %c2_i32_40 dim 1 : vector<8x64xf32>, i32 -> vector<8x64xf32>
    %74 = vector.broadcast %2 : vector<1x64xf32> to vector<8x64xf32>
    %75 = arith.mulf %73, %74 : vector<8x64xf32>
    %76 = tpu.concatenate %69, %72, %75 in 0 : vector<8x64xf32>, vector<8x64xf32>, vector<8x64xf32> -> vector<24x64xf32>
    %77 = arith.truncf %76 : vector<24x64xf32> to vector<24x64xbf16>
    %c1 = arith.constant 1 : index
    %c0_41 = arith.constant 0 : index
    %c0_42 = arith.constant 0 : index
    %78 = vector.load %arg4[%c1, %c0_41, %c0_42] : memref<2x4x24xf32, #tpu.memory_space<vmem>>, vector<1x4x24xf32>
    %79 = vector.shape_cast %78 : vector<1x4x24xf32> to vector<4x24xf32>
    %80 = arith.truncf %79 : vector<4x24xf32> to vector<4x24xbf16>
    %cst_43 = arith.constant dense<0.000000e+00> : vector<4x64xf32>
    %81 = tpu.matmul %80, %77, %cst_43 {dimension_numbers = #tpu.dot_dimension_numbers<[1], [0], [0], [1], [0, 0, 1, 1], [], []>} : vector<4x24xbf16>, vector<24x64xbf16>, vector<4x64xf32> -> vector<4x64xf32>
    %c1_44 = arith.constant 1 : index
    %c0_45 = arith.constant 0 : index
    %c0_46 = arith.constant 0 : index
    %82 = vector.load %arg5[%c1_44, %c0_45, %c0_46] : memref<2x4x24xf32, #tpu.memory_space<vmem>>, vector<1x4x24xf32>
    %83 = vector.shape_cast %82 : vector<1x4x24xf32> to vector<4x24xf32>
    %84 = arith.truncf %83 : vector<4x24xf32> to vector<4x24xbf16>
    %cst_47 = arith.constant dense<0.000000e+00> : vector<4x64xf32>
    %85 = tpu.matmul %84, %77, %cst_47 {dimension_numbers = #tpu.dot_dimension_numbers<[1], [0], [0], [1], [0, 0, 1, 1], [], []>} : vector<4x24xbf16>, vector<24x64xbf16>, vector<4x64xf32> -> vector<4x64xf32>
    %c1_48 = arith.constant 1 : index
    %c0_49 = arith.constant 0 : index
    %c0_50 = arith.constant 0 : index
    %86 = vector.load %arg6[%c1_48, %c0_49, %c0_50] : memref<2x4x8xf32, #tpu.memory_space<vmem>>, vector<1x4x8xf32>
    %87 = vector.shape_cast %86 : vector<1x4x8xf32> to vector<4x8xf32>
    %88 = arith.truncf %87 : vector<4x8xf32> to vector<4x8xbf16>
    %89 = arith.truncf %69 : vector<8x64xf32> to vector<8x64xbf16>
    %cst_51 = arith.constant dense<0.000000e+00> : vector<4x64xf32>
    %90 = tpu.matmul %88, %89, %cst_51 {dimension_numbers = #tpu.dot_dimension_numbers<[1], [0], [0], [1], [0, 0, 1, 1], [], []>} : vector<4x8xbf16>, vector<8x64xbf16>, vector<4x64xf32> -> vector<4x64xf32>
    %91 = arith.truncf %81 : vector<4x64xf32> to vector<4x64xbf16>
    %92 = arith.truncf %85 : vector<4x64xf32> to vector<4x64xbf16>
    %cst_52 = arith.constant dense<0.000000e+00> : vector<64x64xf32>
    %93 = tpu.matmul %91, %92, %cst_52 {dimension_numbers = #tpu.dot_dimension_numbers<[0], [0], [1], [1], [0, 1, 1, 1], [], []>} : vector<4x64xbf16>, vector<4x64xbf16>, vector<64x64xf32> -> vector<64x64xf32>
    %94 = arith.addf %93, %3 : vector<64x64xf32>
    %cst_53 = arith.constant dense<0xFF800000> : vector<64xf32>
    %95 = vector.multi_reduction <maximumf>, %94, %cst_53 [1] : vector<64x64xf32> to vector<64xf32>
    %96 = vector.shape_cast %95 : vector<64xf32> to vector<64x1xf32>
    %97 = vector.broadcast %96 : vector<64x1xf32> to vector<64x64xf32>
    %98 = arith.subf %94, %97 : vector<64x64xf32>
    %99 = math.exp %98 : vector<64x64xf32>
    %cst_54 = arith.constant dense<0.000000e+00> : vector<64xf32>
    %100 = vector.multi_reduction <add>, %99, %cst_54 [1] : vector<64x64xf32> to vector<64xf32>
    %101 = vector.shape_cast %100 : vector<64xf32> to vector<64x1xf32>
    %102 = tpu.reciprocal %101 {approx = true} : vector<64x1xf32> -> vector<64x1xf32>
    %103 = vector.broadcast %102 : vector<64x1xf32> to vector<64x64xf32>
    %104 = arith.mulf %99, %103 : vector<64x64xf32>
    %105 = arith.truncf %90 : vector<4x64xf32> to vector<4x64xbf16>
    %106 = arith.truncf %104 : vector<64x64xf32> to vector<64x64xbf16>
    %cst_55 = arith.constant dense<0.000000e+00> : vector<4x64xf32>
    %107 = tpu.matmul %105, %106, %cst_55 {dimension_numbers = #tpu.dot_dimension_numbers<[1], [1], [0], [0], [0, 0, 1, 0], [], []>} : vector<4x64xbf16>, vector<64x64xbf16>, vector<4x64xf32> -> vector<4x64xf32>
    %c1_56 = arith.constant 1 : index
    %c0_57 = arith.constant 0 : index
    %c0_58 = arith.constant 0 : index
    %108 = vector.load %arg7[%c1_56, %c0_57, %c0_58] : memref<2x8x4xf32, #tpu.memory_space<vmem>>, vector<1x8x4xf32>
    %109 = vector.shape_cast %108 : vector<1x8x4xf32> to vector<8x4xf32>
    %110 = arith.truncf %109 : vector<8x4xf32> to vector<8x4xbf16>
    %111 = arith.truncf %107 : vector<4x64xf32> to vector<4x64xbf16>
    %cst_59 = arith.constant dense<0.000000e+00> : vector<8x64xf32>
    %112 = tpu.matmul %110, %111, %cst_59 {dimension_numbers = #tpu.dot_dimension_numbers<[1], [0], [0], [1], [0, 0, 1, 1], [], []>} : vector<8x4xbf16>, vector<4x64xbf16>, vector<8x64xf32> -> vector<8x64xf32>
    %113 = arith.addf %69, %112 : vector<8x64xf32>
    %c1_60 = arith.constant 1 : index
    %c0_61 = arith.constant 0 : index
    %c0_62 = arith.constant 0 : index
    %114 = vector.load %arg8[%c1_60, %c0_61, %c0_62] : memref<2x8x8xf32, #tpu.memory_space<vmem>>, vector<1x8x8xf32>
    %115 = vector.shape_cast %114 : vector<1x8x8xf32> to vector<8x8xf32>
    %116 = arith.truncf %115 : vector<8x8xf32> to vector<8x8xbf16>
    %117 = arith.truncf %113 : vector<8x64xf32> to vector<8x64xbf16>
    %cst_63 = arith.constant dense<0.000000e+00> : vector<8x64xf32>
    %118 = tpu.matmul %116, %117, %cst_63 {dimension_numbers = #tpu.dot_dimension_numbers<[1], [0], [0], [1], [0, 0, 1, 1], [], []>} : vector<8x8xbf16>, vector<8x64xbf16>, vector<8x64xf32> -> vector<8x64xf32>
    %c1_64 = arith.constant 1 : index
    %c0_65 = arith.constant 0 : index
    %c0_66 = arith.constant 0 : index
    %119 = vector.load %arg9[%c1_64, %c0_65, %c0_66] : memref<2x8x1xf32, #tpu.memory_space<vmem>>, vector<1x8x1xf32>
    %120 = vector.shape_cast %119 : vector<1x8x1xf32> to vector<8x1xf32>
    %121 = vector.broadcast %120 : vector<8x1xf32> to vector<8x64xf32>
    %122 = arith.addf %118, %121 : vector<8x64xf32>
    %cst_67 = arith.constant 0.000000e+00 : f32
    %123 = vector.broadcast %cst_67 : f32 to vector<8x64xf32>
    %124 = arith.maximumf %122, %123 : vector<8x64xf32>
    %c1_68 = arith.constant 1 : index
    %c0_69 = arith.constant 0 : index
    %c0_70 = arith.constant 0 : index
    %125 = vector.load %arg10[%c1_68, %c0_69, %c0_70] : memref<2x8x8xf32, #tpu.memory_space<vmem>>, vector<1x8x8xf32>
    %126 = vector.shape_cast %125 : vector<1x8x8xf32> to vector<8x8xf32>
    %127 = arith.truncf %126 : vector<8x8xf32> to vector<8x8xbf16>
    %128 = arith.truncf %124 : vector<8x64xf32> to vector<8x64xbf16>
    %cst_71 = arith.constant dense<0.000000e+00> : vector<8x64xf32>
    %129 = tpu.matmul %127, %128, %cst_71 {dimension_numbers = #tpu.dot_dimension_numbers<[1], [0], [0], [1], [0, 0, 1, 1], [], []>} : vector<8x8xbf16>, vector<8x64xbf16>, vector<8x64xf32> -> vector<8x64xf32>
    %c1_72 = arith.constant 1 : index
    %c0_73 = arith.constant 0 : index
    %c0_74 = arith.constant 0 : index
    %130 = vector.load %arg11[%c1_72, %c0_73, %c0_74] : memref<2x8x1xf32, #tpu.memory_space<vmem>>, vector<1x8x1xf32>
    %131 = vector.shape_cast %130 : vector<1x8x1xf32> to vector<8x1xf32>
    %132 = vector.broadcast %131 : vector<8x1xf32> to vector<8x64xf32>
    %133 = arith.addf %129, %132 : vector<8x64xf32>
    %134 = arith.addf %113, %133 : vector<8x64xf32>
    %c0_75 = arith.constant 0 : index
    %c0_76 = arith.constant 0 : index
    %135 = vector.load %arg12[%c0_75, %c0_76] : memref<8x64xf32, #tpu.memory_space<vmem>>, vector<8x64xf32>
    tpu.vector_store %arg12[%c0_75, %c0_76], %134 {strides = array<i32>} : memref<8x64xf32, #tpu.memory_space<vmem>>, vector<8x64xf32>,
    return
  }
  func.func @transform_0(%arg0: i32) -> (i32, i32) {
    %c0_i32 = arith.constant 0 : i32
    %c0_i32_0 = arith.constant 0 : i32
    %c0_i32_1 = arith.constant 0 : i32
    return %c0_i32, %c0_i32_0 : i32, i32
  }
  func.func @transform_1(%arg0: i32) -> (i32, i32) {
    %c0_i32 = arith.constant 0 : i32
    %c0_i32_0 = arith.constant 0 : i32
    %c0_i32_1 = arith.constant 0 : i32
    return %c0_i32, %c0_i32_0 : i32, i32
  }
  func.func @transform_2(%arg0: i32) -> (i32, i32) {
    %c0_i32 = arith.constant 0 : i32
    %c0_i32_0 = arith.constant 0 : i32
    return %c0_i32, %arg0 : i32, i32
  }
  func.func @transform_3(%arg0: i32) -> (i32, i32, i32) {
    %c0_i32 = arith.constant 0 : i32
    %c0_i32_0 = arith.constant 0 : i32
    %c0_i32_1 = arith.constant 0 : i32
    %c0_i32_2 = arith.constant 0 : i32
    return %c0_i32, %c0_i32_0, %c0_i32_1 : i32, i32, i32
  }
  func.func @transform_4(%arg0: i32) -> (i32, i32, i32) {
    %c0_i32 = arith.constant 0 : i32
    %c0_i32_0 = arith.constant 0 : i32
    %c0_i32_1 = arith.constant 0 : i32
    %c0_i32_2 = arith.constant 0 : i32
    return %c0_i32, %c0_i32_0, %c0_i32_1 : i32, i32, i32
  }
  func.func @transform_5(%arg0: i32) -> (i32, i32, i32) {
    %c0_i32 = arith.constant 0 : i32
    %c0_i32_0 = arith.constant 0 : i32
    %c0_i32_1 = arith.constant 0 : i32
    %c0_i32_2 = arith.constant 0 : i32
    return %c0_i32, %c0_i32_0, %c0_i32_1 : i32, i32, i32
  }
  func.func @transform_6(%arg0: i32) -> (i32, i32, i32) {
    %c0_i32 = arith.constant 0 : i32
    %c0_i32_0 = arith.constant 0 : i32
    %c0_i32_1 = arith.constant 0 : i32
    %c0_i32_2 = arith.constant 0 : i32
    return %c0_i32, %c0_i32_0, %c0_i32_1 : i32, i32, i32
  }
  func.func @transform_7(%arg0: i32) -> (i32, i32, i32) {
    %c0_i32 = arith.constant 0 : i32
    %c0_i32_0 = arith.constant 0 : i32
    %c0_i32_1 = arith.constant 0 : i32
    %c0_i32_2 = arith.constant 0 : i32
    return %c0_i32, %c0_i32_0, %c0_i32_1 : i32, i32, i32
  }
  func.func @transform_8(%arg0: i32) -> (i32, i32, i32) {
    %c0_i32 = arith.constant 0 : i32
    %c0_i32_0 = arith.constant 0 : i32
    %c0_i32_1 = arith.constant 0 : i32
    %c0_i32_2 = arith.constant 0 : i32
    return %c0_i32, %c0_i32_0, %c0_i32_1 : i32, i32, i32
  }
  func.func @transform_9(%arg0: i32) -> (i32, i32, i32) {
    %c0_i32 = arith.constant 0 : i32
    %c0_i32_0 = arith.constant 0 : i32
    %c0_i32_1 = arith.constant 0 : i32
    %c0_i32_2 = arith.constant 0 : i32
    return %c0_i32, %c0_i32_0, %c0_i32_1 : i32, i32, i32
  }
  func.func @transform_10(%arg0: i32) -> (i32, i32, i32) {
    %c0_i32 = arith.constant 0 : i32
    %c0_i32_0 = arith.constant 0 : i32
    %c0_i32_1 = arith.constant 0 : i32
    %c0_i32_2 = arith.constant 0 : i32
    return %c0_i32, %c0_i32_0, %c0_i32_1 : i32, i32, i32
  }
  func.func @transform_11(%arg0: i32) -> (i32, i32) {
    %c0_i32 = arith.constant 0 : i32
    %c0_i32_0 = arith.constant 0 : i32
    return %c0_i32, %arg0 : i32, i32
  }
}

module attributes {stable_mosaic.version = 11 : i64} {
  func.func @kernel(%arg0: i32, %arg1: memref<2x56xf32, #tpu.memory_space<vmem>>, %arg2: memref<56x56xf32, #tpu.memory_space<vmem>>, %arg3: memref<8x56xf32, #tpu.memory_space<vmem>>, %arg4: memref<2x4x24xf32, #tpu.memory_space<vmem>>, %arg5: memref<2x4x24xf32, #tpu.memory_space<vmem>>, %arg6: memref<2x4x8xf32, #tpu.memory_space<vmem>>, %arg7: memref<2x8x4xf32, #tpu.memory_space<vmem>>, %arg8: memref<2x8x8xf32, #tpu.memory_space<vmem>>, %arg9: memref<2x8x1xf32, #tpu.memory_space<vmem>>, %arg10: memref<2x8x8xf32, #tpu.memory_space<vmem>>, %arg11: memref<2x8x1xf32, #tpu.memory_space<vmem>>, %arg12: memref<8x56xf32, #tpu.memory_space<vmem>>) attributes {dimension_semantics = [#tpu.dimension_semantics<parallel>], iteration_bounds = array<i64: 1>, scalar_prefetch = 0 : i64, scratch_operands = 0 : i64, tpu.core_type = #tpu.core_type<tc>, window_params = [{pipeline_mode = #tpu.pipeline_mode<synchronous>, transform_indices = @transform_0, window_bounds = array<i64: 2, 56>}, {pipeline_mode = #tpu.pipeline_mode<synchronous>, transform_indices = @transform_1, window_bounds = array<i64: 56, 56>}, {transform_indices = @transform_2, window_bounds = array<i64: 8, 56>}, {pipeline_mode = #tpu.pipeline_mode<synchronous>, transform_indices = @transform_3, window_bounds = array<i64: 2, 4, 24>}, {pipeline_mode = #tpu.pipeline_mode<synchronous>, transform_indices = @transform_4, window_bounds = array<i64: 2, 4, 24>}, {pipeline_mode = #tpu.pipeline_mode<synchronous>, transform_indices = @transform_5, window_bounds = array<i64: 2, 4, 8>}, {pipeline_mode = #tpu.pipeline_mode<synchronous>, transform_indices = @transform_6, window_bounds = array<i64: 2, 8, 4>}, {pipeline_mode = #tpu.pipeline_mode<synchronous>, transform_indices = @transform_7, window_bounds = array<i64: 2, 8, 8>}, {pipeline_mode = #tpu.pipeline_mode<synchronous>, transform_indices = @transform_8, window_bounds = array<i64: 2, 8, 1>}, {pipeline_mode = #tpu.pipeline_mode<synchronous>, transform_indices = @transform_9, window_bounds = array<i64: 2, 8, 8>}, {pipeline_mode = #tpu.pipeline_mode<synchronous>, transform_indices = @transform_10, window_bounds = array<i64: 2, 8, 1>}, {transform_indices = @transform_11, window_bounds = array<i64: 8, 56>}]} {
    %c0 = arith.constant 0 : index
    %c0_0 = arith.constant 0 : index
    %0 = vector.load %arg1[%c0, %c0_0] : memref<2x56xf32, #tpu.memory_space<vmem>>, vector<2x56xf32>
    %1 = vector.extract_strided_slice %0 {offsets = [0, 0], sizes = [1, 56], strides = [1, 1]} : vector<2x56xf32> to vector<1x56xf32>
    %2 = vector.extract_strided_slice %0 {offsets = [1, 0], sizes = [1, 56], strides = [1, 1]} : vector<2x56xf32> to vector<1x56xf32>
    %c0_1 = arith.constant 0 : index
    %c0_2 = arith.constant 0 : index
    %3 = vector.load %arg2[%c0_1, %c0_2] : memref<56x56xf32, #tpu.memory_space<vmem>>, vector<56x56xf32>
    %c0_3 = arith.constant 0 : index
    %c0_4 = arith.constant 0 : index
    %4 = vector.load %arg3[%c0_3, %c0_4] : memref<8x56xf32, #tpu.memory_space<vmem>>, vector<8x56xf32>
    %c1_i32 = arith.constant 1 : i32
    %5 = tpu.dynamic_rotate %4 by %c1_i32 dim 1 : vector<8x56xf32>, i32 -> vector<8x56xf32>
    %6 = vector.broadcast %1 : vector<1x56xf32> to vector<8x56xf32>
    %7 = arith.mulf %5, %6 : vector<8x56xf32>
    %c2_i32 = arith.constant 2 : i32
    %8 = tpu.dynamic_rotate %4 by %c2_i32 dim 1 : vector<8x56xf32>, i32 -> vector<8x56xf32>
    %9 = vector.broadcast %2 : vector<1x56xf32> to vector<8x56xf32>
    %10 = arith.mulf %8, %9 : vector<8x56xf32>
    %11 = tpu.concatenate %4, %7, %10 in 0 : vector<8x56xf32>, vector<8x56xf32>, vector<8x56xf32> -> vector<24x56xf32>
    %12 = arith.truncf %11 : vector<24x56xf32> to vector<24x56xbf16>
    %c0_5 = arith.constant 0 : index
    %c0_6 = arith.constant 0 : index
    %c0_7 = arith.constant 0 : index
    %13 = vector.load %arg4[%c0_5, %c0_6, %c0_7] : memref<2x4x24xf32, #tpu.memory_space<vmem>>, vector<1x4x24xf32>
    %14 = vector.shape_cast %13 : vector<1x4x24xf32> to vector<4x24xf32>
    %15 = arith.truncf %14 : vector<4x24xf32> to vector<4x24xbf16>
    %cst = arith.constant dense<0.000000e+00> : vector<4x56xf32>
    %16 = tpu.matmul %15, %12, %cst {dimension_numbers = #tpu.dot_dimension_numbers<[1], [0], [0], [1], [0, 0, 1, 1], [], []>} : vector<4x24xbf16>, vector<24x56xbf16>, vector<4x56xf32> -> vector<4x56xf32>
    %c0_8 = arith.constant 0 : index
    %c0_9 = arith.constant 0 : index
    %c0_10 = arith.constant 0 : index
    %17 = vector.load %arg5[%c0_8, %c0_9, %c0_10] : memref<2x4x24xf32, #tpu.memory_space<vmem>>, vector<1x4x24xf32>
    %18 = vector.shape_cast %17 : vector<1x4x24xf32> to vector<4x24xf32>
    %19 = arith.truncf %18 : vector<4x24xf32> to vector<4x24xbf16>
    %cst_11 = arith.constant dense<0.000000e+00> : vector<4x56xf32>
    %20 = tpu.matmul %19, %12, %cst_11 {dimension_numbers = #tpu.dot_dimension_numbers<[1], [0], [0], [1], [0, 0, 1, 1], [], []>} : vector<4x24xbf16>, vector<24x56xbf16>, vector<4x56xf32> -> vector<4x56xf32>
    %c0_12 = arith.constant 0 : index
    %c0_13 = arith.constant 0 : index
    %c0_14 = arith.constant 0 : index
    %21 = vector.load %arg6[%c0_12, %c0_13, %c0_14] : memref<2x4x8xf32, #tpu.memory_space<vmem>>, vector<1x4x8xf32>
    %22 = vector.shape_cast %21 : vector<1x4x8xf32> to vector<4x8xf32>
    %23 = arith.truncf %22 : vector<4x8xf32> to vector<4x8xbf16>
    %24 = arith.truncf %4 : vector<8x56xf32> to vector<8x56xbf16>
    %cst_15 = arith.constant dense<0.000000e+00> : vector<4x56xf32>
    %25 = tpu.matmul %23, %24, %cst_15 {dimension_numbers = #tpu.dot_dimension_numbers<[1], [0], [0], [1], [0, 0, 1, 1], [], []>} : vector<4x8xbf16>, vector<8x56xbf16>, vector<4x56xf32> -> vector<4x56xf32>
    %26 = arith.truncf %16 : vector<4x56xf32> to vector<4x56xbf16>
    %27 = arith.truncf %20 : vector<4x56xf32> to vector<4x56xbf16>
    %cst_16 = arith.constant dense<0.000000e+00> : vector<56x56xf32>
    %28 = tpu.matmul %26, %27, %cst_16 {dimension_numbers = #tpu.dot_dimension_numbers<[0], [0], [1], [1], [0, 1, 1, 1], [], []>} : vector<4x56xbf16>, vector<4x56xbf16>, vector<56x56xf32> -> vector<56x56xf32>
    %29 = arith.addf %28, %3 : vector<56x56xf32>
    %cst_17 = arith.constant dense<0xFF800000> : vector<56xf32>
    %30 = vector.multi_reduction <maximumf>, %29, %cst_17 [1] : vector<56x56xf32> to vector<56xf32>
    %31 = vector.shape_cast %30 : vector<56xf32> to vector<56x1xf32>
    %32 = vector.broadcast %31 : vector<56x1xf32> to vector<56x56xf32>
    %33 = arith.subf %29, %32 : vector<56x56xf32>
    %34 = math.exp %33 : vector<56x56xf32>
    %cst_18 = arith.constant dense<0.000000e+00> : vector<56xf32>
    %35 = vector.multi_reduction <add>, %34, %cst_18 [1] : vector<56x56xf32> to vector<56xf32>
    %36 = vector.shape_cast %35 : vector<56xf32> to vector<56x1xf32>
    %37 = tpu.reciprocal %36 {approx = true} : vector<56x1xf32> -> vector<56x1xf32>
    %38 = vector.broadcast %37 : vector<56x1xf32> to vector<56x56xf32>
    %39 = arith.mulf %34, %38 : vector<56x56xf32>
    %40 = arith.truncf %25 : vector<4x56xf32> to vector<4x56xbf16>
    %41 = arith.truncf %39 : vector<56x56xf32> to vector<56x56xbf16>
    %cst_19 = arith.constant dense<0.000000e+00> : vector<4x56xf32>
    %42 = tpu.matmul %40, %41, %cst_19 {dimension_numbers = #tpu.dot_dimension_numbers<[1], [1], [0], [0], [0, 0, 1, 0], [], []>} : vector<4x56xbf16>, vector<56x56xbf16>, vector<4x56xf32> -> vector<4x56xf32>
    %c0_20 = arith.constant 0 : index
    %c0_21 = arith.constant 0 : index
    %c0_22 = arith.constant 0 : index
    %43 = vector.load %arg7[%c0_20, %c0_21, %c0_22] : memref<2x8x4xf32, #tpu.memory_space<vmem>>, vector<1x8x4xf32>
    %44 = vector.shape_cast %43 : vector<1x8x4xf32> to vector<8x4xf32>
    %45 = arith.truncf %44 : vector<8x4xf32> to vector<8x4xbf16>
    %46 = arith.truncf %42 : vector<4x56xf32> to vector<4x56xbf16>
    %cst_23 = arith.constant dense<0.000000e+00> : vector<8x56xf32>
    %47 = tpu.matmul %45, %46, %cst_23 {dimension_numbers = #tpu.dot_dimension_numbers<[1], [0], [0], [1], [0, 0, 1, 1], [], []>} : vector<8x4xbf16>, vector<4x56xbf16>, vector<8x56xf32> -> vector<8x56xf32>
    %48 = arith.addf %4, %47 : vector<8x56xf32>
    %c0_24 = arith.constant 0 : index
    %c0_25 = arith.constant 0 : index
    %c0_26 = arith.constant 0 : index
    %49 = vector.load %arg8[%c0_24, %c0_25, %c0_26] : memref<2x8x8xf32, #tpu.memory_space<vmem>>, vector<1x8x8xf32>
    %50 = vector.shape_cast %49 : vector<1x8x8xf32> to vector<8x8xf32>
    %51 = arith.truncf %50 : vector<8x8xf32> to vector<8x8xbf16>
    %52 = arith.truncf %48 : vector<8x56xf32> to vector<8x56xbf16>
    %cst_27 = arith.constant dense<0.000000e+00> : vector<8x56xf32>
    %53 = tpu.matmul %51, %52, %cst_27 {dimension_numbers = #tpu.dot_dimension_numbers<[1], [0], [0], [1], [0, 0, 1, 1], [], []>} : vector<8x8xbf16>, vector<8x56xbf16>, vector<8x56xf32> -> vector<8x56xf32>
    %c0_28 = arith.constant 0 : index
    %c0_29 = arith.constant 0 : index
    %c0_30 = arith.constant 0 : index
    %54 = vector.load %arg9[%c0_28, %c0_29, %c0_30] : memref<2x8x1xf32, #tpu.memory_space<vmem>>, vector<1x8x1xf32>
    %55 = vector.shape_cast %54 : vector<1x8x1xf32> to vector<8x1xf32>
    %56 = vector.broadcast %55 : vector<8x1xf32> to vector<8x56xf32>
    %57 = arith.addf %53, %56 : vector<8x56xf32>
    %cst_31 = arith.constant 0.000000e+00 : f32
    %58 = vector.broadcast %cst_31 : f32 to vector<8x56xf32>
    %59 = arith.maximumf %57, %58 : vector<8x56xf32>
    %c0_32 = arith.constant 0 : index
    %c0_33 = arith.constant 0 : index
    %c0_34 = arith.constant 0 : index
    %60 = vector.load %arg10[%c0_32, %c0_33, %c0_34] : memref<2x8x8xf32, #tpu.memory_space<vmem>>, vector<1x8x8xf32>
    %61 = vector.shape_cast %60 : vector<1x8x8xf32> to vector<8x8xf32>
    %62 = arith.truncf %61 : vector<8x8xf32> to vector<8x8xbf16>
    %63 = arith.truncf %59 : vector<8x56xf32> to vector<8x56xbf16>
    %cst_35 = arith.constant dense<0.000000e+00> : vector<8x56xf32>
    %64 = tpu.matmul %62, %63, %cst_35 {dimension_numbers = #tpu.dot_dimension_numbers<[1], [0], [0], [1], [0, 0, 1, 1], [], []>} : vector<8x8xbf16>, vector<8x56xbf16>, vector<8x56xf32> -> vector<8x56xf32>
    %c0_36 = arith.constant 0 : index
    %c0_37 = arith.constant 0 : index
    %c0_38 = arith.constant 0 : index
    %65 = vector.load %arg11[%c0_36, %c0_37, %c0_38] : memref<2x8x1xf32, #tpu.memory_space<vmem>>, vector<1x8x1xf32>
    %66 = vector.shape_cast %65 : vector<1x8x1xf32> to vector<8x1xf32>
    %67 = vector.broadcast %66 : vector<8x1xf32> to vector<8x56xf32>
    %68 = arith.addf %64, %67 : vector<8x56xf32>
    %69 = arith.addf %48, %68 : vector<8x56xf32>
    %c1_i32_39 = arith.constant 1 : i32
    %70 = tpu.dynamic_rotate %69 by %c1_i32_39 dim 1 : vector<8x56xf32>, i32 -> vector<8x56xf32>
    %71 = vector.broadcast %1 : vector<1x56xf32> to vector<8x56xf32>
    %72 = arith.mulf %70, %71 : vector<8x56xf32>
    %c2_i32_40 = arith.constant 2 : i32
    %73 = tpu.dynamic_rotate %69 by %c2_i32_40 dim 1 : vector<8x56xf32>, i32 -> vector<8x56xf32>
    %74 = vector.broadcast %2 : vector<1x56xf32> to vector<8x56xf32>
    %75 = arith.mulf %73, %74 : vector<8x56xf32>
    %76 = tpu.concatenate %69, %72, %75 in 0 : vector<8x56xf32>, vector<8x56xf32>, vector<8x56xf32> -> vector<24x56xf32>
    %77 = arith.truncf %76 : vector<24x56xf32> to vector<24x56xbf16>
    %c1 = arith.constant 1 : index
    %c0_41 = arith.constant 0 : index
    %c0_42 = arith.constant 0 : index
    %78 = vector.load %arg4[%c1, %c0_41, %c0_42] : memref<2x4x24xf32, #tpu.memory_space<vmem>>, vector<1x4x24xf32>
    %79 = vector.shape_cast %78 : vector<1x4x24xf32> to vector<4x24xf32>
    %80 = arith.truncf %79 : vector<4x24xf32> to vector<4x24xbf16>
    %cst_43 = arith.constant dense<0.000000e+00> : vector<4x56xf32>
    %81 = tpu.matmul %80, %77, %cst_43 {dimension_numbers = #tpu.dot_dimension_numbers<[1], [0], [0], [1], [0, 0, 1, 1], [], []>} : vector<4x24xbf16>, vector<24x56xbf16>, vector<4x56xf32> -> vector<4x56xf32>
    %c1_44 = arith.constant 1 : index
    %c0_45 = arith.constant 0 : index
    %c0_46 = arith.constant 0 : index
    %82 = vector.load %arg5[%c1_44, %c0_45, %c0_46] : memref<2x4x24xf32, #tpu.memory_space<vmem>>, vector<1x4x24xf32>
    %83 = vector.shape_cast %82 : vector<1x4x24xf32> to vector<4x24xf32>
    %84 = arith.truncf %83 : vector<4x24xf32> to vector<4x24xbf16>
    %cst_47 = arith.constant dense<0.000000e+00> : vector<4x56xf32>
    %85 = tpu.matmul %84, %77, %cst_47 {dimension_numbers = #tpu.dot_dimension_numbers<[1], [0], [0], [1], [0, 0, 1, 1], [], []>} : vector<4x24xbf16>, vector<24x56xbf16>, vector<4x56xf32> -> vector<4x56xf32>
    %c1_48 = arith.constant 1 : index
    %c0_49 = arith.constant 0 : index
    %c0_50 = arith.constant 0 : index
    %86 = vector.load %arg6[%c1_48, %c0_49, %c0_50] : memref<2x4x8xf32, #tpu.memory_space<vmem>>, vector<1x4x8xf32>
    %87 = vector.shape_cast %86 : vector<1x4x8xf32> to vector<4x8xf32>
    %88 = arith.truncf %87 : vector<4x8xf32> to vector<4x8xbf16>
    %89 = arith.truncf %69 : vector<8x56xf32> to vector<8x56xbf16>
    %cst_51 = arith.constant dense<0.000000e+00> : vector<4x56xf32>
    %90 = tpu.matmul %88, %89, %cst_51 {dimension_numbers = #tpu.dot_dimension_numbers<[1], [0], [0], [1], [0, 0, 1, 1], [], []>} : vector<4x8xbf16>, vector<8x56xbf16>, vector<4x56xf32> -> vector<4x56xf32>
    %91 = arith.truncf %81 : vector<4x56xf32> to vector<4x56xbf16>
    %92 = arith.truncf %85 : vector<4x56xf32> to vector<4x56xbf16>
    %cst_52 = arith.constant dense<0.000000e+00> : vector<56x56xf32>
    %93 = tpu.matmul %91, %92, %cst_52 {dimension_numbers = #tpu.dot_dimension_numbers<[0], [0], [1], [1], [0, 1, 1, 1], [], []>} : vector<4x56xbf16>, vector<4x56xbf16>, vector<56x56xf32> -> vector<56x56xf32>
    %94 = arith.addf %93, %3 : vector<56x56xf32>
    %cst_53 = arith.constant dense<0xFF800000> : vector<56xf32>
    %95 = vector.multi_reduction <maximumf>, %94, %cst_53 [1] : vector<56x56xf32> to vector<56xf32>
    %96 = vector.shape_cast %95 : vector<56xf32> to vector<56x1xf32>
    %97 = vector.broadcast %96 : vector<56x1xf32> to vector<56x56xf32>
    %98 = arith.subf %94, %97 : vector<56x56xf32>
    %99 = math.exp %98 : vector<56x56xf32>
    %cst_54 = arith.constant dense<0.000000e+00> : vector<56xf32>
    %100 = vector.multi_reduction <add>, %99, %cst_54 [1] : vector<56x56xf32> to vector<56xf32>
    %101 = vector.shape_cast %100 : vector<56xf32> to vector<56x1xf32>
    %102 = tpu.reciprocal %101 {approx = true} : vector<56x1xf32> -> vector<56x1xf32>
    %103 = vector.broadcast %102 : vector<56x1xf32> to vector<56x56xf32>
    %104 = arith.mulf %99, %103 : vector<56x56xf32>
    %105 = arith.truncf %90 : vector<4x56xf32> to vector<4x56xbf16>
    %106 = arith.truncf %104 : vector<56x56xf32> to vector<56x56xbf16>
    %cst_55 = arith.constant dense<0.000000e+00> : vector<4x56xf32>
    %107 = tpu.matmul %105, %106, %cst_55 {dimension_numbers = #tpu.dot_dimension_numbers<[1], [1], [0], [0], [0, 0, 1, 0], [], []>} : vector<4x56xbf16>, vector<56x56xbf16>, vector<4x56xf32> -> vector<4x56xf32>
    %c1_56 = arith.constant 1 : index
    %c0_57 = arith.constant 0 : index
    %c0_58 = arith.constant 0 : index
    %108 = vector.load %arg7[%c1_56, %c0_57, %c0_58] : memref<2x8x4xf32, #tpu.memory_space<vmem>>, vector<1x8x4xf32>
    %109 = vector.shape_cast %108 : vector<1x8x4xf32> to vector<8x4xf32>
    %110 = arith.truncf %109 : vector<8x4xf32> to vector<8x4xbf16>
    %111 = arith.truncf %107 : vector<4x56xf32> to vector<4x56xbf16>
    %cst_59 = arith.constant dense<0.000000e+00> : vector<8x56xf32>
    %112 = tpu.matmul %110, %111, %cst_59 {dimension_numbers = #tpu.dot_dimension_numbers<[1], [0], [0], [1], [0, 0, 1, 1], [], []>} : vector<8x4xbf16>, vector<4x56xbf16>, vector<8x56xf32> -> vector<8x56xf32>
    %113 = arith.addf %69, %112 : vector<8x56xf32>
    %c1_60 = arith.constant 1 : index
    %c0_61 = arith.constant 0 : index
    %c0_62 = arith.constant 0 : index
    %114 = vector.load %arg8[%c1_60, %c0_61, %c0_62] : memref<2x8x8xf32, #tpu.memory_space<vmem>>, vector<1x8x8xf32>
    %115 = vector.shape_cast %114 : vector<1x8x8xf32> to vector<8x8xf32>
    %116 = arith.truncf %115 : vector<8x8xf32> to vector<8x8xbf16>
    %117 = arith.truncf %113 : vector<8x56xf32> to vector<8x56xbf16>
    %cst_63 = arith.constant dense<0.000000e+00> : vector<8x56xf32>
    %118 = tpu.matmul %116, %117, %cst_63 {dimension_numbers = #tpu.dot_dimension_numbers<[1], [0], [0], [1], [0, 0, 1, 1], [], []>} : vector<8x8xbf16>, vector<8x56xbf16>, vector<8x56xf32> -> vector<8x56xf32>
    %c1_64 = arith.constant 1 : index
    %c0_65 = arith.constant 0 : index
    %c0_66 = arith.constant 0 : index
    %119 = vector.load %arg9[%c1_64, %c0_65, %c0_66] : memref<2x8x1xf32, #tpu.memory_space<vmem>>, vector<1x8x1xf32>
    %120 = vector.shape_cast %119 : vector<1x8x1xf32> to vector<8x1xf32>
    %121 = vector.broadcast %120 : vector<8x1xf32> to vector<8x56xf32>
    %122 = arith.addf %118, %121 : vector<8x56xf32>
    %cst_67 = arith.constant 0.000000e+00 : f32
    %123 = vector.broadcast %cst_67 : f32 to vector<8x56xf32>
    %124 = arith.maximumf %122, %123 : vector<8x56xf32>
    %c1_68 = arith.constant 1 : index
    %c0_69 = arith.constant 0 : index
    %c0_70 = arith.constant 0 : index
    %125 = vector.load %arg10[%c1_68, %c0_69, %c0_70] : memref<2x8x8xf32, #tpu.memory_space<vmem>>, vector<1x8x8xf32>
    %126 = vector.shape_cast %125 : vector<1x8x8xf32> to vector<8x8xf32>
    %127 = arith.truncf %126 : vector<8x8xf32> to vector<8x8xbf16>
    %128 = arith.truncf %124 : vector<8x56xf32> to vector<8x56xbf16>
    %cst_71 = arith.constant dense<0.000000e+00> : vector<8x56xf32>
    %129 = tpu.matmul %127, %128, %cst_71 {dimension_numbers = #tpu.dot_dimension_numbers<[1], [0], [0], [1], [0, 0, 1, 1], [], []>} : vector<8x8xbf16>, vector<8x56xbf16>, vector<8x56xf32> -> vector<8x56xf32>
    %c1_72 = arith.constant 1 : index
    %c0_73 = arith.constant 0 : index
    %c0_74 = arith.constant 0 : index
    %130 = vector.load %arg11[%c1_72, %c0_73, %c0_74] : memref<2x8x1xf32, #tpu.memory_space<vmem>>, vector<1x8x1xf32>
    %131 = vector.shape_cast %130 : vector<1x8x1xf32> to vector<8x1xf32>
    %132 = vector.broadcast %131 : vector<8x1xf32> to vector<8x56xf32>
    %133 = arith.addf %129, %132 : vector<8x56xf32>
    %134 = arith.addf %113, %133 : vector<8x56xf32>
    %c0_75 = arith.constant 0 : index
    %c0_76 = arith.constant 0 : index
    %135 = vector.load %arg12[%c0_75, %c0_76] : memref<8x56xf32, #tpu.memory_space<vmem>>, vector<8x56xf32>
    tpu.vector_store %arg12[%c0_75, %c0_76], %134 {strides = array<i32>} : memref<8x56xf32, #tpu.memory_space<vmem>>, vector<8x56xf32>,
    return
  }
  func.func @transform_0(%arg0: i32) -> (i32, i32) {
    %c0_i32 = arith.constant 0 : i32
    %c0_i32_0 = arith.constant 0 : i32
    %c0_i32_1 = arith.constant 0 : i32
    return %c0_i32, %c0_i32_0 : i32, i32
  }
  func.func @transform_1(%arg0: i32) -> (i32, i32) {
    %c0_i32 = arith.constant 0 : i32
    %c0_i32_0 = arith.constant 0 : i32
    %c0_i32_1 = arith.constant 0 : i32
    return %c0_i32, %c0_i32_0 : i32, i32
  }
  func.func @transform_2(%arg0: i32) -> (i32, i32) {
    %c0_i32 = arith.constant 0 : i32
    %c0_i32_0 = arith.constant 0 : i32
    return %c0_i32, %arg0 : i32, i32
  }
  func.func @transform_3(%arg0: i32) -> (i32, i32, i32) {
    %c0_i32 = arith.constant 0 : i32
    %c0_i32_0 = arith.constant 0 : i32
    %c0_i32_1 = arith.constant 0 : i32
    %c0_i32_2 = arith.constant 0 : i32
    return %c0_i32, %c0_i32_0, %c0_i32_1 : i32, i32, i32
  }
  func.func @transform_4(%arg0: i32) -> (i32, i32, i32) {
    %c0_i32 = arith.constant 0 : i32
    %c0_i32_0 = arith.constant 0 : i32
    %c0_i32_1 = arith.constant 0 : i32
    %c0_i32_2 = arith.constant 0 : i32
    return %c0_i32, %c0_i32_0, %c0_i32_1 : i32, i32, i32
  }
  func.func @transform_5(%arg0: i32) -> (i32, i32, i32) {
    %c0_i32 = arith.constant 0 : i32
    %c0_i32_0 = arith.constant 0 : i32
    %c0_i32_1 = arith.constant 0 : i32
    %c0_i32_2 = arith.constant 0 : i32
    return %c0_i32, %c0_i32_0, %c0_i32_1 : i32, i32, i32
  }
  func.func @transform_6(%arg0: i32) -> (i32, i32, i32) {
    %c0_i32 = arith.constant 0 : i32
    %c0_i32_0 = arith.constant 0 : i32
    %c0_i32_1 = arith.constant 0 : i32
    %c0_i32_2 = arith.constant 0 : i32
    return %c0_i32, %c0_i32_0, %c0_i32_1 : i32, i32, i32
  }
  func.func @transform_7(%arg0: i32) -> (i32, i32, i32) {
    %c0_i32 = arith.constant 0 : i32
    %c0_i32_0 = arith.constant 0 : i32
    %c0_i32_1 = arith.constant 0 : i32
    %c0_i32_2 = arith.constant 0 : i32
    return %c0_i32, %c0_i32_0, %c0_i32_1 : i32, i32, i32
  }
  func.func @transform_8(%arg0: i32) -> (i32, i32, i32) {
    %c0_i32 = arith.constant 0 : i32
    %c0_i32_0 = arith.constant 0 : i32
    %c0_i32_1 = arith.constant 0 : i32
    %c0_i32_2 = arith.constant 0 : i32
    return %c0_i32, %c0_i32_0, %c0_i32_1 : i32, i32, i32
  }
  func.func @transform_9(%arg0: i32) -> (i32, i32, i32) {
    %c0_i32 = arith.constant 0 : i32
    %c0_i32_0 = arith.constant 0 : i32
    %c0_i32_1 = arith.constant 0 : i32
    %c0_i32_2 = arith.constant 0 : i32
    return %c0_i32, %c0_i32_0, %c0_i32_1 : i32, i32, i32
  }
  func.func @transform_10(%arg0: i32) -> (i32, i32, i32) {
    %c0_i32 = arith.constant 0 : i32
    %c0_i32_0 = arith.constant 0 : i32
    %c0_i32_1 = arith.constant 0 : i32
    %c0_i32_2 = arith.constant 0 : i32
    return %c0_i32, %c0_i32_0, %c0_i32_1 : i32, i32, i32
  }
  func.func @transform_11(%arg0: i32) -> (i32, i32) {
    %c0_i32 = arith.constant 0 : i32
    %c0_i32_0 = arith.constant 0 : i32
    return %c0_i32, %arg0 : i32, i32
  }
}

module attributes {stable_mosaic.version = 11 : i64} {
  func.func @_dense1x1_kernel(%arg0: i32, %arg1: memref<16x8xf32, #tpu.memory_space<vmem>>, %arg2: memref<2x8xf32, #tpu.memory_space<vmem>>, %arg3: memref<1x2xf32, #tpu.memory_space<vmem>>, %arg4: memref<16x2xf32, #tpu.memory_space<vmem>>) attributes {dimension_semantics = [#tpu.dimension_semantics<parallel>], iteration_bounds = array<i64: 1>, scalar_prefetch = 0 : i64, scratch_operands = 0 : i64, tpu.core_type = #tpu.core_type<tc>, window_params = [{transform_indices = @transform_0, window_bounds = array<i64: 16, 8>}, {pipeline_mode = #tpu.pipeline_mode<synchronous>, transform_indices = @transform_1, window_bounds = array<i64: 2, 8>}, {pipeline_mode = #tpu.pipeline_mode<synchronous>, transform_indices = @transform_2, window_bounds = array<i64: 1, 2>}, {transform_indices = @transform_3, window_bounds = array<i64: 16, 2>}]} {
    %c0 = arith.constant 0 : index
    %c0_0 = arith.constant 0 : index
    %0 = vector.load %arg1[%c0, %c0_0] : memref<16x8xf32, #tpu.memory_space<vmem>>, vector<16x8xf32>
    %1 = arith.truncf %0 : vector<16x8xf32> to vector<16x8xbf16>
    %c0_1 = arith.constant 0 : index
    %c0_2 = arith.constant 0 : index
    %2 = vector.load %arg2[%c0_1, %c0_2] : memref<2x8xf32, #tpu.memory_space<vmem>>, vector<2x8xf32>
    %3 = arith.truncf %2 : vector<2x8xf32> to vector<2x8xbf16>
    %cst = arith.constant dense<0.000000e+00> : vector<16x2xf32>
    %4 = tpu.matmul %1, %3, %cst {dimension_numbers = #tpu.dot_dimension_numbers<[1], [1], [0], [0], [0, 0, 1, 0], [], []>} : vector<16x8xbf16>, vector<2x8xbf16>, vector<16x2xf32> -> vector<16x2xf32>
    %c0_3 = arith.constant 0 : index
    %c0_4 = arith.constant 0 : index
    %5 = vector.load %arg3[%c0_3, %c0_4] : memref<1x2xf32, #tpu.memory_space<vmem>>, vector<1x2xf32>
    %6 = vector.broadcast %5 : vector<1x2xf32> to vector<16x2xf32>
    %7 = arith.addf %4, %6 : vector<16x2xf32>
    %c0_5 = arith.constant 0 : index
    %c0_6 = arith.constant 0 : index
    %8 = vector.load %arg4[%c0_5, %c0_6] : memref<16x2xf32, #tpu.memory_space<vmem>>, vector<16x2xf32>
    tpu.vector_store %arg4[%c0_5, %c0_6], %7 {strides = array<i32>} : memref<16x2xf32, #tpu.memory_space<vmem>>, vector<16x2xf32>,
    return
  }
  func.func @transform_0(%arg0: i32) -> (i32, i32) {
    %c0_i32 = arith.constant 0 : i32
    %c0_i32_0 = arith.constant 0 : i32
    return %arg0, %c0_i32 : i32, i32
  }
  func.func @transform_1(%arg0: i32) -> (i32, i32) {
    %c0_i32 = arith.constant 0 : i32
    %c0_i32_0 = arith.constant 0 : i32
    %c0_i32_1 = arith.constant 0 : i32
    return %c0_i32, %c0_i32_0 : i32, i32
  }
  func.func @transform_2(%arg0: i32) -> (i32, i32) {
    %c0_i32 = arith.constant 0 : i32
    %c0_i32_0 = arith.constant 0 : i32
    %c0_i32_1 = arith.constant 0 : i32
    return %c0_i32, %c0_i32_0 : i32, i32
  }
  func.func @transform_3(%arg0: i32) -> (i32, i32) {
    %c0_i32 = arith.constant 0 : i32
    %c0_i32_0 = arith.constant 0 : i32
    return %arg0, %c0_i32 : i32, i32
  }
}

</mosaic_0001>

<llo_original>
// kernel: transformer_forward.4
$region0: #{transformer_forward.4}
  #allocation0 [shape = 'u32[]', space=smem, size = 0x4, offset = 0x4, fixed_abs, tag = 'smem constant byte address 0x4 - core index']
  #allocation1 [shape = 'u32[144,128]{1,0:T(1,128)}', space=vmem, size = 0x12000, scoped, tag = 'internal scratch']
  %s0 = inlined_call_operand.vmem [shape: f32[64,2], index: 0, kind: input, shape index: {}]
  %s1 = inlined_call_operand.vmem [shape: f32[8,2], index: 1, kind: input, shape index: {}]
  %s2 = inlined_call_operand.vmem [shape: f32[1,8], index: 2, kind: input, shape index: {}]
  %s3 = inlined_call_operand.vmem [shape: f32[64,8], index: 3, kind: output, shape index: {}]
  %s4 = sld [smem:[#allocation0]]
  $region22: #{transformer_forward.4} parent=0
    _
  %s6 = ssub.s32 1, %s4
  %s7 = scalar_select 0, %s6, %s4
  // Predicated region
  $region2: #{transformer_forward.4} parent=0 // pred_check
    _
  $region3: #{transformer_forward.4} parent=0 // pred_check_branch
    %9 = sbr.rel (0) target = $region5
  $region4: #{transformer_forward.4} parent=0 // pred_region
    _
  $region5: #{transformer_forward.4} parent=0 // pred_fallthru
    _
  // Predicated region
  $region6: #{transformer_forward.4} parent=0 // pred_check
    _
  $region7: #{transformer_forward.4} parent=0 // pred_check_branch
    %11 = sbr.rel (0) target = $region9
  $region8: #{transformer_forward.4} parent=0 // pred_region
    _
  $region9: #{transformer_forward.4} parent=0 // pred_fallthru
    _
  // Predicated region
  $region10: #{transformer_forward.4} parent=0 // pred_check
    _
  $region11: #{transformer_forward.4} parent=0 // pred_check_branch
    %13 = sbr.rel (0) target = $region13
  $region12: #{transformer_forward.4} parent=0 // pred_region
    _
  $region13: #{transformer_forward.4} parent=0 // pred_fallthru
    _
  %v15 = vld [vmem:[%s0] sm:$0xff]
  %v16 = vld [vmem:[%s0 + $0x8] sm:$0xff]
  %v17 = vld [vmem:[%s0 + $0x10] sm:$0xff]
  %v18 = vld [vmem:[%s0 + $0x18] sm:$0xff]
  %v19 = vld [vmem:[%s0 + $0x20] sm:$0xff]
  %v20 = vld [vmem:[%s0 + $0x28] sm:$0xff]
  %v21 = vld [vmem:[%s0 + $0x30] sm:$0xff]
  %v22 = vld [vmem:[%s0 + $0x38] sm:$0xff]
  %v23 = vpack.c.bf16 %v16, %v15
  %v24 = vpack.c.bf16 %v18, %v17
  %v25 = vpack.c.bf16 %v20, %v19
  %v26 = vpack.c.bf16 %v22, %v21
  %v27 = vld [vmem:[%s1] sm:$0xff]
  %v28 = vpack.c.bf16 %v27, %v27
  %v29 = vld [vmem:[%s2] sm:$0x1]
  %v31 = vlaneseq
  %v32 = vshrl.u32 %v31, 7
  %v33 = vsub.s32 0, %v32
  %v34 = vrot.slane %v29, %v33
  %vm36 = vcmask 15360
  %v38 = vsel %vm36, %v23, 0
  %v41 = vsel %vm36, %v24, 0
  %v44 = vsel %vm36, %v25, 0
  %v47 = vsel %vm36, %v26, 0
  %v50 = vsel %vm36, %v28, 0
  %52 = vmatprep.subr.bf16.mxu0 0
  %53 = vmatpush1.bf16.xpose.msra.mxu0 0
  %54 = vmatprep.subr.bf16.mxu0 0
  %55 = vmatpush1.bf16.xpose.msra.mxu0 0
  %56 = vmatprep.subr.bf16.mxu0 0
  %57 = vmatpush1.bf16.xpose.msra.mxu0 0
  %58 = vmatprep.subr.bf16.mxu0 0
  %59 = vmatpush1.bf16.xpose.msra.mxu0 0
  %60 = vmatprep.subr.bf16.mxu0 0
  %61 = vmatpush1.bf16.xpose.msra.mxu0 0
  %62 = vmatprep.subr.bf16.mxu0 0
  %63 = vmatpush1.bf16.xpose.msra.mxu0 0
  %64 = vmatprep.subr.bf16.mxu0 0
  %65 = vmatpush1.bf16.xpose.msra.mxu0 0
  %66 = vmatprep.subr.bf16.mxu0 0
  %67 = vmatpush1.bf16.xpose.msra.mxu0 %v50
  %68 = vmatprep.subr.bf16.mxu0 0
  %69 = vmatpush2.bf16.xpose.msra.mxu0 0
  %70 = vmatprep.subr.bf16.mxu0 0
  %71 = vmatpush2.bf16.xpose.msra.mxu0 0
  %72 = vmatprep.subr.bf16.mxu0 0
  %73 = vmatpush2.bf16.xpose.msra.mxu0 0
  %74 = vmatprep.subr.bf16.mxu0 0
  %75 = vmatpush2.bf16.xpose.msra.mxu0 0
  %76 = vmatprep.subr.bf16.mxu0 0
  %77 = vmatpush2.bf16.xpose.msra.mxu0 0
  %78 = vmatprep.subr.bf16.mxu0 0
  %79 = vmatpush2.bf16.xpose.msra.mxu0 0
  %80 = vmatprep.subr.bf16.mxu0 0
  %81 = vmatpush2.bf16.xpose.msra.mxu0 0
  %82 = vmatprep.subr.bf16.mxu0 0
  %83 = vmatpush2.bf16.xpose.msra.mxu0 0
  %84 = vmatprep.mubr.bf16.mxu0 0
  %85 = vmatmul.mubr.bf16.gmra.mxu0 %v38
  %v86 = vpop.f32.mrf.mxu0
  %v87 = vadd.f32 %v34, %v86
  %v88 = vpop.f32.mrf.mxu0
  %v89 = vpop.f32.mrf.mxu0
  %v90 = vadd.f32 %v34, %v89
  %v91 = vpop.f32.mrf.mxu0
  %92 = vmatprep.mubr.bf16.mxu0 0
  %93 = vmatmul.mubr.bf16.gmra.mxu0 %v41
  %v94 = vpop.f32.mrf.mxu0
  %v95 = vadd.f32 %v34, %v94
  %v96 = vpop.f32.mrf.mxu0
  %v97 = vpop.f32.mrf.mxu0
  %v98 = vadd.f32 %v34, %v97
  %v99 = vpop.f32.mrf.mxu0
  %100 = vmatprep.mubr.bf16.mxu0 0
  %101 = vmatmul.mubr.bf16.gmra.mxu0 %v44
  %v102 = vpop.f32.mrf.mxu0
  %v103 = vadd.f32 %v34, %v102
  %v104 = vpop.f32.mrf.mxu0
  %v105 = vpop.f32.mrf.mxu0
  %v106 = vadd.f32 %v34, %v105
  %v107 = vpop.f32.mrf.mxu0
  %108 = vmatprep.mubr.bf16.mxu0 0
  %109 = vmatmul.mubr.bf16.gmra.mxu0 %v47
  %v110 = vpop.f32.mrf.mxu0
  %v111 = vadd.f32 %v34, %v110
  %v112 = vpop.f32.mrf.mxu0
  %v113 = vpop.f32.mrf.mxu0
  %v114 = vadd.f32 %v34, %v113
  %v115 = vpop.f32.mrf.mxu0
  %116 = vdwg.mxu0
  %vm117 = vcmask 64512
  %118 = vst.msk [vmem:[%s3] sm:$0xff] %vm117, %v87
  %119 = vst.msk [vmem:[%s3 + $0x8] sm:$0xff] %vm117, %v90
  %120 = vst.msk [vmem:[%s3 + $0x10] sm:$0xff] %vm117, %v95
  %121 = vst.msk [vmem:[%s3 + $0x18] sm:$0xff] %vm117, %v98
  %122 = vst.msk [vmem:[%s3 + $0x20] sm:$0xff] %vm117, %v103
  %123 = vst.msk [vmem:[%s3 + $0x28] sm:$0xff] %vm117, %v106
  %124 = vst.msk [vmem:[%s3 + $0x30] sm:$0xff] %vm117, %v111
  %125 = vst.msk [vmem:[%s3 + $0x38] sm:$0xff] %vm117, %v114
  // Predicated region
  $region14: #{transformer_forward.4} parent=0 // pred_check
    _
  $region15: #{transformer_forward.4} parent=0 // pred_check_branch
    %127 = sbr.rel (0) target = $region17
  $region16: #{transformer_forward.4} parent=0 // pred_region
    _
  $region17: #{transformer_forward.4} parent=0 // pred_fallthru
    _
  // Predicated region
  $region18: #{transformer_forward.4} parent=0 // pred_check
    _
  $region19: #{transformer_forward.4} parent=0 // pred_check_branch
    %129 = sbr.rel (0) target = $region21
  $region20: #{transformer_forward.4} parent=0 // pred_region
    _
  $region21: #{transformer_forward.4} parent=0 // pred_fallthru
    _

// kernel: transformer_forward.5
$region0: #{transformer_forward.5}
  #allocation0 [shape = 'u32[]', space=smem, size = 0x4, offset = 0x4, fixed_abs, tag = 'smem constant byte address 0x4 - core index']
  #allocation1 [shape = 'u32[144,128]{1,0:T(1,128)}', space=vmem, size = 0x12000, scoped, tag = 'internal scratch']
  %s0 = inlined_call_operand.vmem [shape: f32[2,64], index: 0, kind: input, shape index: {}]
  %s1 = inlined_call_operand.vmem [shape: f32[64,64], index: 1, kind: input, shape index: {}]
  %s2 = inlined_call_operand.vmem [shape: f32[8,64], index: 2, kind: input, shape index: {}]
  %s3 = inlined_call_operand.vmem [shape: f32[2,4,24], index: 3, kind: input, shape index: {}]
  %s4 = inlined_call_operand.vmem [shape: f32[2,4,24], index: 4, kind: input, shape index: {}]
  %s5 = inlined_call_operand.vmem [shape: f32[2,4,8], index: 5, kind: input, shape index: {}]
  %s6 = inlined_call_operand.vmem [shape: f32[2,8,4], index: 6, kind: input, shape index: {}]
  %s7 = inlined_call_operand.vmem [shape: f32[2,8,8], index: 7, kind: input, shape index: {}]
  %s8 = inlined_call_operand.vmem [shape: f32[2,8,1], index: 8, kind: input, shape index: {}]
  %s9 = inlined_call_operand.vmem [shape: f32[2,8,8], index: 9, kind: input, shape index: {}]
  %s10 = inlined_call_operand.vmem [shape: f32[2,8,1], index: 10, kind: input, shape index: {}]
  %s11 = inlined_call_operand.vmem [shape: f32[8,64], index: 11, kind: output, shape index: {}]
  %s12 = sld [smem:[#allocation0]]
  $region54: #{transformer_forward.5} parent=0
    _
  %s14 = ssub.s32 1, %s12
  %s15 = scalar_select 0, %s14, %s12
  // Predicated region
  $region2: #{transformer_forward.5} parent=0 // pred_check
    _
  $region3: #{transformer_forward.5} parent=0 // pred_check_branch
    %17 = sbr.rel (0) target = $region5
  $region4: #{transformer_forward.5} parent=0 // pred_region
    _
  $region5: #{transformer_forward.5} parent=0 // pred_fallthru
    _
  // Predicated region
  $region6: #{transformer_forward.5} parent=0 // pred_check
    _
  $region7: #{transformer_forward.5} parent=0 // pred_check_branch
    %19 = sbr.rel (0) target = $region9
  $region8: #{transformer_forward.5} parent=0 // pred_region
    _
  $region9: #{transformer_forward.5} parent=0 // pred_fallthru
    _
  // Predicated region
  $region10: #{transformer_forward.5} parent=0 // pred_check
    _
  $region11: #{transformer_forward.5} parent=0 // pred_check_branch
    %21 = sbr.rel (0) target = $region13
  $region12: #{transformer_forward.5} parent=0 // pred_region
    _
  $region13: #{transformer_forward.5} parent=0 // pred_fallthru
    _
  // Predicated region
  $region14: #{transformer_forward.5} parent=0 // pred_check
    _
  $region15: #{transformer_forward.5} parent=0 // pred_check_branch
    %23 = sbr.rel (0) target = $region17
  $region16: #{transformer_forward.5} parent=0 // pred_region
    _
  $region17: #{transformer_forward.5} parent=0 // pred_fallthru
    _
  // Predicated region
  $region18: #{transformer_forward.5} parent=0 // pred_check
    _
  $region19: #{transformer_forward.5} parent=0 // pred_check_branch
    %25 = sbr.rel (0) target = $region21
  $region20: #{transformer_forward.5} parent=0 // pred_region
    _
  $region21: #{transformer_forward.5} parent=0 // pred_fallthru
    _
  // Predicated region
  $region22: #{transformer_forward.5} parent=0 // pred_check
    _
  $region23: #{transformer_forward.5} parent=0 // pred_check_branch
    %27 = sbr.rel (0) target = $region25
  $region24: #{transformer_forward.5} parent=0 // pred_region
    _
  $region25: #{transformer_forward.5} parent=0 // pred_fallthru
    _
  // Predicated region
  $region26: #{transformer_forward.5} parent=0 // pred_check
    _
  $region27: #{transformer_forward.5} parent=0 // pred_check_branch
    %29 = sbr.rel (0) target = $region29
  $region28: #{transformer_forward.5} parent=0 // pred_region
    _
  $region29: #{transformer_forward.5} parent=0 // pred_fallthru
    _
  // Predicated region
  $region30: #{transformer_forward.5} parent=0 // pred_check
    _
  $region31: #{transformer_forward.5} parent=0 // pred_check_branch
    %31 = sbr.rel (0) target = $region33
  $region32: #{transformer_forward.5} parent=0 // pred_region
    _
  $region33: #{transformer_forward.5} parent=0 // pred_fallthru
    _
  // Predicated region
  $region34: #{transformer_forward.5} parent=0 // pred_check
    _
  $region35: #{transformer_forward.5} parent=0 // pred_check_branch
    %33 = sbr.rel (0) target = $region37
  $region36: #{transformer_forward.5} parent=0 // pred_region
    _
  $region37: #{transformer_forward.5} parent=0 // pred_fallthru
    _
  // Predicated region
  $region38: #{transformer_forward.5} parent=0 // pred_check
    _
  $region39: #{transformer_forward.5} parent=0 // pred_check_branch
    %35 = sbr.rel (0) target = $region41
  $region40: #{transformer_forward.5} parent=0 // pred_region
    _
  $region41: #{transformer_forward.5} parent=0 // pred_fallthru
    _
  // Predicated region
  $region42: #{transformer_forward.5} parent=0 // pred_check
    _
  $region43: #{transformer_forward.5} parent=0 // pred_check_branch
    %37 = sbr.rel (0) target = $region45
  $region44: #{transformer_forward.5} parent=0 // pred_region
    _
  $region45: #{transformer_forward.5} parent=0 // pred_fallthru
    _
  %v39 = vld [vmem:[%s0] sm:$0x3]
  %v40 = vld [vmem:[%s1] sm:$0xff]
  %v41 = vld [vmem:[%s1 + $0x8] sm:$0xff]
  %v42 = vld [vmem:[%s1 + $0x10] sm:$0xff]
  %v43 = vld [vmem:[%s1 + $0x18] sm:$0xff]
  %v44 = vld [vmem:[%s1 + $0x20] sm:$0xff]
  %v45 = vld [vmem:[%s1 + $0x28] sm:$0xff]
  %v46 = vld [vmem:[%s1 + $0x30] sm:$0xff]
  %v47 = vld [vmem:[%s1 + $0x38] sm:$0xff]
  %v48 = vld [vmem:[%s2] sm:$0xff]
  %vm49 = vcmask 1048064
  %50 = vrot.lane.b32.xlu0 %v48, 64
  %v51 = vpop.permute.xlu0 %50
  %v52 = vsel %vm49, %v51, %v48
  %53 = vrot.lane.b32.xlu0 %v52, 64
  %v54 = vpop.permute.xlu0 %53
  %v55 = vsel %vm49, %v54, %v48
  %v56 = vlaneseq
  %v57 = vshrl.u32 %v56, 7
  %v58 = vsub.s32 0, %v57
  %v59 = vrot.slane %v39, %v58
  %61 = vrot.lane.b32.xlu0 %v59, 63
  %v62 = vpop.permute.xlu0 %61
  %v64 = vmul.f32 %v55, %v62
  %v65 = vlaneseq
  %v66 = vshrl.u32 %v65, 7
  %v67 = vsub.s32 1, %v66
  %v68 = vrot.slane %v39, %v67
  %70 = vrot.lane.b32.xlu0 %v68, 62
  %v71 = vpop.permute.xlu0 %70
  %v73 = vmul.f32 %v55, %v71
  %75 = vrot.lane.b32.xlu0 %v64, 65
  %v76 = vpop.permute.xlu0 %75
  %79 = vrot.lane.b32.xlu0 %v73, 66
  %v80 = vpop.permute.xlu0 %79
  %v82 = vpack.c.bf16 %v76, %v48
  %v83 = vpack.c.bf16 %v80, %v80
  %v84 = vld [vmem:[%s3] sm:$0xf]
  %v85 = vpack.c.bf16 %v84, %v84
  %vm86 = vcmask 195584
  %v88 = vsel %vm86, %v85, 0
  %vm90 = vcmask 1043456
  %v92 = vsel %vm90, %v83, 0
  %94 = vmatprep.subr.bf16.mxu0 0
  %95 = vmatpush1.bf16.msra.mxu0 0
  %96 = vmatprep.subr.bf16.mxu0 0
  %97 = vmatpush1.bf16.msra.mxu0 0
  %98 = vmatprep.subr.bf16.mxu0 0
  %99 = vmatpush1.bf16.msra.mxu0 0
  %100 = vmatprep.subr.bf16.mxu0 0
  %101 = vmatpush1.bf16.msra.mxu0 0
  %102 = vmatprep.subr.bf16.mxu0 0
  %103 = vmatpush1.bf16.msra.mxu0 0
  %104 = vmatprep.subr.bf16.mxu0 0
  %105 = vmatpush1.bf16.msra.mxu0 0
  %106 = vmatprep.subr.bf16.mxu0 0
  %107 = vmatpush1.bf16.msra.mxu0 %v92
  %108 = vmatprep.subr.bf16.mxu0 0
  %109 = vmatpush1.bf16.msra.mxu0 %v82
  %110 = vmatprep.subr.bf16.mxu0 0
  %111 = vmatpush2.bf16.msra.mxu0 0
  %112 = vmatprep.subr.bf16.mxu0 0
  %113 = vmatpush2.bf16.msra.mxu0 0
  %114 = vmatprep.subr.bf16.mxu0 0
  %115 = vmatpush2.bf16.msra.mxu0 0
  %116 = vmatprep.subr.bf16.mxu0 0
  %117 = vmatpush2.bf16.msra.mxu0 0
  %118 = vmatprep.subr.bf16.mxu0 0
  %119 = vmatpush2.bf16.msra.mxu0 0
  %120 = vmatprep.subr.bf16.mxu0 0
  %121 = vmatpush2.bf16.msra.mxu0 0
  %122 = vmatprep.subr.bf16.mxu0 0
  %123 = vmatpush2.bf16.msra.mxu0 0
  %124 = vmatprep.subr.bf16.mxu0 0
  %125 = vmatpush2.bf16.msra.mxu0 0
  %126 = vmatprep.mubr.bf16.mxu0 0
  %127 = vmatmul.mubr.bf16.gmra.mxu0 %v88
  %v128 = vpop.f32.mrf.mxu0
  %v129 = vadd.f32 0.0, %v128
  %v130 = vpop.f32.mrf.mxu0
  %v131 = vpop.f32.mrf.mxu0
  %v132 = vpop.f32.mrf.mxu0
  %133 = vdwg.mxu0
  %v134 = vld [vmem:[%s4] sm:$0xf]
  %v135 = vpack.c.bf16 %v134, %v134
  %v137 = vsel %vm86, %v135, 0
  %139 = vmatprep.subr.bf16.mxu0 0
  %140 = vmatpush1.bf16.msra.mxu0 0
  %141 = vmatprep.subr.bf16.mxu0 0
  %142 = vmatpush1.bf16.msra.mxu0 0
  %143 = vmatprep.subr.bf16.mxu0 0
  %144 = vmatpush1.bf16.msra.mxu0 0
  %145 = vmatprep.subr.bf16.mxu0 0
  %146 = vmatpush1.bf16.msra.mxu0 0
  %147 = vmatprep.subr.bf16.mxu0 0
  %148 = vmatpush1.bf16.msra.mxu0 0
  %149 = vmatprep.subr.bf16.mxu0 0
  %150 = vmatpush1.bf16.msra.mxu0 0
  %151 = vmatprep.subr.bf16.mxu0 0
  %152 = vmatpush1.bf16.msra.mxu0 %v92
  %153 = vmatprep.subr.bf16.mxu0 0
  %154 = vmatpush1.bf16.msra.mxu0 %v82
  %155 = vmatprep.subr.bf16.mxu0 0
  %156 = vmatpush2.bf16.msra.mxu0 0
  %157 = vmatprep.subr.bf16.mxu0 0
  %158 = vmatpush2.bf16.msra.mxu0 0
  %159 = vmatprep.subr.bf16.mxu0 0
  %160 = vmatpush2.bf16.msra.mxu0 0
  %161 = vmatprep.subr.bf16.mxu0 0
  %162 = vmatpush2.bf16.msra.mxu0 0
  %163 = vmatprep.subr.bf16.mxu0 0
  %164 = vmatpush2.bf16.msra.mxu0 0
  %165 = vmatprep.subr.bf16.mxu0 0
  %166 = vmatpush2.bf16.msra.mxu0 0
  %167 = vmatprep.subr.bf16.mxu0 0
  %168 = vmatpush2.bf16.msra.mxu0 0
  %169 = vmatprep.subr.bf16.mxu0 0
  %170 = vmatpush2.bf16.msra.mxu0 0
  %171 = vmatprep.mubr.bf16.mxu0 0
  %172 = vmatmul.mubr.bf16.gmra.mxu0 %v137
  %v173 = vpop.f32.mrf.mxu0
  %v174 = vadd.f32 0.0, %v173
  %v175 = vpop.f32.mrf.mxu0
  %v176 = vpop.f32.mrf.mxu0
  %v177 = vpop.f32.mrf.mxu0
  %178 = vdwg.mxu0
  %v179 = vld [vmem:[%s5] sm:$0xf]
  %v180 = vpack.c.bf16 %v179, %v179
  %v181 = vpack.c.bf16 %v48, %v48
  %vm182 = vcmask 64512
  %v184 = vsel %vm182, %v180, 0
  %v187 = vsel %vm90, %v181, 0
  %189 = vmatprep.subr.bf16.mxu0 0
  %190 = vmatpush1.bf16.msra.mxu0 0
  %191 = vmatprep.subr.bf16.mxu0 0
  %192 = vmatpush1.bf16.msra.mxu0 0
  %193 = vmatprep.subr.bf16.mxu0 0
  %194 = vmatpush1.bf16.msra.mxu0 0
  %195 = vmatprep.subr.bf16.mxu0 0
  %196 = vmatpush1.bf16.msra.mxu0 0
  %197 = vmatprep.subr.bf16.mxu0 0
  %198 = vmatpush1.bf16.msra.mxu0 0
  %199 = vmatprep.subr.bf16.mxu0 0
  %200 = vmatpush1.bf16.msra.mxu0 0
  %201 = vmatprep.subr.bf16.mxu0 0
  %202 = vmatpush1.bf16.msra.mxu0 0
  %203 = vmatprep.subr.bf16.mxu0 0
  %204 = vmatpush1.bf16.msra.mxu0 %v187
  %205 = vmatprep.subr.bf16.mxu0 0
  %206 = vmatpush2.bf16.msra.mxu0 0
  %207 = vmatprep.subr.bf16.mxu0 0
  %208 = vmatpush2.bf16.msra.mxu0 0
  %209 = vmatprep.subr.bf16.mxu0 0
  %210 = vmatpush2.bf16.msra.mxu0 0
  %211 = vmatprep.subr.bf16.mxu0 0
  %212 = vmatpush2.bf16.msra.mxu0 0
  %213 = vmatprep.subr.bf16.mxu0 0
  %214 = vmatpush2.bf16.msra.mxu0 0
  %215 = vmatprep.subr.bf16.mxu0 0
  %216 = vmatpush2.bf16.msra.mxu0 0
  %217 = vmatprep.subr.bf16.mxu0 0
  %218 = vmatpush2.bf16.msra.mxu0 0
  %219 = vmatprep.subr.bf16.mxu0 0
  %220 = vmatpush2.bf16.msra.mxu0 0
  %221 = vmatprep.mubr.bf16.mxu0 0
  %222 = vmatmul.mubr.bf16.gmra.mxu0 %v184
  %v223 = vpop.f32.mrf.mxu0
  %v224 = vadd.f32 0.0, %v223
  %v225 = vpop.f32.mrf.mxu0
  %v226 = vpop.f32.mrf.mxu0
  %v227 = vpop.f32.mrf.mxu0
  %228 = vdwg.mxu0
  %v229 = vpack.c.bf16 %v129, %v129
  %v230 = vpack.c.bf16 %v174, %v174
  %231 = vxpose.xlu0.c.b16.start [1/8] %v229, 128
  %232 = vxpose.xlu0.c.b16.cont [2/8] 0, 128
  %233 = vxpose.xlu0.c.b16.cont [3/8] 0, 128
  %234 = vxpose.xlu0.c.b16.cont [4/8] 0, 128
  %235 = vxpose.xlu0.c.b16.cont [5/8] 0, 128
  %236 = vxpose.xlu0.c.b16.cont [6/8] 0, 128
  %237 = vxpose.xlu0.c.b16.cont [7/8] 0, 128
  %238 = vxpose.xlu0.c.b16.end [8/8] 0, 128
  %v239 = vpop.trf.xlu0
  %v240 = vpop.trf.xlu0
  %v241 = vpop.trf.xlu0
  %v242 = vpop.trf.xlu0
  %v243 = vpop.trf.xlu0
  %v244 = vpop.trf.xlu0
  %v245 = vpop.trf.xlu0
  %v246 = vpop.trf.xlu0
  %vm247 = vcmask 31744
  %v249 = vsel %vm247, %v239, 0
  %v252 = vsel %vm247, %v240, 0
  %v255 = vsel %vm247, %v241, 0
  %v258 = vsel %vm247, %v242, 0
  %vm260 = vcmask 1041408
  %v262 = vsel %vm260, %v230, 0
  %264 = vmatprep.subr.bf16.mxu0 0
  %265 = vmatpush1.bf16.msra.mxu0 0
  %266 = vmatprep.subr.bf16.mxu0 0
  %267 = vmatpush1.bf16.msra.mxu0 0
  %268 = vmatprep.subr.bf16.mxu0 0
  %269 = vmatpush1.bf16.msra.mxu0 0
  %270 = vmatprep.subr.bf16.mxu0 0
  %271 = vmatpush1.bf16.msra.mxu0 0
  %272 = vmatprep.subr.bf16.mxu0 0
  %273 = vmatpush1.bf16.msra.mxu0 0
  %274 = vmatprep.subr.bf16.mxu0 0
  %275 = vmatpush1.bf16.msra.mxu0 0
  %276 = vmatprep.subr.bf16.mxu0 0
  %277 = vmatpush1.bf16.msra.mxu0 0
  %278 = vmatprep.subr.bf16.mxu0 0
  %279 = vmatpush1.bf16.msra.mxu0 %v262
  %280 = vmatprep.subr.bf16.mxu0 0
  %281 = vmatpush2.bf16.msra.mxu0 0
  %282 = vmatprep.subr.bf16.mxu0 0
  %283 = vmatpush2.bf16.msra.mxu0 0
  %284 = vmatprep.subr.bf16.mxu0 0
  %285 = vmatpush2.bf16.msra.mxu0 0
  %286 = vmatprep.subr.bf16.mxu0 0
  %287 = vmatpush2.bf16.msra.mxu0 0
  %288 = vmatprep.subr.bf16.mxu0 0
  %289 = vmatpush2.bf16.msra.mxu0 0
  %290 = vmatprep.subr.bf16.mxu0 0
  %291 = vmatpush2.bf16.msra.mxu0 0
  %292 = vmatprep.subr.bf16.mxu0 0
  %293 = vmatpush2.bf16.msra.mxu0 0
  %294 = vmatprep.subr.bf16.mxu0 0
  %295 = vmatpush2.bf16.msra.mxu0 0
  %296 = vmatprep.mubr.bf16.mxu0 0
  %297 = vmatmul.mubr.bf16.gmra.mxu0 %v249
  %v298 = vpop.f32.mrf.mxu0
  %v299 = vadd.f32 %v40, %v298
  %v300 = vpop.f32.mrf.mxu0
  %v301 = vpop.f32.mrf.mxu0
  %v302 = vadd.f32 %v41, %v301
  %v303 = vpop.f32.mrf.mxu0
  %304 = vmatprep.mubr.bf16.mxu0 0
  %305 = vmatmul.mubr.bf16.gmra.mxu0 %v252
  %v306 = vpop.f32.mrf.mxu0
  %v307 = vadd.f32 %v42, %v306
  %v308 = vpop.f32.mrf.mxu0
  %v309 = vpop.f32.mrf.mxu0
  %v310 = vadd.f32 %v43, %v309
  %v311 = vpop.f32.mrf.mxu0
  %312 = vmatprep.mubr.bf16.mxu0 0
  %313 = vmatmul.mubr.bf16.gmra.mxu0 %v255
  %v314 = vpop.f32.mrf.mxu0
  %v315 = vadd.f32 %v44, %v314
  %v316 = vpop.f32.mrf.mxu0
  %v317 = vpop.f32.mrf.mxu0
  %v318 = vadd.f32 %v45, %v317
  %v319 = vpop.f32.mrf.mxu0
  %320 = vmatprep.mubr.bf16.mxu0 0
  %321 = vmatmul.mubr.bf16.gmra.mxu0 %v258
  %v322 = vpop.f32.mrf.mxu0
  %v323 = vadd.f32 %v46, %v322
  %v324 = vpop.f32.mrf.mxu0
  %v325 = vpop.f32.mrf.mxu0
  %v326 = vadd.f32 %v47, %v325
  %v327 = vpop.f32.mrf.mxu0
  %328 = vdwg.mxu0
  %vm329 = vcmask 523264
  %v330 = vsel %vm329, %v299, -inf
  %331 = vmax.xlane.f32.xlu0 %v330
  %v332 = vpop.xlane.xlu0 %331
  %v333 = vsel %vm329, %v302, -inf
  %334 = vmax.xlane.f32.xlu0 %v333
  %v335 = vpop.xlane.xlu0 %334
  %v336 = vsel %vm329, %v307, -inf
  %337 = vmax.xlane.f32.xlu0 %v336
  %v338 = vpop.xlane.xlu0 %337
  %v339 = vsel %vm329, %v310, -inf
  %340 = vmax.xlane.f32.xlu0 %v339
  %v341 = vpop.xlane.xlu0 %340
  %v342 = vsel %vm329, %v315, -inf
  %343 = vmax.xlane.f32.xlu0 %v342
  %v344 = vpop.xlane.xlu0 %343
  %v345 = vsel %vm329, %v318, -inf
  %346 = vmax.xlane.f32.xlu0 %v345
  %v347 = vpop.xlane.xlu0 %346
  %v348 = vsel %vm329, %v323, -inf
  %349 = vmax.xlane.f32.xlu0 %v348
  %v350 = vpop.xlane.xlu0 %349
  %v351 = vsel %vm329, %v326, -inf
  %352 = vmax.xlane.f32.xlu0 %v351
  %v353 = vpop.xlane.xlu0 %352
  %v354 = vsub.f32 %v299, %v332
  %v355 = vsub.f32 %v302, %v335
  %v356 = vsub.f32 %v307, %v338
  %v357 = vsub.f32 %v310, %v341
  %v358 = vsub.f32 %v315, %v344
  %v359 = vsub.f32 %v318, %v347
  %v360 = vsub.f32 %v323, %v350
  %v361 = vsub.f32 %v326, %v353
  %v362 = vmul.f32 %v354, 1.442695
  %v363 = vpow.pop %v362
  %v364 = vmul.f32 %v355, 1.442695
  %v365 = vpow.pop %v364
  %v366 = vmul.f32 %v356, 1.442695
  %v367 = vpow.pop %v366
  %v368 = vmul.f32 %v357, 1.442695
  %v369 = vpow.pop %v368
  %v370 = vmul.f32 %v358, 1.442695
  %v371 = vpow.pop %v370
  %v372 = vmul.f32 %v359, 1.442695
  %v373 = vpow.pop %v372
  %v374 = vmul.f32 %v360, 1.442695
  %v375 = vpow.pop %v374
  %v376 = vmul.f32 %v361, 1.442695
  %v377 = vpow.pop %v376
  %v378 = vsel %vm329, %v363, 0.0
  %379 = vadd.xlane.f32.xlu0 %v378
  %v380 = vpop.xlane.xlu0 %379
  %v381 = vsel %vm329, %v365, 0.0
  %382 = vadd.xlane.f32.xlu0 %v381
  %v383 = vpop.xlane.xlu0 %382
  %v384 = vsel %vm329, %v367, 0.0
  %385 = vadd.xlane.f32.xlu0 %v384
  %v386 = vpop.xlane.xlu0 %385
  %v387 = vsel %vm329, %v369, 0.0
  %388 = vadd.xlane.f32.xlu0 %v387
  %v389 = vpop.xlane.xlu0 %388
  %v390 = vsel %vm329, %v371, 0.0
  %391 = vadd.xlane.f32.xlu0 %v390
  %v392 = vpop.xlane.xlu0 %391
  %v393 = vsel %vm329, %v373, 0.0
  %394 = vadd.xlane.f32.xlu0 %v393
  %v395 = vpop.xlane.xlu0 %394
  %v396 = vsel %vm329, %v375, 0.0
  %397 = vadd.xlane.f32.xlu0 %v396
  %v398 = vpop.xlane.xlu0 %397
  %v399 = vsel %vm329, %v377, 0.0
  %400 = vadd.xlane.f32.xlu0 %v399
  %v401 = vpop.xlane.xlu0 %400
  %v402 = vrcp.pop %v380
  %v403 = vrcp.pop %v383
  %v404 = vrcp.pop %v386
  %v405 = vrcp.pop %v389
  %v406 = vrcp.pop %v392
  %v407 = vrcp.pop %v395
  %v408 = vrcp.pop %v398
  %v409 = vrcp.pop %v401
  %v410 = vmul.f32 %v363, %v402
  %v411 = vmul.f32 %v365, %v403
  %v412 = vmul.f32 %v367, %v404
  %v413 = vmul.f32 %v369, %v405
  %v414 = vmul.f32 %v371, %v406
  %v415 = vmul.f32 %v373, %v407
  %v416 = vmul.f32 %v375, %v408
  %v417 = vmul.f32 %v377, %v409
  %v418 = vpack.c.bf16 %v224, %v224
  %v419 = vpack.c.bf16 %v411, %v410
  %v420 = vpack.c.bf16 %v413, %v412
  %v421 = vpack.c.bf16 %v415, %v414
  %v422 = vpack.c.bf16 %v417, %v416
  %v424 = vsel %vm329, %v418, 0
  %v427 = vsel %vm329, %v419, 0
  %v430 = vsel %vm329, %v420, 0
  %v433 = vsel %vm329, %v421, 0
  %v436 = vsel %vm329, %v422, 0
  %438 = vmatprep.subr.bf16.mxu0 0
  %439 = vmatpush1.bf16.xpose.msra.mxu0 0
  %440 = vmatprep.subr.bf16.mxu0 0
  %441 = vmatpush1.bf16.xpose.msra.mxu0 0
  %442 = vmatprep.subr.bf16.mxu0 0
  %443 = vmatpush1.bf16.xpose.msra.mxu0 0
  %444 = vmatprep.subr.bf16.mxu0 0
  %445 = vmatpush1.bf16.xpose.msra.mxu0 0
  %446 = vmatprep.subr.bf16.mxu0 0
  %447 = vmatpush1.bf16.xpose.msra.mxu0 %v436
  %448 = vmatprep.subr.bf16.mxu0 0
  %449 = vmatpush1.bf16.xpose.msra.mxu0 %v433
  %450 = vmatprep.subr.bf16.mxu0 0
  %451 = vmatpush1.bf16.xpose.msra.mxu0 %v430
  %452 = vmatprep.subr.bf16.mxu0 0
  %453 = vmatpush1.bf16.xpose.msra.mxu0 %v427
  %454 = vmatprep.subr.bf16.mxu0 0
  %455 = vmatpush2.bf16.xpose.msra.mxu0 0
  %456 = vmatprep.subr.bf16.mxu0 0
  %457 = vmatpush2.bf16.xpose.msra.mxu0 0
  %458 = vmatprep.subr.bf16.mxu0 0
  %459 = vmatpush2.bf16.xpose.msra.mxu0 0
  %460 = vmatprep.subr.bf16.mxu0 0
  %461 = vmatpush2.bf16.xpose.msra.mxu0 0
  %462 = vmatprep.subr.bf16.mxu0 0
  %463 = vmatpush2.bf16.xpose.msra.mxu0 0
  %464 = vmatprep.subr.bf16.mxu0 0
  %465 = vmatpush2.bf16.xpose.msra.mxu0 0
  %466 = vmatprep.subr.bf16.mxu0 0
  %467 = vmatpush2.bf16.xpose.msra.mxu0 0
  %468 = vmatprep.subr.bf16.mxu0 0
  %469 = vmatpush2.bf16.xpose.msra.mxu0 0
  %470 = vmatprep.mubr.bf16.mxu0 0
  %471 = vmatmul.mubr.bf16.gmra.mxu0 %v424
  %v472 = vpop.f32.mrf.mxu0
  %v473 = vadd.f32 0.0, %v472
  %v474 = vpop.f32.mrf.mxu0
  %v475 = vpop.f32.mrf.mxu0
  %v476 = vpop.f32.mrf.mxu0
  %477 = vdwg.mxu0
  %v478 = vld [vmem:[%s6] sm:$0xff]
  %v479 = vpack.c.bf16 %v478, %v478
  %v480 = vpack.c.bf16 %v473, %v473
  %v482 = vsel %vm247, %v479, 0
  %v485 = vsel %vm260, %v480, 0
  %487 = vmatprep.subr.bf16.mxu0 0
  %488 = vmatpush1.bf16.msra.mxu0 0
  %489 = vmatprep.subr.bf16.mxu0 0
  %490 = vmatpush1.bf16.msra.mxu0 0
  %491 = vmatprep.subr.bf16.mxu0 0
  %492 = vmatpush1.bf16.msra.mxu0 0
  %493 = vmatprep.subr.bf16.mxu0 0
  %494 = vmatpush1.bf16.msra.mxu0 0
  %495 = vmatprep.subr.bf16.mxu0 0
  %496 = vmatpush1.bf16.msra.mxu0 0
  %497 = vmatprep.subr.bf16.mxu0 0
  %498 = vmatpush1.bf16.msra.mxu0 0
  %499 = vmatprep.subr.bf16.mxu0 0
  %500 = vmatpush1.bf16.msra.mxu0 0
  %501 = vmatprep.subr.bf16.mxu0 0
  %502 = vmatpush1.bf16.msra.mxu0 %v485
  %503 = vmatprep.subr.bf16.mxu0 0
  %504 = vmatpush2.bf16.msra.mxu0 0
  %505 = vmatprep.subr.bf16.mxu0 0
  %506 = vmatpush2.bf16.msra.mxu0 0
  %507 = vmatprep.subr.bf16.mxu0 0
  %508 = vmatpush2.bf16.msra.mxu0 0
  %509 = vmatprep.subr.bf16.mxu0 0
  %510 = vmatpush2.bf16.msra.mxu0 0
  %511 = vmatprep.subr.bf16.mxu0 0
  %512 = vmatpush2.bf16.msra.mxu0 0
  %513 = vmatprep.subr.bf16.mxu0 0
  %514 = vmatpush2.bf16.msra.mxu0 0
  %515 = vmatprep.subr.bf16.mxu0 0
  %516 = vmatpush2.bf16.msra.mxu0 0
  %517 = vmatprep.subr.bf16.mxu0 0
  %518 = vmatpush2.bf16.msra.mxu0 0
  %519 = vmatprep.mubr.bf16.mxu0 0
  %520 = vmatmul.mubr.bf16.gmra.mxu0 %v482
  %v521 = vpop.f32.mrf.mxu0
  %v522 = vadd.f32 0.0, %v521
  %v523 = vpop.f32.mrf.mxu0
  %v524 = vpop.f32.mrf.mxu0
  %v525 = vpop.f32.mrf.mxu0
  %526 = vdwg.mxu0
  %v527 = vadd.f32 %v48, %v522
  %v528 = vld [vmem:[%s7] sm:$0xff]
  %v529 = vpack.c.bf16 %v528, %v528
  %v530 = vpack.c.bf16 %v527, %v527
  %v531 = vld [vmem:[%s8] sm:$0xff]
  %533 = vset.pattern.permute.xlu0 0
  %534 = vperm.xlu0 %533, %v531
  %v535 = vpop.permute.xlu0 %534
  %v538 = vsel %vm182, %v529, 0
  %v541 = vsel %vm90, %v530, 0
  %543 = vmatprep.subr.bf16.mxu0 0
  %544 = vmatpush1.bf16.msra.mxu0 0
  %545 = vmatprep.subr.bf16.mxu0 0
  %546 = vmatpush1.bf16.msra.mxu0 0
  %547 = vmatprep.subr.bf16.mxu0 0
  %548 = vmatpush1.bf16.msra.mxu0 0
  %549 = vmatprep.subr.bf16.mxu0 0
  %550 = vmatpush1.bf16.msra.mxu0 0
  %551 = vmatprep.subr.bf16.mxu0 0
  %552 = vmatpush1.bf16.msra.mxu0 0
  %553 = vmatprep.subr.bf16.mxu0 0
  %554 = vmatpush1.bf16.msra.mxu0 0
  %555 = vmatprep.subr.bf16.mxu0 0
  %556 = vmatpush1.bf16.msra.mxu0 0
  %557 = vmatprep.subr.bf16.mxu0 0
  %558 = vmatpush1.bf16.msra.mxu0 %v541
  %559 = vmatprep.subr.bf16.mxu0 0
  %560 = vmatpush2.bf16.msra.mxu0 0
  %561 = vmatprep.subr.bf16.mxu0 0
  %562 = vmatpush2.bf16.msra.mxu0 0
  %563 = vmatprep.subr.bf16.mxu0 0
  %564 = vmatpush2.bf16.msra.mxu0 0
  %565 = vmatprep.subr.bf16.mxu0 0
  %566 = vmatpush2.bf16.msra.mxu0 0
  %567 = vmatprep.subr.bf16.mxu0 0
  %568 = vmatpush2.bf16.msra.mxu0 0
  %569 = vmatprep.subr.bf16.mxu0 0
  %570 = vmatpush2.bf16.msra.mxu0 0
  %571 = vmatprep.subr.bf16.mxu0 0
  %572 = vmatpush2.bf16.msra.mxu0 0
  %573 = vmatprep.subr.bf16.mxu0 0
  %574 = vmatpush2.bf16.msra.mxu0 0
  %575 = vmatprep.mubr.bf16.mxu0 0
  %576 = vmatmul.mubr.bf16.gmra.mxu0 %v538
  %v577 = vpop.f32.mrf.mxu0
  %v578 = vadd.f32 %v535, %v577
  %v579 = vpop.f32.mrf.mxu0
  %v580 = vpop.f32.mrf.mxu0
  %v581 = vpop.f32.mrf.mxu0
  %582 = vdwg.mxu0
  %v583 = vmax.f32 %v578, 0.0
  %v584 = vld [vmem:[%s9] sm:$0xff]
  %v585 = vpack.c.bf16 %v584, %v584
  %v586 = vpack.c.bf16 %v583, %v583
  %v587 = vld [vmem:[%s10] sm:$0xff]
  %589 = vset.pattern.permute.xlu0 0
  %590 = vperm.xlu0 %589, %v587
  %v591 = vpop.permute.xlu0 %590
  %v594 = vsel %vm182, %v585, 0
  %v597 = vsel %vm90, %v586, 0
  %599 = vmatprep.subr.bf16.mxu0 0
  %600 = vmatpush1.bf16.msra.mxu0 0
  %601 = vmatprep.subr.bf16.mxu0 0
  %602 = vmatpush1.bf16.msra.mxu0 0
  %603 = vmatprep.subr.bf16.mxu0 0
  %604 = vmatpush1.bf16.msra.mxu0 0
  %605 = vmatprep.subr.bf16.mxu0 0
  %606 = vmatpush1.bf16.msra.mxu0 0
  %607 = vmatprep.subr.bf16.mxu0 0
  %608 = vmatpush1.bf16.msra.mxu0 0
  %609 = vmatprep.subr.bf16.mxu0 0
  %610 = vmatpush1.bf16.msra.mxu0 0
  %611 = vmatprep.subr.bf16.mxu0 0
  %612 = vmatpush1.bf16.msra.mxu0 0
  %613 = vmatprep.subr.bf16.mxu0 0
  %614 = vmatpush1.bf16.msra.mxu0 %v597
  %615 = vmatprep.subr.bf16.mxu0 0
  %616 = vmatpush2.bf16.msra.mxu0 0
  %617 = vmatprep.subr.bf16.mxu0 0
  %618 = vmatpush2.bf16.msra.mxu0 0
  %619 = vmatprep.subr.bf16.mxu0 0
  %620 = vmatpush2.bf16.msra.mxu0 0
  %621 = vmatprep.subr.bf16.mxu0 0
  %622 = vmatpush2.bf16.msra.mxu0 0
  %623 = vmatprep.subr.bf16.mxu0 0
  %624 = vmatpush2.bf16.msra.mxu0 0
  %625 = vmatprep.subr.bf16.mxu0 0
  %626 = vmatpush2.bf16.msra.mxu0 0
  %627 = vmatprep.subr.bf16.mxu0 0
  %628 = vmatpush2.bf16.msra.mxu0 0
  %629 = vmatprep.subr.bf16.mxu0 0
  %630 = vmatpush2.bf16.msra.mxu0 0
  %631 = vmatprep.mubr.bf16.mxu0 0
  %632 = vmatmul.mubr.bf16.gmra.mxu0 %v594
  %v633 = vpop.f32.mrf.mxu0
  %v634 = vadd.f32 %v591, %v633
  %v635 = vpop.f32.mrf.mxu0
  %v636 = vpop.f32.mrf.mxu0
  %v637 = vpop.f32.mrf.mxu0
  %638 = vdwg.mxu0
  %v639 = vadd.f32 %v527, %v634
  %640 = vrot.lane.b32.xlu0 %v639, 64
  %v641 = vpop.permute.xlu0 %640
  %v642 = vsel %vm49, %v641, %v639
  %643 = vrot.lane.b32.xlu0 %v642, 64
  %v644 = vpop.permute.xlu0 %643
  %v645 = vsel %vm49, %v644, %v639
  %v646 = vmul.f32 %v645, %v62
  %v647 = vmul.f32 %v645, %v71
  %649 = vrot.lane.b32.xlu0 %v646, 65
  %v650 = vpop.permute.xlu0 %649
  %653 = vrot.lane.b32.xlu0 %v647, 66
  %v654 = vpop.permute.xlu0 %653
  %v656 = vpack.c.bf16 %v650, %v639
  %v657 = vpack.c.bf16 %v654, %v654
  %s658 = scalar_lea.vmem %s3, 4
  %v659 = vld [vmem:[%s658] sm:$0xf]
  %v660 = vpack.c.bf16 %v659, %v659
  %v662 = vsel %vm86, %v660, 0
  %v665 = vsel %vm90, %v657, 0
  %667 = vmatprep.subr.bf16.mxu0 0
  %668 = vmatpush1.bf16.msra.mxu0 0
  %669 = vmatprep.subr.bf16.mxu0 0
  %670 = vmatpush1.bf16.msra.mxu0 0
  %671 = vmatprep.subr.bf16.mxu0 0
  %672 = vmatpush1.bf16.msra.mxu0 0
  %673 = vmatprep.subr.bf16.mxu0 0
  %674 = vmatpush1.bf16.msra.mxu0 0
  %675 = vmatprep.subr.bf16.mxu0 0
  %676 = vmatpush1.bf16.msra.mxu0 0
  %677 = vmatprep.subr.bf16.mxu0 0
  %678 = vmatpush1.bf16.msra.mxu0 0
  %679 = vmatprep.subr.bf16.mxu0 0
  %680 = vmatpush1.bf16.msra.mxu0 %v665
  %681 = vmatprep.subr.bf16.mxu0 0
  %682 = vmatpush1.bf16.msra.mxu0 %v656
  %683 = vmatprep.subr.bf16.mxu0 0
  %684 = vmatpush2.bf16.msra.mxu0 0
  %685 = vmatprep.subr.bf16.mxu0 0
  %686 = vmatpush2.bf16.msra.mxu0 0
  %687 = vmatprep.subr.bf16.mxu0 0
  %688 = vmatpush2.bf16.msra.mxu0 0
  %689 = vmatprep.subr.bf16.mxu0 0
  %690 = vmatpush2.bf16.msra.mxu0 0
  %691 = vmatprep.subr.bf16.mxu0 0
  %692 = vmatpush2.bf16.msra.mxu0 0
  %693 = vmatprep.subr.bf16.mxu0 0
  %694 = vmatpush2.bf16.msra.mxu0 0
  %695 = vmatprep.subr.bf16.mxu0 0
  %696 = vmatpush2.bf16.msra.mxu0 0
  %697 = vmatprep.subr.bf16.mxu0 0
  %698 = vmatpush2.bf16.msra.mxu0 0
  %699 = vmatprep.mubr.bf16.mxu0 0
  %700 = vmatmul.mubr.bf16.gmra.mxu0 %v662
  %v701 = vpop.f32.mrf.mxu0
  %v702 = vadd.f32 0.0, %v701
  %v703 = vpop.f32.mrf.mxu0
  %v704 = vpop.f32.mrf.mxu0
  %v705 = vpop.f32.mrf.mxu0
  %706 = vdwg.mxu0
  %s707 = scalar_lea.vmem %s4, 4
  %v708 = vld [vmem:[%s707] sm:$0xf]
  %v709 = vpack.c.bf16 %v708, %v708
  %v711 = vsel %vm86, %v709, 0
  %713 = vmatprep.subr.bf16.mxu0 0
  %714 = vmatpush1.bf16.msra.mxu0 0
  %715 = vmatprep.subr.bf16.mxu0 0
  %716 = vmatpush1.bf16.msra.mxu0 0
  %717 = vmatprep.subr.bf16.mxu0 0
  %718 = vmatpush1.bf16.msra.mxu0 0
  %719 = vmatprep.subr.bf16.mxu0 0
  %720 = vmatpush1.bf16.msra.mxu0 0
  %721 = vmatprep.subr.bf16.mxu0 0
  %722 = vmatpush1.bf16.msra.mxu0 0
  %723 = vmatprep.subr.bf16.mxu0 0
  %724 = vmatpush1.bf16.msra.mxu0 0
  %725 = vmatprep.subr.bf16.mxu0 0
  %726 = vmatpush1.bf16.msra.mxu0 %v665
  %727 = vmatprep.subr.bf16.mxu0 0
  %728 = vmatpush1.bf16.msra.mxu0 %v656
  %729 = vmatprep.subr.bf16.mxu0 0
  %730 = vmatpush2.bf16.msra.mxu0 0
  %731 = vmatprep.subr.bf16.mxu0 0
  %732 = vmatpush2.bf16.msra.mxu0 0
  %733 = vmatprep.subr.bf16.mxu0 0
  %734 = vmatpush2.bf16.msra.mxu0 0
  %735 = vmatprep.subr.bf16.mxu0 0
  %736 = vmatpush2.bf16.msra.mxu0 0
  %737 = vmatprep.subr.bf16.mxu0 0
  %738 = vmatpush2.bf16.msra.mxu0 0
  %739 = vmatprep.subr.bf16.mxu0 0
  %740 = vmatpush2.bf16.msra.mxu0 0
  %741 = vmatprep.subr.bf16.mxu0 0
  %742 = vmatpush2.bf16.msra.mxu0 0
  %743 = vmatprep.subr.bf16.mxu0 0
  %744 = vmatpush2.bf16.msra.mxu0 0
  %745 = vmatprep.mubr.bf16.mxu0 0
  %746 = vmatmul.mubr.bf16.gmra.mxu0 %v711
  %v747 = vpop.f32.mrf.mxu0
  %v748 = vadd.f32 0.0, %v747
  %v749 = vpop.f32.mrf.mxu0
  %v750 = vpop.f32.mrf.mxu0
  %v751 = vpop.f32.mrf.mxu0
  %752 = vdwg.mxu0
  %s753 = scalar_lea.vmem %s5, 4
  %v754 = vld [vmem:[%s753] sm:$0xf]
  %v755 = vpack.c.bf16 %v754, %v754
  %v756 = vpack.c.bf16 %v639, %v639
  %v758 = vsel %vm182, %v755, 0
  %v761 = vsel %vm90, %v756, 0
  %763 = vmatprep.subr.bf16.mxu0 0
  %764 = vmatpush1.bf16.msra.mxu0 0
  %765 = vmatprep.subr.bf16.mxu0 0
  %766 = vmatpush1.bf16.msra.mxu0 0
  %767 = vmatprep.subr.bf16.mxu0 0
  %768 = vmatpush1.bf16.msra.mxu0 0
  %769 = vmatprep.subr.bf16.mxu0 0
  %770 = vmatpush1.bf16.msra.mxu0 0
  %771 = vmatprep.subr.bf16.mxu0 0
  %772 = vmatpush1.bf16.msra.mxu0 0
  %773 = vmatprep.subr.bf16.mxu0 0
  %774 = vmatpush1.bf16.msra.mxu0 0
  %775 = vmatprep.subr.bf16.mxu0 0
  %776 = vmatpush1.bf16.msra.mxu0 0
  %777 = vmatprep.subr.bf16.mxu0 0
  %778 = vmatpush1.bf16.msra.mxu0 %v761
  %779 = vmatprep.subr.bf16.mxu0 0
  %780 = vmatpush2.bf16.msra.mxu0 0
  %781 = vmatprep.subr.bf16.mxu0 0
  %782 = vmatpush2.bf16.msra.mxu0 0
  %783 = vmatprep.subr.bf16.mxu0 0
  %784 = vmatpush2.bf16.msra.mxu0 0
  %785 = vmatprep.subr.bf16.mxu0 0
  %786 = vmatpush2.bf16.msra.mxu0 0
  %787 = vmatprep.subr.bf16.mxu0 0
  %788 = vmatpush2.bf16.msra.mxu0 0
  %789 = vmatprep.subr.bf16.mxu0 0
  %790 = vmatpush2.bf16.msra.mxu0 0
  %791 = vmatprep.subr.bf16.mxu0 0
  %792 = vmatpush2.bf16.msra.mxu0 0
  %793 = vmatprep.subr.bf16.mxu0 0
  %794 = vmatpush2.bf16.msra.mxu0 0
  %795 = vmatprep.mubr.bf16.mxu0 0
  %796 = vmatmul.mubr.bf16.gmra.mxu0 %v758
  %v797 = vpop.f32.mrf.mxu0
  %v798 = vadd.f32 0.0, %v797
  %v799 = vpop.f32.mrf.mxu0
  %v800 = vpop.f32.mrf.mxu0
  %v801 = vpop.f32.mrf.mxu0
  %802 = vdwg.mxu0
  %v803 = vpack.c.bf16 %v702, %v702
  %v804 = vpack.c.bf16 %v748, %v748
  %805 = vxpose.xlu0.c.b16.start [1/8] %v803, 128
  %806 = vxpose.xlu0.c.b16.cont [2/8] 0, 128
  %807 = vxpose.xlu0.c.b16.cont [3/8] 0, 128
  %808 = vxpose.xlu0.c.b16.cont [4/8] 0, 128
  %809 = vxpose.xlu0.c.b16.cont [5/8] 0, 128
  %810 = vxpose.xlu0.c.b16.cont [6/8] 0, 128
  %811 = vxpose.xlu0.c.b16.cont [7/8] 0, 128
  %812 = vxpose.xlu0.c.b16.end [8/8] 0, 128
  %v813 = vpop.trf.xlu0
  %v814 = vpop.trf.xlu0
  %v815 = vpop.trf.xlu0
  %v816 = vpop.trf.xlu0
  %v817 = vpop.trf.xlu0
  %v818 = vpop.trf.xlu0
  %v819 = vpop.trf.xlu0
  %v820 = vpop.trf.xlu0
  %v822 = vsel %vm247, %v813, 0
  %v825 = vsel %vm247, %v814, 0
  %v828 = vsel %vm247, %v815, 0
  %v831 = vsel %vm247, %v816, 0
  %v834 = vsel %vm260, %v804, 0
  %836 = vmatprep.subr.bf16.mxu0 0
  %837 = vmatpush1.bf16.msra.mxu0 0
  %838 = vmatprep.subr.bf16.mxu0 0
  %839 = vmatpush1.bf16.msra.mxu0 0
  %840 = vmatprep.subr.bf16.mxu0 0
  %841 = vmatpush1.bf16.msra.mxu0 0
  %842 = vmatprep.subr.bf16.mxu0 0
  %843 = vmatpush1.bf16.msra.mxu0 0
  %844 = vmatprep.subr.bf16.mxu0 0
  %845 = vmatpush1.bf16.msra.mxu0 0
  %846 = vmatprep.subr.bf16.mxu0 0
  %847 = vmatpush1.bf16.msra.mxu0 0
  %848 = vmatprep.subr.bf16.mxu0 0
  %849 = vmatpush1.bf16.msra.mxu0 0
  %850 = vmatprep.subr.bf16.mxu0 0
  %851 = vmatpush1.bf16.msra.mxu0 %v834
  %852 = vmatprep.subr.bf16.mxu0 0
  %853 = vmatpush2.bf16.msra.mxu0 0
  %854 = vmatprep.subr.bf16.mxu0 0
  %855 = vmatpush2.bf16.msra.mxu0 0
  %856 = vmatprep.subr.bf16.mxu0 0
  %857 = vmatpush2.bf16.msra.mxu0 0
  %858 = vmatprep.subr.bf16.mxu0 0
  %859 = vmatpush2.bf16.msra.mxu0 0
  %860 = vmatprep.subr.bf16.mxu0 0
  %861 = vmatpush2.bf16.msra.mxu0 0
  %862 = vmatprep.subr.bf16.mxu0 0
  %863 = vmatpush2.bf16.msra.mxu0 0
  %864 = vmatprep.subr.bf16.mxu0 0
  %865 = vmatpush2.bf16.msra.mxu0 0
  %866 = vmatprep.subr.bf16.mxu0 0
  %867 = vmatpush2.bf16.msra.mxu0 0
  %868 = vmatprep.mubr.bf16.mxu0 0
  %869 = vmatmul.mubr.bf16.gmra.mxu0 %v822
  %v870 = vpop.f32.mrf.mxu0
  %v871 = vadd.f32 %v40, %v870
  %v872 = vpop.f32.mrf.mxu0
  %v873 = vpop.f32.mrf.mxu0
  %v874 = vadd.f32 %v41, %v873
  %v875 = vpop.f32.mrf.mxu0
  %876 = vmatprep.mubr.bf16.mxu0 0
  %877 = vmatmul.mubr.bf16.gmra.mxu0 %v825
  %v878 = vpop.f32.mrf.mxu0
  %v879 = vadd.f32 %v42, %v878
  %v880 = vpop.f32.mrf.mxu0
  %v881 = vpop.f32.mrf.mxu0
  %v882 = vadd.f32 %v43, %v881
  %v883 = vpop.f32.mrf.mxu0
  %884 = vmatprep.mubr.bf16.mxu0 0
  %885 = vmatmul.mubr.bf16.gmra.mxu0 %v828
  %v886 = vpop.f32.mrf.mxu0
  %v887 = vadd.f32 %v44, %v886
  %v888 = vpop.f32.mrf.mxu0
  %v889 = vpop.f32.mrf.mxu0
  %v890 = vadd.f32 %v45, %v889
  %v891 = vpop.f32.mrf.mxu0
  %892 = vmatprep.mubr.bf16.mxu0 0
  %893 = vmatmul.mubr.bf16.gmra.mxu0 %v831
  %v894 = vpop.f32.mrf.mxu0
  %v895 = vadd.f32 %v46, %v894
  %v896 = vpop.f32.mrf.mxu0
  %v897 = vpop.f32.mrf.mxu0
  %v898 = vadd.f32 %v47, %v897
  %v899 = vpop.f32.mrf.mxu0
  %900 = vdwg.mxu0
  %v901 = vsel %vm329, %v871, -inf
  %902 = vmax.xlane.f32.xlu0 %v901
  %v903 = vpop.xlane.xlu0 %902
  %v904 = vsel %vm329, %v874, -inf
  %905 = vmax.xlane.f32.xlu0 %v904
  %v906 = vpop.xlane.xlu0 %905
  %v907 = vsel %vm329, %v879, -inf
  %908 = vmax.xlane.f32.xlu0 %v907
  %v909 = vpop.xlane.xlu0 %908
  %v910 = vsel %vm329, %v882, -inf
  %911 = vmax.xlane.f32.xlu0 %v910
  %v912 = vpop.xlane.xlu0 %911
  %v913 = vsel %vm329, %v887, -inf
  %914 = vmax.xlane.f32.xlu0 %v913
  %v915 = vpop.xlane.xlu0 %914
  %v916 = vsel %vm329, %v890, -inf
  %917 = vmax.xlane.f32.xlu0 %v916
  %v918 = vpop.xlane.xlu0 %917
  %v919 = vsel %vm329, %v895, -inf
  %920 = vmax.xlane.f32.xlu0 %v919
  %v921 = vpop.xlane.xlu0 %920
  %v922 = vsel %vm329, %v898, -inf
  %923 = vmax.xlane.f32.xlu0 %v922
  %v924 = vpop.xlane.xlu0 %923
  %v925 = vsub.f32 %v871, %v903
  %v926 = vsub.f32 %v874, %v906
  %v927 = vsub.f32 %v879, %v909
  %v928 = vsub.f32 %v882, %v912
  %v929 = vsub.f32 %v887, %v915
  %v930 = vsub.f32 %v890, %v918
  %v931 = vsub.f32 %v895, %v921
  %v932 = vsub.f32 %v898, %v924
  %v933 = vmul.f32 %v925, 1.442695
  %v934 = vpow.pop %v933
  %v935 = vmul.f32 %v926, 1.442695
  %v936 = vpow.pop %v935
  %v937 = vmul.f32 %v927, 1.442695
  %v938 = vpow.pop %v937
  %v939 = vmul.f32 %v928, 1.442695
  %v940 = vpow.pop %v939
  %v941 = vmul.f32 %v929, 1.442695
  %v942 = vpow.pop %v941
  %v943 = vmul.f32 %v930, 1.442695
  %v944 = vpow.pop %v943
  %v945 = vmul.f32 %v931, 1.442695
  %v946 = vpow.pop %v945
  %v947 = vmul.f32 %v932, 1.442695
  %v948 = vpow.pop %v947
  %v949 = vsel %vm329, %v934, 0.0
  %950 = vadd.xlane.f32.xlu0 %v949
  %v951 = vpop.xlane.xlu0 %950
  %v952 = vsel %vm329, %v936, 0.0
  %953 = vadd.xlane.f32.xlu0 %v952
  %v954 = vpop.xlane.xlu0 %953
  %v955 = vsel %vm329, %v938, 0.0
  %956 = vadd.xlane.f32.xlu0 %v955
  %v957 = vpop.xlane.xlu0 %956
  %v958 = vsel %vm329, %v940, 0.0
  %959 = vadd.xlane.f32.xlu0 %v958
  %v960 = vpop.xlane.xlu0 %959
  %v961 = vsel %vm329, %v942, 0.0
  %962 = vadd.xlane.f32.xlu0 %v961
  %v963 = vpop.xlane.xlu0 %962
  %v964 = vsel %vm329, %v944, 0.0
  %965 = vadd.xlane.f32.xlu0 %v964
  %v966 = vpop.xlane.xlu0 %965
  %v967 = vsel %vm329, %v946, 0.0
  %968 = vadd.xlane.f32.xlu0 %v967
  %v969 = vpop.xlane.xlu0 %968
  %v970 = vsel %vm329, %v948, 0.0
  %971 = vadd.xlane.f32.xlu0 %v970
  %v972 = vpop.xlane.xlu0 %971
  %v973 = vrcp.pop %v951
  %v974 = vrcp.pop %v954
  %v975 = vrcp.pop %v957
  %v976 = vrcp.pop %v960
  %v977 = vrcp.pop %v963
  %v978 = vrcp.pop %v966
  %v979 = vrcp.pop %v969
  %v980 = vrcp.pop %v972
  %v981 = vmul.f32 %v934, %v973
  %v982 = vmul.f32 %v936, %v974
  %v983 = vmul.f32 %v938, %v975
  %v984 = vmul.f32 %v940, %v976
  %v985 = vmul.f32 %v942, %v977
  %v986 = vmul.f32 %v944, %v978
  %v987 = vmul.f32 %v946, %v979
  %v988 = vmul.f32 %v948, %v980
  %v989 = vpack.c.bf16 %v798, %v798
  %v990 = vpack.c.bf16 %v982, %v981
  %v991 = vpack.c.bf16 %v984, %v983
  %v992 = vpack.c.bf16 %v986, %v985
  %v993 = vpack.c.bf16 %v988, %v987
  %v995 = vsel %vm329, %v989, 0
  %v998 = vsel %vm329, %v990, 0
  %v1001 = vsel %vm329, %v991, 0
  %v1004 = vsel %vm329, %v992, 0
  %v1007 = vsel %vm329, %v993, 0
  %1009 = vmatprep.subr.bf16.mxu0 0
  %1010 = vmatpush1.bf16.xpose.msra.mxu0 0
  %1011 = vmatprep.subr.bf16.mxu0 0
  %1012 = vmatpush1.bf16.xpose.msra.mxu0 0
  %1013 = vmatprep.subr.bf16.mxu0 0
  %1014 = vmatpush1.bf16.xpose.msra.mxu0 0
  %1015 = vmatprep.subr.bf16.mxu0 0
  %1016 = vmatpush1.bf16.xpose.msra.mxu0 0
  %1017 = vmatprep.subr.bf16.mxu0 0
  %1018 = vmatpush1.bf16.xpose.msra.mxu0 %v1007
  %1019 = vmatprep.subr.bf16.mxu0 0
  %1020 = vmatpush1.bf16.xpose.msra.mxu0 %v1004
  %1021 = vmatprep.subr.bf16.mxu0 0
  %1022 = vmatpush1.bf16.xpose.msra.mxu0 %v1001
  %1023 = vmatprep.subr.bf16.mxu0 0
  %1024 = vmatpush1.bf16.xpose.msra.mxu0 %v998
  %1025 = vmatprep.subr.bf16.mxu0 0
  %1026 = vmatpush2.bf16.xpose.msra.mxu0 0
  %1027 = vmatprep.subr.bf16.mxu0 0
  %1028 = vmatpush2.bf16.xpose.msra.mxu0 0
  %1029 = vmatprep.subr.bf16.mxu0 0
  %1030 = vmatpush2.bf16.xpose.msra.mxu0 0
  %1031 = vmatprep.subr.bf16.mxu0 0
  %1032 = vmatpush2.bf16.xpose.msra.mxu0 0
  %1033 = vmatprep.subr.bf16.mxu0 0
  %1034 = vmatpush2.bf16.xpose.msra.mxu0 0
  %1035 = vmatprep.subr.bf16.mxu0 0
  %1036 = vmatpush2.bf16.xpose.msra.mxu0 0
  %1037 = vmatprep.subr.bf16.mxu0 0
  %1038 = vmatpush2.bf16.xpose.msra.mxu0 0
  %1039 = vmatprep.subr.bf16.mxu0 0
  %1040 = vmatpush2.bf16.xpose.msra.mxu0 0
  %1041 = vmatprep.mubr.bf16.mxu0 0
  %1042 = vmatmul.mubr.bf16.gmra.mxu0 %v995
  %v1043 = vpop.f32.mrf.mxu0
  %v1044 = vadd.f32 0.0, %v1043
  %v1045 = vpop.f32.mrf.mxu0
  %v1046 = vpop.f32.mrf.mxu0
  %v1047 = vpop.f32.mrf.mxu0
  %1048 = vdwg.mxu0
  %s1049 = scalar_lea.vmem %s6, 8
  %v1050 = vld [vmem:[%s1049] sm:$0xff]
  %v1051 = vpack.c.bf16 %v1050, %v1050
  %v1052 = vpack.c.bf16 %v1044, %v1044
  %v1054 = vsel %vm247, %v1051, 0
  %v1057 = vsel %vm260, %v1052, 0
  %1059 = vmatprep.subr.bf16.mxu0 0
  %1060 = vmatpush1.bf16.msra.mxu0 0
  %1061 = vmatprep.subr.bf16.mxu0 0
  %1062 = vmatpush1.bf16.msra.mxu0 0
  %1063 = vmatprep.subr.bf16.mxu0 0
  %1064 = vmatpush1.bf16.msra.mxu0 0
  %1065 = vmatprep.subr.bf16.mxu0 0
  %1066 = vmatpush1.bf16.msra.mxu0 0
  %1067 = vmatprep.subr.bf16.mxu0 0
  %1068 = vmatpush1.bf16.msra.mxu0 0
  %1069 = vmatprep.subr.bf16.mxu0 0
  %1070 = vmatpush1.bf16.msra.mxu0 0
  %1071 = vmatprep.subr.bf16.mxu0 0
  %1072 = vmatpush1.bf16.msra.mxu0 0
  %1073 = vmatprep.subr.bf16.mxu0 0
  %1074 = vmatpush1.bf16.msra.mxu0 %v1057
  %1075 = vmatprep.subr.bf16.mxu0 0
  %1076 = vmatpush2.bf16.msra.mxu0 0
  %1077 = vmatprep.subr.bf16.mxu0 0
  %1078 = vmatpush2.bf16.msra.mxu0 0
  %1079 = vmatprep.subr.bf16.mxu0 0
  %1080 = vmatpush2.bf16.msra.mxu0 0
  %1081 = vmatprep.subr.bf16.mxu0 0
  %1082 = vmatpush2.bf16.msra.mxu0 0
  %1083 = vmatprep.subr.bf16.mxu0 0
  %1084 = vmatpush2.bf16.msra.mxu0 0
  %1085 = vmatprep.subr.bf16.mxu0 0
  %1086 = vmatpush2.bf16.msra.mxu0 0
  %1087 = vmatprep.subr.bf16.mxu0 0
  %1088 = vmatpush2.bf16.msra.mxu0 0
  %1089 = vmatprep.subr.bf16.mxu0 0
  %1090 = vmatpush2.bf16.msra.mxu0 0
  %1091 = vmatprep.mubr.bf16.mxu0 0
  %1092 = vmatmul.mubr.bf16.gmra.mxu0 %v1054
  %v1093 = vpop.f32.mrf.mxu0
  %v1094 = vadd.f32 0.0, %v1093
  %v1095 = vpop.f32.mrf.mxu0
  %v1096 = vpop.f32.mrf.mxu0
  %v1097 = vpop.f32.mrf.mxu0
  %1098 = vdwg.mxu0
  %v1099 = vadd.f32 %v639, %v1094
  %s1100 = scalar_lea.vmem %s7, 8
  %v1101 = vld [vmem:[%s1100] sm:$0xff]
  %v1102 = vpack.c.bf16 %v1101, %v1101
  %v1103 = vpack.c.bf16 %v1099, %v1099
  %s1104 = scalar_lea.vmem %s8, 8
  %v1105 = vld [vmem:[%s1104] sm:$0xff]
  %1107 = vset.pattern.permute.xlu0 0
  %1108 = vperm.xlu0 %1107, %v1105
  %v1109 = vpop.permute.xlu0 %1108
  %v1112 = vsel %vm182, %v1102, 0
  %v1115 = vsel %vm90, %v1103, 0
  %1117 = vmatprep.subr.bf16.mxu0 0
  %1118 = vmatpush1.bf16.msra.mxu0 0
  %1119 = vmatprep.subr.bf16.mxu0 0
  %1120 = vmatpush1.bf16.msra.mxu0 0
  %1121 = vmatprep.subr.bf16.mxu0 0
  %1122 = vmatpush1.bf16.msra.mxu0 0
  %1123 = vmatprep.subr.bf16.mxu0 0
  %1124 = vmatpush1.bf16.msra.mxu0 0
  %1125 = vmatprep.subr.bf16.mxu0 0
  %1126 = vmatpush1.bf16.msra.mxu0 0
  %1127 = vmatprep.subr.bf16.mxu0 0
  %1128 = vmatpush1.bf16.msra.mxu0 0
  %1129 = vmatprep.subr.bf16.mxu0 0
  %1130 = vmatpush1.bf16.msra.mxu0 0
  %1131 = vmatprep.subr.bf16.mxu0 0
  %1132 = vmatpush1.bf16.msra.mxu0 %v1115
  %1133 = vmatprep.subr.bf16.mxu0 0
  %1134 = vmatpush2.bf16.msra.mxu0 0
  %1135 = vmatprep.subr.bf16.mxu0 0
  %1136 = vmatpush2.bf16.msra.mxu0 0
  %1137 = vmatprep.subr.bf16.mxu0 0
  %1138 = vmatpush2.bf16.msra.mxu0 0
  %1139 = vmatprep.subr.bf16.mxu0 0
  %1140 = vmatpush2.bf16.msra.mxu0 0
  %1141 = vmatprep.subr.bf16.mxu0 0
  %1142 = vmatpush2.bf16.msra.mxu0 0
  %1143 = vmatprep.subr.bf16.mxu0 0
  %1144 = vmatpush2.bf16.msra.mxu0 0
  %1145 = vmatprep.subr.bf16.mxu0 0
  %1146 = vmatpush2.bf16.msra.mxu0 0
  %1147 = vmatprep.subr.bf16.mxu0 0
  %1148 = vmatpush2.bf16.msra.mxu0 0
  %1149 = vmatprep.mubr.bf16.mxu0 0
  %1150 = vmatmul.mubr.bf16.gmra.mxu0 %v1112
  %v1151 = vpop.f32.mrf.mxu0
  %v1152 = vadd.f32 %v1109, %v1151
  %v1153 = vpop.f32.mrf.mxu0
  %v1154 = vpop.f32.mrf.mxu0
  %v1155 = vpop.f32.mrf.mxu0
  %1156 = vdwg.mxu0
  %v1157 = vmax.f32 %v1152, 0.0
  %s1158 = scalar_lea.vmem %s9, 8
  %v1159 = vld [vmem:[%s1158] sm:$0xff]
  %v1160 = vpack.c.bf16 %v1159, %v1159
  %v1161 = vpack.c.bf16 %v1157, %v1157
  %s1162 = scalar_lea.vmem %s10, 8
  %v1163 = vld [vmem:[%s1162] sm:$0xff]
  %1165 = vset.pattern.permute.xlu0 0
  %1166 = vperm.xlu0 %1165, %v1163
  %v1167 = vpop.permute.xlu0 %1166
  %v1170 = vsel %vm182, %v1160, 0
  %v1173 = vsel %vm90, %v1161, 0
  %1175 = vmatprep.subr.bf16.mxu0 0
  %1176 = vmatpush1.bf16.msra.mxu0 0
  %1177 = vmatprep.subr.bf16.mxu0 0
  %1178 = vmatpush1.bf16.msra.mxu0 0
  %1179 = vmatprep.subr.bf16.mxu0 0
  %1180 = vmatpush1.bf16.msra.mxu0 0
  %1181 = vmatprep.subr.bf16.mxu0 0
  %1182 = vmatpush1.bf16.msra.mxu0 0
  %1183 = vmatprep.subr.bf16.mxu0 0
  %1184 = vmatpush1.bf16.msra.mxu0 0
  %1185 = vmatprep.subr.bf16.mxu0 0
  %1186 = vmatpush1.bf16.msra.mxu0 0
  %1187 = vmatprep.subr.bf16.mxu0 0
  %1188 = vmatpush1.bf16.msra.mxu0 0
  %1189 = vmatprep.subr.bf16.mxu0 0
  %1190 = vmatpush1.bf16.msra.mxu0 %v1173
  %1191 = vmatprep.subr.bf16.mxu0 0
  %1192 = vmatpush2.bf16.msra.mxu0 0
  %1193 = vmatprep.subr.bf16.mxu0 0
  %1194 = vmatpush2.bf16.msra.mxu0 0
  %1195 = vmatprep.subr.bf16.mxu0 0
  %1196 = vmatpush2.bf16.msra.mxu0 0
  %1197 = vmatprep.subr.bf16.mxu0 0
  %1198 = vmatpush2.bf16.msra.mxu0 0
  %1199 = vmatprep.subr.bf16.mxu0 0
  %1200 = vmatpush2.bf16.msra.mxu0 0
  %1201 = vmatprep.subr.bf16.mxu0 0
  %1202 = vmatpush2.bf16.msra.mxu0 0
  %1203 = vmatprep.subr.bf16.mxu0 0
  %1204 = vmatpush2.bf16.msra.mxu0 0
  %1205 = vmatprep.subr.bf16.mxu0 0
  %1206 = vmatpush2.bf16.msra.mxu0 0
  %1207 = vmatprep.mubr.bf16.mxu0 0
  %1208 = vmatmul.mubr.bf16.gmra.mxu0 %v1170
  %v1209 = vpop.f32.mrf.mxu0
  %v1210 = vadd.f32 %v1167, %v1209
  %v1211 = vpop.f32.mrf.mxu0
  %v1212 = vpop.f32.mrf.mxu0
  %v1213 = vpop.f32.mrf.mxu0
  %1214 = vdwg.mxu0
  %v1215 = vadd.f32 %v1099, %v1210
  %1216 = vst.msk [vmem:[%s11] sm:$0xff] %vm329, %v1215
  // Predicated region
  $region46: #{transformer_forward.5} parent=0 // pred_check
    _
  $region47: #{transformer_forward.5} parent=0 // pred_check_branch
    %1218 = sbr.rel (0) target = $region49
  $region48: #{transformer_forward.5} parent=0 // pred_region
    _
  $region49: #{transformer_forward.5} parent=0 // pred_fallthru
    _
  // Predicated region
  $region50: #{transformer_forward.5} parent=0 // pred_check
    _
  $region51: #{transformer_forward.5} parent=0 // pred_check_branch
    %1220 = sbr.rel (0) target = $region53
  $region52: #{transformer_forward.5} parent=0 // pred_region
    _
  $region53: #{transformer_forward.5} parent=0 // pred_fallthru
    _

// kernel: transformer_forward.7
$region0: #{transformer_forward.7}
  #allocation0 [shape = 'u32[]', space=smem, size = 0x4, offset = 0x4, fixed_abs, tag = 'smem constant byte address 0x4 - core index']
  #allocation1 [shape = 'u32[144,128]{1,0:T(1,128)}', space=vmem, size = 0x12000, scoped, tag = 'internal scratch']
  %s0 = inlined_call_operand.vmem [shape: f32[16,8], index: 0, kind: input, shape index: {}]
  %s1 = inlined_call_operand.vmem [shape: f32[2,8], index: 1, kind: input, shape index: {}]
  %s2 = inlined_call_operand.vmem [shape: f32[1,2], index: 2, kind: input, shape index: {}]
  %s3 = inlined_call_operand.vmem [shape: f32[16,2], index: 3, kind: output, shape index: {}]
  %s4 = sld [smem:[#allocation0]]
  $region22: #{transformer_forward.7} parent=0
    _
  %s6 = ssub.s32 1, %s4
  %s7 = scalar_select 0, %s6, %s4
  // Predicated region
  $region2: #{transformer_forward.7} parent=0 // pred_check
    _
  $region3: #{transformer_forward.7} parent=0 // pred_check_branch
    %9 = sbr.rel (0) target = $region5
  $region4: #{transformer_forward.7} parent=0 // pred_region
    _
  $region5: #{transformer_forward.7} parent=0 // pred_fallthru
    _
  // Predicated region
  $region6: #{transformer_forward.7} parent=0 // pred_check
    _
  $region7: #{transformer_forward.7} parent=0 // pred_check_branch
    %11 = sbr.rel (0) target = $region9
  $region8: #{transformer_forward.7} parent=0 // pred_region
    _
  $region9: #{transformer_forward.7} parent=0 // pred_fallthru
    _
  // Predicated region
  $region10: #{transformer_forward.7} parent=0 // pred_check
    _
  $region11: #{transformer_forward.7} parent=0 // pred_check_branch
    %13 = sbr.rel (0) target = $region13
  $region12: #{transformer_forward.7} parent=0 // pred_region
    _
  $region13: #{transformer_forward.7} parent=0 // pred_fallthru
    _
  %v15 = vld [vmem:[%s0] sm:$0xff]
  %v16 = vld [vmem:[%s0 + $0x8] sm:$0xff]
  %v17 = vpack.c.bf16 %v16, %v15
  %v18 = vld [vmem:[%s1] sm:$0x3]
  %v19 = vpack.c.bf16 %v18, %v18
  %v20 = vld [vmem:[%s2] sm:$0x1]
  %v22 = vlaneseq
  %v23 = vshrl.u32 %v22, 7
  %v24 = vsub.s32 0, %v23
  %v25 = vrot.slane %v20, %v24
  %vm27 = vcmask 64512
  %v29 = vsel %vm27, %v17, 0
  %v32 = vsel %vm27, %v19, 0
  %34 = vmatprep.subr.bf16.mxu0 0
  %35 = vmatpush1.bf16.xpose.msra.mxu0 0
  %36 = vmatprep.subr.bf16.mxu0 0
  %37 = vmatpush1.bf16.xpose.msra.mxu0 0
  %38 = vmatprep.subr.bf16.mxu0 0
  %39 = vmatpush1.bf16.xpose.msra.mxu0 0
  %40 = vmatprep.subr.bf16.mxu0 0
  %41 = vmatpush1.bf16.xpose.msra.mxu0 0
  %42 = vmatprep.subr.bf16.mxu0 0
  %43 = vmatpush1.bf16.xpose.msra.mxu0 0
  %44 = vmatprep.subr.bf16.mxu0 0
  %45 = vmatpush1.bf16.xpose.msra.mxu0 0
  %46 = vmatprep.subr.bf16.mxu0 0
  %47 = vmatpush1.bf16.xpose.msra.mxu0 0
  %48 = vmatprep.subr.bf16.mxu0 0
  %49 = vmatpush1.bf16.xpose.msra.mxu0 %v32
  %50 = vmatprep.subr.bf16.mxu0 0
  %51 = vmatpush2.bf16.xpose.msra.mxu0 0
  %52 = vmatprep.subr.bf16.mxu0 0
  %53 = vmatpush2.bf16.xpose.msra.mxu0 0
  %54 = vmatprep.subr.bf16.mxu0 0
  %55 = vmatpush2.bf16.xpose.msra.mxu0 0
  %56 = vmatprep.subr.bf16.mxu0 0
  %57 = vmatpush2.bf16.xpose.msra.mxu0 0
  %58 = vmatprep.subr.bf16.mxu0 0
  %59 = vmatpush2.bf16.xpose.msra.mxu0 0
  %60 = vmatprep.subr.bf16.mxu0 0
  %61 = vmatpush2.bf16.xpose.msra.mxu0 0
  %62 = vmatprep.subr.bf16.mxu0 0
  %63 = vmatpush2.bf16.xpose.msra.mxu0 0
  %64 = vmatprep.subr.bf16.mxu0 0
  %65 = vmatpush2.bf16.xpose.msra.mxu0 0
  %66 = vmatprep.mubr.bf16.mxu0 0
  %67 = vmatmul.mubr.bf16.gmra.mxu0 %v29
  %v68 = vpop.f32.mrf.mxu0
  %v69 = vadd.f32 %v25, %v68
  %v70 = vpop.f32.mrf.mxu0
  %v71 = vpop.f32.mrf.mxu0
  %v72 = vadd.f32 %v25, %v71
  %v73 = vpop.f32.mrf.mxu0
  %74 = vdwg.mxu0
  %vm75 = vcmask 15360
  %76 = vst.msk [vmem:[%s3] sm:$0xff] %vm75, %v69
  %77 = vst.msk [vmem:[%s3 + $0x8] sm:$0xff] %vm75, %v72
  // Predicated region
  $region14: #{transformer_forward.7} parent=0 // pred_check
    _
  $region15: #{transformer_forward.7} parent=0 // pred_check_branch
    %79 = sbr.rel (0) target = $region17
  $region16: #{transformer_forward.7} parent=0 // pred_region
    _
  $region17: #{transformer_forward.7} parent=0 // pred_fallthru
    _
  // Predicated region
  $region18: #{transformer_forward.7} parent=0 // pred_check
    _
  $region19: #{transformer_forward.7} parent=0 // pred_check_branch
    %81 = sbr.rel (0) target = $region21
  $region20: #{transformer_forward.7} parent=0 // pred_region
    _
  $region21: #{transformer_forward.7} parent=0 // pred_fallthru
    _

// kernel: transformer_forward.6
$region0: #{transformer_forward.6}
  #allocation0 [shape = 'u32[]', space=smem, size = 0x4, offset = 0x4, fixed_abs, tag = 'smem constant byte address 0x4 - core index']
  #allocation1 [shape = 'u32[144,128]{1,0:T(1,128)}', space=vmem, size = 0x12000, scoped, tag = 'internal scratch']
  %s0 = inlined_call_operand.vmem [shape: f32[2,56], index: 0, kind: input, shape index: {}]
  %s1 = inlined_call_operand.vmem [shape: f32[56,56], index: 1, kind: input, shape index: {}]
  %s2 = inlined_call_operand.vmem [shape: f32[8,56], index: 2, kind: input, shape index: {}]
  %s3 = inlined_call_operand.vmem [shape: f32[2,4,24], index: 3, kind: input, shape index: {}]
  %s4 = inlined_call_operand.vmem [shape: f32[2,4,24], index: 4, kind: input, shape index: {}]
  %s5 = inlined_call_operand.vmem [shape: f32[2,4,8], index: 5, kind: input, shape index: {}]
  %s6 = inlined_call_operand.vmem [shape: f32[2,8,4], index: 6, kind: input, shape index: {}]
  %s7 = inlined_call_operand.vmem [shape: f32[2,8,8], index: 7, kind: input, shape index: {}]
  %s8 = inlined_call_operand.vmem [shape: f32[2,8,1], index: 8, kind: input, shape index: {}]
  %s9 = inlined_call_operand.vmem [shape: f32[2,8,8], index: 9, kind: input, shape index: {}]
  %s10 = inlined_call_operand.vmem [shape: f32[2,8,1], index: 10, kind: input, shape index: {}]
  %s11 = inlined_call_operand.vmem [shape: f32[8,56], index: 11, kind: output, shape index: {}]
  %s12 = sld [smem:[#allocation0]]
  $region54: #{transformer_forward.6} parent=0
    _
  %s14 = ssub.s32 1, %s12
  %s15 = scalar_select 0, %s14, %s12
  // Predicated region
  $region2: #{transformer_forward.6} parent=0 // pred_check
    _
  $region3: #{transformer_forward.6} parent=0 // pred_check_branch
    %17 = sbr.rel (0) target = $region5
  $region4: #{transformer_forward.6} parent=0 // pred_region
    _
  $region5: #{transformer_forward.6} parent=0 // pred_fallthru
    _
  // Predicated region
  $region6: #{transformer_forward.6} parent=0 // pred_check
    _
  $region7: #{transformer_forward.6} parent=0 // pred_check_branch
    %19 = sbr.rel (0) target = $region9
  $region8: #{transformer_forward.6} parent=0 // pred_region
    _
  $region9: #{transformer_forward.6} parent=0 // pred_fallthru
    _
  // Predicated region
  $region10: #{transformer_forward.6} parent=0 // pred_check
    _
  $region11: #{transformer_forward.6} parent=0 // pred_check_branch
    %21 = sbr.rel (0) target = $region13
  $region12: #{transformer_forward.6} parent=0 // pred_region
    _
  $region13: #{transformer_forward.6} parent=0 // pred_fallthru
    _
  // Predicated region
  $region14: #{transformer_forward.6} parent=0 // pred_check
    _
  $region15: #{transformer_forward.6} parent=0 // pred_check_branch
    %23 = sbr.rel (0) target = $region17
  $region16: #{transformer_forward.6} parent=0 // pred_region
    _
  $region17: #{transformer_forward.6} parent=0 // pred_fallthru
    _
  // Predicated region
  $region18: #{transformer_forward.6} parent=0 // pred_check
    _
  $region19: #{transformer_forward.6} parent=0 // pred_check_branch
    %25 = sbr.rel (0) target = $region21
  $region20: #{transformer_forward.6} parent=0 // pred_region
    _
  $region21: #{transformer_forward.6} parent=0 // pred_fallthru
    _
  // Predicated region
  $region22: #{transformer_forward.6} parent=0 // pred_check
    _
  $region23: #{transformer_forward.6} parent=0 // pred_check_branch
    %27 = sbr.rel (0) target = $region25
  $region24: #{transformer_forward.6} parent=0 // pred_region
    _
  $region25: #{transformer_forward.6} parent=0 // pred_fallthru
    _
  // Predicated region
  $region26: #{transformer_forward.6} parent=0 // pred_check
    _
  $region27: #{transformer_forward.6} parent=0 // pred_check_branch
    %29 = sbr.rel (0) target = $region29
  $region28: #{transformer_forward.6} parent=0 // pred_region
    _
  $region29: #{transformer_forward.6} parent=0 // pred_fallthru
    _
  // Predicated region
  $region30: #{transformer_forward.6} parent=0 // pred_check
    _
  $region31: #{transformer_forward.6} parent=0 // pred_check_branch
    %31 = sbr.rel (0) target = $region33
  $region32: #{transformer_forward.6} parent=0 // pred_region
    _
  $region33: #{transformer_forward.6} parent=0 // pred_fallthru
    _
  // Predicated region
  $region34: #{transformer_forward.6} parent=0 // pred_check
    _
  $region35: #{transformer_forward.6} parent=0 // pred_check_branch
    %33 = sbr.rel (0) target = $region37
  $region36: #{transformer_forward.6} parent=0 // pred_region
    _
  $region37: #{transformer_forward.6} parent=0 // pred_fallthru
    _
  // Predicated region
  $region38: #{transformer_forward.6} parent=0 // pred_check
    _
  $region39: #{transformer_forward.6} parent=0 // pred_check_branch
    %35 = sbr.rel (0) target = $region41
  $region40: #{transformer_forward.6} parent=0 // pred_region
    _
  $region41: #{transformer_forward.6} parent=0 // pred_fallthru
    _
  // Predicated region
  $region42: #{transformer_forward.6} parent=0 // pred_check
    _
  $region43: #{transformer_forward.6} parent=0 // pred_check_branch
    %37 = sbr.rel (0) target = $region45
  $region44: #{transformer_forward.6} parent=0 // pred_region
    _
  $region45: #{transformer_forward.6} parent=0 // pred_fallthru
    _
  %v39 = vld [vmem:[%s0] sm:$0x3]
  %v40 = vld [vmem:[%s1] sm:$0xff]
  %v41 = vld [vmem:[%s1 + $0x8] sm:$0xff]
  %v42 = vld [vmem:[%s1 + $0x10] sm:$0xff]
  %v43 = vld [vmem:[%s1 + $0x18] sm:$0xff]
  %v44 = vld [vmem:[%s1 + $0x20] sm:$0xff]
  %v45 = vld [vmem:[%s1 + $0x28] sm:$0xff]
  %v46 = vld [vmem:[%s1 + $0x30] sm:$0xff]
  %v47 = vld [vmem:[%s2] sm:$0xff]
  %vm48 = vcmask 1048000
  %49 = vrot.lane.b32.xlu0 %v47, 56
  %v50 = vpop.permute.xlu0 %49
  %v51 = vsel %vm48, %v50, %v47
  %52 = vrot.lane.b32.xlu0 %v51, 56
  %v53 = vpop.permute.xlu0 %52
  %v54 = vsel %vm48, %v53, %v47
  %v55 = vlaneseq
  %v56 = vshrl.u32 %v55, 7
  %v57 = vsub.s32 0, %v56
  %v58 = vrot.slane %v39, %v57
  %60 = vrot.lane.b32.xlu0 %v58, 55
  %v61 = vpop.permute.xlu0 %60
  %v63 = vmul.f32 %v54, %v61
  %v64 = vlaneseq
  %v65 = vshrl.u32 %v64, 7
  %v66 = vsub.s32 1, %v65
  %v67 = vrot.slane %v39, %v66
  %69 = vrot.lane.b32.xlu0 %v67, 54
  %v70 = vpop.permute.xlu0 %69
  %v72 = vmul.f32 %v54, %v70
  %74 = vrot.lane.b32.xlu0 %v63, 73
  %v75 = vpop.permute.xlu0 %74
  %78 = vrot.lane.b32.xlu0 %v72, 74
  %v79 = vpop.permute.xlu0 %78
  %v81 = vpack.c.bf16 %v75, %v47
  %v82 = vpack.c.bf16 %v79, %v79
  %v83 = vld [vmem:[%s3] sm:$0xf]
  %v84 = vpack.c.bf16 %v83, %v83
  %vm85 = vcmask 195584
  %v87 = vsel %vm85, %v84, 0
  %vm89 = vcmask 1043456
  %v91 = vsel %vm89, %v82, 0
  %93 = vmatprep.subr.bf16.mxu0 0
  %94 = vmatpush1.bf16.msra.mxu0 0
  %95 = vmatprep.subr.bf16.mxu0 0
  %96 = vmatpush1.bf16.msra.mxu0 0
  %97 = vmatprep.subr.bf16.mxu0 0
  %98 = vmatpush1.bf16.msra.mxu0 0
  %99 = vmatprep.subr.bf16.mxu0 0
  %100 = vmatpush1.bf16.msra.mxu0 0
  %101 = vmatprep.subr.bf16.mxu0 0
  %102 = vmatpush1.bf16.msra.mxu0 0
  %103 = vmatprep.subr.bf16.mxu0 0
  %104 = vmatpush1.bf16.msra.mxu0 0
  %105 = vmatprep.subr.bf16.mxu0 0
  %106 = vmatpush1.bf16.msra.mxu0 %v91
  %107 = vmatprep.subr.bf16.mxu0 0
  %108 = vmatpush1.bf16.msra.mxu0 %v81
  %109 = vmatprep.subr.bf16.mxu0 0
  %110 = vmatpush2.bf16.msra.mxu0 0
  %111 = vmatprep.subr.bf16.mxu0 0
  %112 = vmatpush2.bf16.msra.mxu0 0
  %113 = vmatprep.subr.bf16.mxu0 0
  %114 = vmatpush2.bf16.msra.mxu0 0
  %115 = vmatprep.subr.bf16.mxu0 0
  %116 = vmatpush2.bf16.msra.mxu0 0
  %117 = vmatprep.subr.bf16.mxu0 0
  %118 = vmatpush2.bf16.msra.mxu0 0
  %119 = vmatprep.subr.bf16.mxu0 0
  %120 = vmatpush2.bf16.msra.mxu0 0
  %121 = vmatprep.subr.bf16.mxu0 0
  %122 = vmatpush2.bf16.msra.mxu0 0
  %123 = vmatprep.subr.bf16.mxu0 0
  %124 = vmatpush2.bf16.msra.mxu0 0
  %125 = vmatprep.mubr.bf16.mxu0 0
  %126 = vmatmul.mubr.bf16.gmra.mxu0 %v87
  %v127 = vpop.f32.mrf.mxu0
  %v128 = vadd.f32 0.0, %v127
  %v129 = vpop.f32.mrf.mxu0
  %v130 = vpop.f32.mrf.mxu0
  %v131 = vpop.f32.mrf.mxu0
  %132 = vdwg.mxu0
  %v133 = vld [vmem:[%s4] sm:$0xf]
  %v134 = vpack.c.bf16 %v133, %v133
  %v136 = vsel %vm85, %v134, 0
  %138 = vmatprep.subr.bf16.mxu0 0
  %139 = vmatpush1.bf16.msra.mxu0 0
  %140 = vmatprep.subr.bf16.mxu0 0
  %141 = vmatpush1.bf16.msra.mxu0 0
  %142 = vmatprep.subr.bf16.mxu0 0
  %143 = vmatpush1.bf16.msra.mxu0 0
  %144 = vmatprep.subr.bf16.mxu0 0
  %145 = vmatpush1.bf16.msra.mxu0 0
  %146 = vmatprep.subr.bf16.mxu0 0
  %147 = vmatpush1.bf16.msra.mxu0 0
  %148 = vmatprep.subr.bf16.mxu0 0
  %149 = vmatpush1.bf16.msra.mxu0 0
  %150 = vmatprep.subr.bf16.mxu0 0
  %151 = vmatpush1.bf16.msra.mxu0 %v91
  %152 = vmatprep.subr.bf16.mxu0 0
  %153 = vmatpush1.bf16.msra.mxu0 %v81
  %154 = vmatprep.subr.bf16.mxu0 0
  %155 = vmatpush2.bf16.msra.mxu0 0
  %156 = vmatprep.subr.bf16.mxu0 0
  %157 = vmatpush2.bf16.msra.mxu0 0
  %158 = vmatprep.subr.bf16.mxu0 0
  %159 = vmatpush2.bf16.msra.mxu0 0
  %160 = vmatprep.subr.bf16.mxu0 0
  %161 = vmatpush2.bf16.msra.mxu0 0
  %162 = vmatprep.subr.bf16.mxu0 0
  %163 = vmatpush2.bf16.msra.mxu0 0
  %164 = vmatprep.subr.bf16.mxu0 0
  %165 = vmatpush2.bf16.msra.mxu0 0
  %166 = vmatprep.subr.bf16.mxu0 0
  %167 = vmatpush2.bf16.msra.mxu0 0
  %168 = vmatprep.subr.bf16.mxu0 0
  %169 = vmatpush2.bf16.msra.mxu0 0
  %170 = vmatprep.mubr.bf16.mxu0 0
  %171 = vmatmul.mubr.bf16.gmra.mxu0 %v136
  %v172 = vpop.f32.mrf.mxu0
  %v173 = vadd.f32 0.0, %v172
  %v174 = vpop.f32.mrf.mxu0
  %v175 = vpop.f32.mrf.mxu0
  %v176 = vpop.f32.mrf.mxu0
  %177 = vdwg.mxu0
  %v178 = vld [vmem:[%s5] sm:$0xf]
  %v179 = vpack.c.bf16 %v178, %v178
  %v180 = vpack.c.bf16 %v47, %v47
  %vm181 = vcmask 64512
  %v183 = vsel %vm181, %v179, 0
  %v186 = vsel %vm89, %v180, 0
  %188 = vmatprep.subr.bf16.mxu0 0
  %189 = vmatpush1.bf16.msra.mxu0 0
  %190 = vmatprep.subr.bf16.mxu0 0
  %191 = vmatpush1.bf16.msra.mxu0 0
  %192 = vmatprep.subr.bf16.mxu0 0
  %193 = vmatpush1.bf16.msra.mxu0 0
  %194 = vmatprep.subr.bf16.mxu0 0
  %195 = vmatpush1.bf16.msra.mxu0 0
  %196 = vmatprep.subr.bf16.mxu0 0
  %197 = vmatpush1.bf16.msra.mxu0 0
  %198 = vmatprep.subr.bf16.mxu0 0
  %199 = vmatpush1.bf16.msra.mxu0 0
  %200 = vmatprep.subr.bf16.mxu0 0
  %201 = vmatpush1.bf16.msra.mxu0 0
  %202 = vmatprep.subr.bf16.mxu0 0
  %203 = vmatpush1.bf16.msra.mxu0 %v186
  %204 = vmatprep.subr.bf16.mxu0 0
  %205 = vmatpush2.bf16.msra.mxu0 0
  %206 = vmatprep.subr.bf16.mxu0 0
  %207 = vmatpush2.bf16.msra.mxu0 0
  %208 = vmatprep.subr.bf16.mxu0 0
  %209 = vmatpush2.bf16.msra.mxu0 0
  %210 = vmatprep.subr.bf16.mxu0 0
  %211 = vmatpush2.bf16.msra.mxu0 0
  %212 = vmatprep.subr.bf16.mxu0 0
  %213 = vmatpush2.bf16.msra.mxu0 0
  %214 = vmatprep.subr.bf16.mxu0 0
  %215 = vmatpush2.bf16.msra.mxu0 0
  %216 = vmatprep.subr.bf16.mxu0 0
  %217 = vmatpush2.bf16.msra.mxu0 0
  %218 = vmatprep.subr.bf16.mxu0 0
  %219 = vmatpush2.bf16.msra.mxu0 0
  %220 = vmatprep.mubr.bf16.mxu0 0
  %221 = vmatmul.mubr.bf16.gmra.mxu0 %v183
  %v222 = vpop.f32.mrf.mxu0
  %v223 = vadd.f32 0.0, %v222
  %v224 = vpop.f32.mrf.mxu0
  %v225 = vpop.f32.mrf.mxu0
  %v226 = vpop.f32.mrf.mxu0
  %227 = vdwg.mxu0
  %v228 = vpack.c.bf16 %v128, %v128
  %v229 = vpack.c.bf16 %v173, %v173
  %230 = vxpose.xlu0.c.b16.start [1/8] %v228, 128
  %231 = vxpose.xlu0.c.b16.cont [2/8] 0, 128
  %232 = vxpose.xlu0.c.b16.cont [3/8] 0, 128
  %233 = vxpose.xlu0.c.b16.cont [4/8] 0, 128
  %234 = vxpose.xlu0.c.b16.cont [5/8] 0, 128
  %235 = vxpose.xlu0.c.b16.cont [6/8] 0, 128
  %236 = vxpose.xlu0.c.b16.cont [7/8] 0, 128
  %237 = vxpose.xlu0.c.b16.end [8/8] 0, 128
  %v238 = vpop.trf.xlu0
  %v239 = vpop.trf.xlu0
  %v240 = vpop.trf.xlu0
  %v241 = vpop.trf.xlu0
  %v242 = vpop.trf.xlu0
  %v243 = vpop.trf.xlu0
  %v244 = vpop.trf.xlu0
  %v245 = vpop.trf.xlu0
  %vm246 = vcmask 31744
  %v248 = vsel %vm246, %v238, 0
  %v251 = vsel %vm246, %v239, 0
  %v254 = vsel %vm246, %v240, 0
  %v257 = vsel %vm246, %v241, 0
  %vm259 = vcmask 1041408
  %v261 = vsel %vm259, %v229, 0
  %263 = vmatprep.subr.bf16.mxu0 0
  %264 = vmatpush1.bf16.msra.mxu0 0
  %265 = vmatprep.subr.bf16.mxu0 0
  %266 = vmatpush1.bf16.msra.mxu0 0
  %267 = vmatprep.subr.bf16.mxu0 0
  %268 = vmatpush1.bf16.msra.mxu0 0
  %269 = vmatprep.subr.bf16.mxu0 0
  %270 = vmatpush1.bf16.msra.mxu0 0
  %271 = vmatprep.subr.bf16.mxu0 0
  %272 = vmatpush1.bf16.msra.mxu0 0
  %273 = vmatprep.subr.bf16.mxu0 0
  %274 = vmatpush1.bf16.msra.mxu0 0
  %275 = vmatprep.subr.bf16.mxu0 0
  %276 = vmatpush1.bf16.msra.mxu0 0
  %277 = vmatprep.subr.bf16.mxu0 0
  %278 = vmatpush1.bf16.msra.mxu0 %v261
  %279 = vmatprep.subr.bf16.mxu0 0
  %280 = vmatpush2.bf16.msra.mxu0 0
  %281 = vmatprep.subr.bf16.mxu0 0
  %282 = vmatpush2.bf16.msra.mxu0 0
  %283 = vmatprep.subr.bf16.mxu0 0
  %284 = vmatpush2.bf16.msra.mxu0 0
  %285 = vmatprep.subr.bf16.mxu0 0
  %286 = vmatpush2.bf16.msra.mxu0 0
  %287 = vmatprep.subr.bf16.mxu0 0
  %288 = vmatpush2.bf16.msra.mxu0 0
  %289 = vmatprep.subr.bf16.mxu0 0
  %290 = vmatpush2.bf16.msra.mxu0 0
  %291 = vmatprep.subr.bf16.mxu0 0
  %292 = vmatpush2.bf16.msra.mxu0 0
  %293 = vmatprep.subr.bf16.mxu0 0
  %294 = vmatpush2.bf16.msra.mxu0 0
  %295 = vmatprep.mubr.bf16.mxu0 0
  %296 = vmatmul.mubr.bf16.gmra.mxu0 %v248
  %v297 = vpop.f32.mrf.mxu0
  %v298 = vadd.f32 %v40, %v297
  %v299 = vpop.f32.mrf.mxu0
  %v300 = vpop.f32.mrf.mxu0
  %v301 = vadd.f32 %v41, %v300
  %v302 = vpop.f32.mrf.mxu0
  %303 = vmatprep.mubr.bf16.mxu0 0
  %304 = vmatmul.mubr.bf16.gmra.mxu0 %v251
  %v305 = vpop.f32.mrf.mxu0
  %v306 = vadd.f32 %v42, %v305
  %v307 = vpop.f32.mrf.mxu0
  %v308 = vpop.f32.mrf.mxu0
  %v309 = vadd.f32 %v43, %v308
  %v310 = vpop.f32.mrf.mxu0
  %311 = vmatprep.mubr.bf16.mxu0 0
  %312 = vmatmul.mubr.bf16.gmra.mxu0 %v254
  %v313 = vpop.f32.mrf.mxu0
  %v314 = vadd.f32 %v44, %v313
  %v315 = vpop.f32.mrf.mxu0
  %v316 = vpop.f32.mrf.mxu0
  %v317 = vadd.f32 %v45, %v316
  %v318 = vpop.f32.mrf.mxu0
  %319 = vmatprep.mubr.bf16.mxu0 0
  %320 = vmatmul.mubr.bf16.gmra.mxu0 %v257
  %v321 = vpop.f32.mrf.mxu0
  %v322 = vadd.f32 %v46, %v321
  %v323 = vpop.f32.mrf.mxu0
  %v324 = vpop.f32.mrf.mxu0
  %v325 = vpop.f32.mrf.mxu0
  %326 = vdwg.mxu0
  %vm327 = vcmask 457728
  %v328 = vsel %vm327, %v298, -inf
  %329 = vmax.xlane.f32.xlu0 %v328
  %v330 = vpop.xlane.xlu0 %329
  %v331 = vsel %vm327, %v301, -inf
  %332 = vmax.xlane.f32.xlu0 %v331
  %v333 = vpop.xlane.xlu0 %332
  %v334 = vsel %vm327, %v306, -inf
  %335 = vmax.xlane.f32.xlu0 %v334
  %v336 = vpop.xlane.xlu0 %335
  %v337 = vsel %vm327, %v309, -inf
  %338 = vmax.xlane.f32.xlu0 %v337
  %v339 = vpop.xlane.xlu0 %338
  %v340 = vsel %vm327, %v314, -inf
  %341 = vmax.xlane.f32.xlu0 %v340
  %v342 = vpop.xlane.xlu0 %341
  %v343 = vsel %vm327, %v317, -inf
  %344 = vmax.xlane.f32.xlu0 %v343
  %v345 = vpop.xlane.xlu0 %344
  %v346 = vsel %vm327, %v322, -inf
  %347 = vmax.xlane.f32.xlu0 %v346
  %v348 = vpop.xlane.xlu0 %347
  %v349 = vsub.f32 %v298, %v330
  %v350 = vsub.f32 %v301, %v333
  %v351 = vsub.f32 %v306, %v336
  %v352 = vsub.f32 %v309, %v339
  %v353 = vsub.f32 %v314, %v342
  %v354 = vsub.f32 %v317, %v345
  %v355 = vsub.f32 %v322, %v348
  %v356 = vmul.f32 %v349, 1.442695
  %v357 = vpow.pop %v356
  %v358 = vmul.f32 %v350, 1.442695
  %v359 = vpow.pop %v358
  %v360 = vmul.f32 %v351, 1.442695
  %v361 = vpow.pop %v360
  %v362 = vmul.f32 %v352, 1.442695
  %v363 = vpow.pop %v362
  %v364 = vmul.f32 %v353, 1.442695
  %v365 = vpow.pop %v364
  %v366 = vmul.f32 %v354, 1.442695
  %v367 = vpow.pop %v366
  %v368 = vmul.f32 %v355, 1.442695
  %v369 = vpow.pop %v368
  %v370 = vsel %vm327, %v357, 0.0
  %371 = vadd.xlane.f32.xlu0 %v370
  %v372 = vpop.xlane.xlu0 %371
  %v373 = vsel %vm327, %v359, 0.0
  %374 = vadd.xlane.f32.xlu0 %v373
  %v375 = vpop.xlane.xlu0 %374
  %v376 = vsel %vm327, %v361, 0.0
  %377 = vadd.xlane.f32.xlu0 %v376
  %v378 = vpop.xlane.xlu0 %377
  %v379 = vsel %vm327, %v363, 0.0
  %380 = vadd.xlane.f32.xlu0 %v379
  %v381 = vpop.xlane.xlu0 %380
  %v382 = vsel %vm327, %v365, 0.0
  %383 = vadd.xlane.f32.xlu0 %v382
  %v384 = vpop.xlane.xlu0 %383
  %v385 = vsel %vm327, %v367, 0.0
  %386 = vadd.xlane.f32.xlu0 %v385
  %v387 = vpop.xlane.xlu0 %386
  %v388 = vsel %vm327, %v369, 0.0
  %389 = vadd.xlane.f32.xlu0 %v388
  %v390 = vpop.xlane.xlu0 %389
  %v391 = vrcp.pop %v372
  %v392 = vrcp.pop %v375
  %v393 = vrcp.pop %v378
  %v394 = vrcp.pop %v381
  %v395 = vrcp.pop %v384
  %v396 = vrcp.pop %v387
  %v397 = vrcp.pop %v390
  %v398 = vmul.f32 %v357, %v391
  %v399 = vmul.f32 %v359, %v392
  %v400 = vmul.f32 %v361, %v393
  %v401 = vmul.f32 %v363, %v394
  %v402 = vmul.f32 %v365, %v395
  %v403 = vmul.f32 %v367, %v396
  %v404 = vmul.f32 %v369, %v397
  %v405 = vpack.c.bf16 %v223, %v223
  %v406 = vpack.c.bf16 %v399, %v398
  %v407 = vpack.c.bf16 %v401, %v400
  %v408 = vpack.c.bf16 %v403, %v402
  %v409 = vpack.c.bf16 %v404, %v404
  %v411 = vsel %vm327, %v405, 0
  %v414 = vsel %vm327, %v406, 0
  %v417 = vsel %vm327, %v407, 0
  %v420 = vsel %vm327, %v408, 0
  %v423 = vsel %vm327, %v409, 0
  %425 = vmatprep.subr.bf16.mxu0 0
  %426 = vmatpush1.bf16.xpose.msra.mxu0 0
  %427 = vmatprep.subr.bf16.mxu0 0
  %428 = vmatpush1.bf16.xpose.msra.mxu0 0
  %429 = vmatprep.subr.bf16.mxu0 0
  %430 = vmatpush1.bf16.xpose.msra.mxu0 0
  %431 = vmatprep.subr.bf16.mxu0 0
  %432 = vmatpush1.bf16.xpose.msra.mxu0 0
  %433 = vmatprep.subr.bf16.mxu0 0
  %434 = vmatpush1.bf16.xpose.msra.mxu0 %v423
  %435 = vmatprep.subr.bf16.mxu0 0
  %436 = vmatpush1.bf16.xpose.msra.mxu0 %v420
  %437 = vmatprep.subr.bf16.mxu0 0
  %438 = vmatpush1.bf16.xpose.msra.mxu0 %v417
  %439 = vmatprep.subr.bf16.mxu0 0
  %440 = vmatpush1.bf16.xpose.msra.mxu0 %v414
  %441 = vmatprep.subr.bf16.mxu0 0
  %442 = vmatpush2.bf16.xpose.msra.mxu0 0
  %443 = vmatprep.subr.bf16.mxu0 0
  %444 = vmatpush2.bf16.xpose.msra.mxu0 0
  %445 = vmatprep.subr.bf16.mxu0 0
  %446 = vmatpush2.bf16.xpose.msra.mxu0 0
  %447 = vmatprep.subr.bf16.mxu0 0
  %448 = vmatpush2.bf16.xpose.msra.mxu0 0
  %449 = vmatprep.subr.bf16.mxu0 0
  %450 = vmatpush2.bf16.xpose.msra.mxu0 0
  %451 = vmatprep.subr.bf16.mxu0 0
  %452 = vmatpush2.bf16.xpose.msra.mxu0 0
  %453 = vmatprep.subr.bf16.mxu0 0
  %454 = vmatpush2.bf16.xpose.msra.mxu0 0
  %455 = vmatprep.subr.bf16.mxu0 0
  %456 = vmatpush2.bf16.xpose.msra.mxu0 0
  %457 = vmatprep.mubr.bf16.mxu0 0
  %458 = vmatmul.mubr.bf16.gmra.mxu0 %v411
  %v459 = vpop.f32.mrf.mxu0
  %v460 = vadd.f32 0.0, %v459
  %v461 = vpop.f32.mrf.mxu0
  %v462 = vpop.f32.mrf.mxu0
  %v463 = vpop.f32.mrf.mxu0
  %464 = vdwg.mxu0
  %v465 = vld [vmem:[%s6] sm:$0xff]
  %v466 = vpack.c.bf16 %v465, %v465
  %v467 = vpack.c.bf16 %v460, %v460
  %v469 = vsel %vm246, %v466, 0
  %v472 = vsel %vm259, %v467, 0
  %474 = vmatprep.subr.bf16.mxu0 0
  %475 = vmatpush1.bf16.msra.mxu0 0
  %476 = vmatprep.subr.bf16.mxu0 0
  %477 = vmatpush1.bf16.msra.mxu0 0
  %478 = vmatprep.subr.bf16.mxu0 0
  %479 = vmatpush1.bf16.msra.mxu0 0
  %480 = vmatprep.subr.bf16.mxu0 0
  %481 = vmatpush1.bf16.msra.mxu0 0
  %482 = vmatprep.subr.bf16.mxu0 0
  %483 = vmatpush1.bf16.msra.mxu0 0
  %484 = vmatprep.subr.bf16.mxu0 0
  %485 = vmatpush1.bf16.msra.mxu0 0
  %486 = vmatprep.subr.bf16.mxu0 0
  %487 = vmatpush1.bf16.msra.mxu0 0
  %488 = vmatprep.subr.bf16.mxu0 0
  %489 = vmatpush1.bf16.msra.mxu0 %v472
  %490 = vmatprep.subr.bf16.mxu0 0
  %491 = vmatpush2.bf16.msra.mxu0 0
  %492 = vmatprep.subr.bf16.mxu0 0
  %493 = vmatpush2.bf16.msra.mxu0 0
  %494 = vmatprep.subr.bf16.mxu0 0
  %495 = vmatpush2.bf16.msra.mxu0 0
  %496 = vmatprep.subr.bf16.mxu0 0
  %497 = vmatpush2.bf16.msra.mxu0 0
  %498 = vmatprep.subr.bf16.mxu0 0
  %499 = vmatpush2.bf16.msra.mxu0 0
  %500 = vmatprep.subr.bf16.mxu0 0
  %501 = vmatpush2.bf16.msra.mxu0 0
  %502 = vmatprep.subr.bf16.mxu0 0
  %503 = vmatpush2.bf16.msra.mxu0 0
  %504 = vmatprep.subr.bf16.mxu0 0
  %505 = vmatpush2.bf16.msra.mxu0 0
  %506 = vmatprep.mubr.bf16.mxu0 0
  %507 = vmatmul.mubr.bf16.gmra.mxu0 %v469
  %v508 = vpop.f32.mrf.mxu0
  %v509 = vadd.f32 0.0, %v508
  %v510 = vpop.f32.mrf.mxu0
  %v511 = vpop.f32.mrf.mxu0
  %v512 = vpop.f32.mrf.mxu0
  %513 = vdwg.mxu0
  %v514 = vadd.f32 %v47, %v509
  %v515 = vld [vmem:[%s7] sm:$0xff]
  %v516 = vpack.c.bf16 %v515, %v515
  %v517 = vpack.c.bf16 %v514, %v514
  %v518 = vld [vmem:[%s8] sm:$0xff]
  %520 = vset.pattern.permute.xlu0 0
  %521 = vperm.xlu0 %520, %v518
  %v522 = vpop.permute.xlu0 %521
  %v525 = vsel %vm181, %v516, 0
  %v528 = vsel %vm89, %v517, 0
  %530 = vmatprep.subr.bf16.mxu0 0
  %531 = vmatpush1.bf16.msra.mxu0 0
  %532 = vmatprep.subr.bf16.mxu0 0
  %533 = vmatpush1.bf16.msra.mxu0 0
  %534 = vmatprep.subr.bf16.mxu0 0
  %535 = vmatpush1.bf16.msra.mxu0 0
  %536 = vmatprep.subr.bf16.mxu0 0
  %537 = vmatpush1.bf16.msra.mxu0 0
  %538 = vmatprep.subr.bf16.mxu0 0
  %539 = vmatpush1.bf16.msra.mxu0 0
  %540 = vmatprep.subr.bf16.mxu0 0
  %541 = vmatpush1.bf16.msra.mxu0 0
  %542 = vmatprep.subr.bf16.mxu0 0
  %543 = vmatpush1.bf16.msra.mxu0 0
  %544 = vmatprep.subr.bf16.mxu0 0
  %545 = vmatpush1.bf16.msra.mxu0 %v528
  %546 = vmatprep.subr.bf16.mxu0 0
  %547 = vmatpush2.bf16.msra.mxu0 0
  %548 = vmatprep.subr.bf16.mxu0 0
  %549 = vmatpush2.bf16.msra.mxu0 0
  %550 = vmatprep.subr.bf16.mxu0 0
  %551 = vmatpush2.bf16.msra.mxu0 0
  %552 = vmatprep.subr.bf16.mxu0 0
  %553 = vmatpush2.bf16.msra.mxu0 0
  %554 = vmatprep.subr.bf16.mxu0 0
  %555 = vmatpush2.bf16.msra.mxu0 0
  %556 = vmatprep.subr.bf16.mxu0 0
  %557 = vmatpush2.bf16.msra.mxu0 0
  %558 = vmatprep.subr.bf16.mxu0 0
  %559 = vmatpush2.bf16.msra.mxu0 0
  %560 = vmatprep.subr.bf16.mxu0 0
  %561 = vmatpush2.bf16.msra.mxu0 0
  %562 = vmatprep.mubr.bf16.mxu0 0
  %563 = vmatmul.mubr.bf16.gmra.mxu0 %v525
  %v564 = vpop.f32.mrf.mxu0
  %v565 = vadd.f32 %v522, %v564
  %v566 = vpop.f32.mrf.mxu0
  %v567 = vpop.f32.mrf.mxu0
  %v568 = vpop.f32.mrf.mxu0
  %569 = vdwg.mxu0
  %v570 = vmax.f32 %v565, 0.0
  %v571 = vld [vmem:[%s9] sm:$0xff]
  %v572 = vpack.c.bf16 %v571, %v571
  %v573 = vpack.c.bf16 %v570, %v570
  %v574 = vld [vmem:[%s10] sm:$0xff]
  %576 = vset.pattern.permute.xlu0 0
  %577 = vperm.xlu0 %576, %v574
  %v578 = vpop.permute.xlu0 %577
  %v581 = vsel %vm181, %v572, 0
  %v584 = vsel %vm89, %v573, 0
  %586 = vmatprep.subr.bf16.mxu0 0
  %587 = vmatpush1.bf16.msra.mxu0 0
  %588 = vmatprep.subr.bf16.mxu0 0
  %589 = vmatpush1.bf16.msra.mxu0 0
  %590 = vmatprep.subr.bf16.mxu0 0
  %591 = vmatpush1.bf16.msra.mxu0 0
  %592 = vmatprep.subr.bf16.mxu0 0
  %593 = vmatpush1.bf16.msra.mxu0 0
  %594 = vmatprep.subr.bf16.mxu0 0
  %595 = vmatpush1.bf16.msra.mxu0 0
  %596 = vmatprep.subr.bf16.mxu0 0
  %597 = vmatpush1.bf16.msra.mxu0 0
  %598 = vmatprep.subr.bf16.mxu0 0
  %599 = vmatpush1.bf16.msra.mxu0 0
  %600 = vmatprep.subr.bf16.mxu0 0
  %601 = vmatpush1.bf16.msra.mxu0 %v584
  %602 = vmatprep.subr.bf16.mxu0 0
  %603 = vmatpush2.bf16.msra.mxu0 0
  %604 = vmatprep.subr.bf16.mxu0 0
  %605 = vmatpush2.bf16.msra.mxu0 0
  %606 = vmatprep.subr.bf16.mxu0 0
  %607 = vmatpush2.bf16.msra.mxu0 0
  %608 = vmatprep.subr.bf16.mxu0 0
  %609 = vmatpush2.bf16.msra.mxu0 0
  %610 = vmatprep.subr.bf16.mxu0 0
  %611 = vmatpush2.bf16.msra.mxu0 0
  %612 = vmatprep.subr.bf16.mxu0 0
  %613 = vmatpush2.bf16.msra.mxu0 0
  %614 = vmatprep.subr.bf16.mxu0 0
  %615 = vmatpush2.bf16.msra.mxu0 0
  %616 = vmatprep.subr.bf16.mxu0 0
  %617 = vmatpush2.bf16.msra.mxu0 0
  %618 = vmatprep.mubr.bf16.mxu0 0
  %619 = vmatmul.mubr.bf16.gmra.mxu0 %v581
  %v620 = vpop.f32.mrf.mxu0
  %v621 = vadd.f32 %v578, %v620
  %v622 = vpop.f32.mrf.mxu0
  %v623 = vpop.f32.mrf.mxu0
  %v624 = vpop.f32.mrf.mxu0
  %625 = vdwg.mxu0
  %v626 = vadd.f32 %v514, %v621
  %627 = vrot.lane.b32.xlu0 %v626, 56
  %v628 = vpop.permute.xlu0 %627
  %v629 = vsel %vm48, %v628, %v626
  %630 = vrot.lane.b32.xlu0 %v629, 56
  %v631 = vpop.permute.xlu0 %630
  %v632 = vsel %vm48, %v631, %v626
  %v633 = vmul.f32 %v632, %v61
  %v634 = vmul.f32 %v632, %v70
  %636 = vrot.lane.b32.xlu0 %v633, 73
  %v637 = vpop.permute.xlu0 %636
  %640 = vrot.lane.b32.xlu0 %v634, 74
  %v641 = vpop.permute.xlu0 %640
  %v643 = vpack.c.bf16 %v637, %v626
  %v644 = vpack.c.bf16 %v641, %v641
  %s645 = scalar_lea.vmem %s3, 4
  %v646 = vld [vmem:[%s645] sm:$0xf]
  %v647 = vpack.c.bf16 %v646, %v646
  %v649 = vsel %vm85, %v647, 0
  %v652 = vsel %vm89, %v644, 0
  %654 = vmatprep.subr.bf16.mxu0 0
  %655 = vmatpush1.bf16.msra.mxu0 0
  %656 = vmatprep.subr.bf16.mxu0 0
  %657 = vmatpush1.bf16.msra.mxu0 0
  %658 = vmatprep.subr.bf16.mxu0 0
  %659 = vmatpush1.bf16.msra.mxu0 0
  %660 = vmatprep.subr.bf16.mxu0 0
  %661 = vmatpush1.bf16.msra.mxu0 0
  %662 = vmatprep.subr.bf16.mxu0 0
  %663 = vmatpush1.bf16.msra.mxu0 0
  %664 = vmatprep.subr.bf16.mxu0 0
  %665 = vmatpush1.bf16.msra.mxu0 0
  %666 = vmatprep.subr.bf16.mxu0 0
  %667 = vmatpush1.bf16.msra.mxu0 %v652
  %668 = vmatprep.subr.bf16.mxu0 0
  %669 = vmatpush1.bf16.msra.mxu0 %v643
  %670 = vmatprep.subr.bf16.mxu0 0
  %671 = vmatpush2.bf16.msra.mxu0 0
  %672 = vmatprep.subr.bf16.mxu0 0
  %673 = vmatpush2.bf16.msra.mxu0 0
  %674 = vmatprep.subr.bf16.mxu0 0
  %675 = vmatpush2.bf16.msra.mxu0 0
  %676 = vmatprep.subr.bf16.mxu0 0
  %677 = vmatpush2.bf16.msra.mxu0 0
  %678 = vmatprep.subr.bf16.mxu0 0
  %679 = vmatpush2.bf16.msra.mxu0 0
  %680 = vmatprep.subr.bf16.mxu0 0
  %681 = vmatpush2.bf16.msra.mxu0 0
  %682 = vmatprep.subr.bf16.mxu0 0
  %683 = vmatpush2.bf16.msra.mxu0 0
  %684 = vmatprep.subr.bf16.mxu0 0
  %685 = vmatpush2.bf16.msra.mxu0 0
  %686 = vmatprep.mubr.bf16.mxu0 0
  %687 = vmatmul.mubr.bf16.gmra.mxu0 %v649
  %v688 = vpop.f32.mrf.mxu0
  %v689 = vadd.f32 0.0, %v688
  %v690 = vpop.f32.mrf.mxu0
  %v691 = vpop.f32.mrf.mxu0
  %v692 = vpop.f32.mrf.mxu0
  %693 = vdwg.mxu0
  %s694 = scalar_lea.vmem %s4, 4
  %v695 = vld [vmem:[%s694] sm:$0xf]
  %v696 = vpack.c.bf16 %v695, %v695
  %v698 = vsel %vm85, %v696, 0
  %700 = vmatprep.subr.bf16.mxu0 0
  %701 = vmatpush1.bf16.msra.mxu0 0
  %702 = vmatprep.subr.bf16.mxu0 0
  %703 = vmatpush1.bf16.msra.mxu0 0
  %704 = vmatprep.subr.bf16.mxu0 0
  %705 = vmatpush1.bf16.msra.mxu0 0
  %706 = vmatprep.subr.bf16.mxu0 0
  %707 = vmatpush1.bf16.msra.mxu0 0
  %708 = vmatprep.subr.bf16.mxu0 0
  %709 = vmatpush1.bf16.msra.mxu0 0
  %710 = vmatprep.subr.bf16.mxu0 0
  %711 = vmatpush1.bf16.msra.mxu0 0
  %712 = vmatprep.subr.bf16.mxu0 0
  %713 = vmatpush1.bf16.msra.mxu0 %v652
  %714 = vmatprep.subr.bf16.mxu0 0
  %715 = vmatpush1.bf16.msra.mxu0 %v643
  %716 = vmatprep.subr.bf16.mxu0 0
  %717 = vmatpush2.bf16.msra.mxu0 0
  %718 = vmatprep.subr.bf16.mxu0 0
  %719 = vmatpush2.bf16.msra.mxu0 0
  %720 = vmatprep.subr.bf16.mxu0 0
  %721 = vmatpush2.bf16.msra.mxu0 0
  %722 = vmatprep.subr.bf16.mxu0 0
  %723 = vmatpush2.bf16.msra.mxu0 0
  %724 = vmatprep.subr.bf16.mxu0 0
  %725 = vmatpush2.bf16.msra.mxu0 0
  %726 = vmatprep.subr.bf16.mxu0 0
  %727 = vmatpush2.bf16.msra.mxu0 0
  %728 = vmatprep.subr.bf16.mxu0 0
  %729 = vmatpush2.bf16.msra.mxu0 0
  %730 = vmatprep.subr.bf16.mxu0 0
  %731 = vmatpush2.bf16.msra.mxu0 0
  %732 = vmatprep.mubr.bf16.mxu0 0
  %733 = vmatmul.mubr.bf16.gmra.mxu0 %v698
  %v734 = vpop.f32.mrf.mxu0
  %v735 = vadd.f32 0.0, %v734
  %v736 = vpop.f32.mrf.mxu0
  %v737 = vpop.f32.mrf.mxu0
  %v738 = vpop.f32.mrf.mxu0
  %739 = vdwg.mxu0
  %s740 = scalar_lea.vmem %s5, 4
  %v741 = vld [vmem:[%s740] sm:$0xf]
  %v742 = vpack.c.bf16 %v741, %v741
  %v743 = vpack.c.bf16 %v626, %v626
  %v745 = vsel %vm181, %v742, 0
  %v748 = vsel %vm89, %v743, 0
  %750 = vmatprep.subr.bf16.mxu0 0
  %751 = vmatpush1.bf16.msra.mxu0 0
  %752 = vmatprep.subr.bf16.mxu0 0
  %753 = vmatpush1.bf16.msra.mxu0 0
  %754 = vmatprep.subr.bf16.mxu0 0
  %755 = vmatpush1.bf16.msra.mxu0 0
  %756 = vmatprep.subr.bf16.mxu0 0
  %757 = vmatpush1.bf16.msra.mxu0 0
  %758 = vmatprep.subr.bf16.mxu0 0
  %759 = vmatpush1.bf16.msra.mxu0 0
  %760 = vmatprep.subr.bf16.mxu0 0
  %761 = vmatpush1.bf16.msra.mxu0 0
  %762 = vmatprep.subr.bf16.mxu0 0
  %763 = vmatpush1.bf16.msra.mxu0 0
  %764 = vmatprep.subr.bf16.mxu0 0
  %765 = vmatpush1.bf16.msra.mxu0 %v748
  %766 = vmatprep.subr.bf16.mxu0 0
  %767 = vmatpush2.bf16.msra.mxu0 0
  %768 = vmatprep.subr.bf16.mxu0 0
  %769 = vmatpush2.bf16.msra.mxu0 0
  %770 = vmatprep.subr.bf16.mxu0 0
  %771 = vmatpush2.bf16.msra.mxu0 0
  %772 = vmatprep.subr.bf16.mxu0 0
  %773 = vmatpush2.bf16.msra.mxu0 0
  %774 = vmatprep.subr.bf16.mxu0 0
  %775 = vmatpush2.bf16.msra.mxu0 0
  %776 = vmatprep.subr.bf16.mxu0 0
  %777 = vmatpush2.bf16.msra.mxu0 0
  %778 = vmatprep.subr.bf16.mxu0 0
  %779 = vmatpush2.bf16.msra.mxu0 0
  %780 = vmatprep.subr.bf16.mxu0 0
  %781 = vmatpush2.bf16.msra.mxu0 0
  %782 = vmatprep.mubr.bf16.mxu0 0
  %783 = vmatmul.mubr.bf16.gmra.mxu0 %v745
  %v784 = vpop.f32.mrf.mxu0
  %v785 = vadd.f32 0.0, %v784
  %v786 = vpop.f32.mrf.mxu0
  %v787 = vpop.f32.mrf.mxu0
  %v788 = vpop.f32.mrf.mxu0
  %789 = vdwg.mxu0
  %v790 = vpack.c.bf16 %v689, %v689
  %v791 = vpack.c.bf16 %v735, %v735
  %792 = vxpose.xlu0.c.b16.start [1/8] %v790, 128
  %793 = vxpose.xlu0.c.b16.cont [2/8] 0, 128
  %794 = vxpose.xlu0.c.b16.cont [3/8] 0, 128
  %795 = vxpose.xlu0.c.b16.cont [4/8] 0, 128
  %796 = vxpose.xlu0.c.b16.cont [5/8] 0, 128
  %797 = vxpose.xlu0.c.b16.cont [6/8] 0, 128
  %798 = vxpose.xlu0.c.b16.cont [7/8] 0, 128
  %799 = vxpose.xlu0.c.b16.end [8/8] 0, 128
  %v800 = vpop.trf.xlu0
  %v801 = vpop.trf.xlu0
  %v802 = vpop.trf.xlu0
  %v803 = vpop.trf.xlu0
  %v804 = vpop.trf.xlu0
  %v805 = vpop.trf.xlu0
  %v806 = vpop.trf.xlu0
  %v807 = vpop.trf.xlu0
  %v809 = vsel %vm246, %v800, 0
  %v812 = vsel %vm246, %v801, 0
  %v815 = vsel %vm246, %v802, 0
  %v818 = vsel %vm246, %v803, 0
  %v821 = vsel %vm259, %v791, 0
  %823 = vmatprep.subr.bf16.mxu0 0
  %824 = vmatpush1.bf16.msra.mxu0 0
  %825 = vmatprep.subr.bf16.mxu0 0
  %826 = vmatpush1.bf16.msra.mxu0 0
  %827 = vmatprep.subr.bf16.mxu0 0
  %828 = vmatpush1.bf16.msra.mxu0 0
  %829 = vmatprep.subr.bf16.mxu0 0
  %830 = vmatpush1.bf16.msra.mxu0 0
  %831 = vmatprep.subr.bf16.mxu0 0
  %832 = vmatpush1.bf16.msra.mxu0 0
  %833 = vmatprep.subr.bf16.mxu0 0
  %834 = vmatpush1.bf16.msra.mxu0 0
  %835 = vmatprep.subr.bf16.mxu0 0
  %836 = vmatpush1.bf16.msra.mxu0 0
  %837 = vmatprep.subr.bf16.mxu0 0
  %838 = vmatpush1.bf16.msra.mxu0 %v821
  %839 = vmatprep.subr.bf16.mxu0 0
  %840 = vmatpush2.bf16.msra.mxu0 0
  %841 = vmatprep.subr.bf16.mxu0 0
  %842 = vmatpush2.bf16.msra.mxu0 0
  %843 = vmatprep.subr.bf16.mxu0 0
  %844 = vmatpush2.bf16.msra.mxu0 0
  %845 = vmatprep.subr.bf16.mxu0 0
  %846 = vmatpush2.bf16.msra.mxu0 0
  %847 = vmatprep.subr.bf16.mxu0 0
  %848 = vmatpush2.bf16.msra.mxu0 0
  %849 = vmatprep.subr.bf16.mxu0 0
  %850 = vmatpush2.bf16.msra.mxu0 0
  %851 = vmatprep.subr.bf16.mxu0 0
  %852 = vmatpush2.bf16.msra.mxu0 0
  %853 = vmatprep.subr.bf16.mxu0 0
  %854 = vmatpush2.bf16.msra.mxu0 0
  %855 = vmatprep.mubr.bf16.mxu0 0
  %856 = vmatmul.mubr.bf16.gmra.mxu0 %v809
  %v857 = vpop.f32.mrf.mxu0
  %v858 = vadd.f32 %v40, %v857
  %v859 = vpop.f32.mrf.mxu0
  %v860 = vpop.f32.mrf.mxu0
  %v861 = vadd.f32 %v41, %v860
  %v862 = vpop.f32.mrf.mxu0
  %863 = vmatprep.mubr.bf16.mxu0 0
  %864 = vmatmul.mubr.bf16.gmra.mxu0 %v812
  %v865 = vpop.f32.mrf.mxu0
  %v866 = vadd.f32 %v42, %v865
  %v867 = vpop.f32.mrf.mxu0
  %v868 = vpop.f32.mrf.mxu0
  %v869 = vadd.f32 %v43, %v868
  %v870 = vpop.f32.mrf.mxu0
  %871 = vmatprep.mubr.bf16.mxu0 0
  %872 = vmatmul.mubr.bf16.gmra.mxu0 %v815
  %v873 = vpop.f32.mrf.mxu0
  %v874 = vadd.f32 %v44, %v873
  %v875 = vpop.f32.mrf.mxu0
  %v876 = vpop.f32.mrf.mxu0
  %v877 = vadd.f32 %v45, %v876
  %v878 = vpop.f32.mrf.mxu0
  %879 = vmatprep.mubr.bf16.mxu0 0
  %880 = vmatmul.mubr.bf16.gmra.mxu0 %v818
  %v881 = vpop.f32.mrf.mxu0
  %v882 = vadd.f32 %v46, %v881
  %v883 = vpop.f32.mrf.mxu0
  %v884 = vpop.f32.mrf.mxu0
  %v885 = vpop.f32.mrf.mxu0
  %886 = vdwg.mxu0
  %v887 = vsel %vm327, %v858, -inf
  %888 = vmax.xlane.f32.xlu0 %v887
  %v889 = vpop.xlane.xlu0 %888
  %v890 = vsel %vm327, %v861, -inf
  %891 = vmax.xlane.f32.xlu0 %v890
  %v892 = vpop.xlane.xlu0 %891
  %v893 = vsel %vm327, %v866, -inf
  %894 = vmax.xlane.f32.xlu0 %v893
  %v895 = vpop.xlane.xlu0 %894
  %v896 = vsel %vm327, %v869, -inf
  %897 = vmax.xlane.f32.xlu0 %v896
  %v898 = vpop.xlane.xlu0 %897
  %v899 = vsel %vm327, %v874, -inf
  %900 = vmax.xlane.f32.xlu0 %v899
  %v901 = vpop.xlane.xlu0 %900
  %v902 = vsel %vm327, %v877, -inf
  %903 = vmax.xlane.f32.xlu0 %v902
  %v904 = vpop.xlane.xlu0 %903
  %v905 = vsel %vm327, %v882, -inf
  %906 = vmax.xlane.f32.xlu0 %v905
  %v907 = vpop.xlane.xlu0 %906
  %v908 = vsub.f32 %v858, %v889
  %v909 = vsub.f32 %v861, %v892
  %v910 = vsub.f32 %v866, %v895
  %v911 = vsub.f32 %v869, %v898
  %v912 = vsub.f32 %v874, %v901
  %v913 = vsub.f32 %v877, %v904
  %v914 = vsub.f32 %v882, %v907
  %v915 = vmul.f32 %v908, 1.442695
  %v916 = vpow.pop %v915
  %v917 = vmul.f32 %v909, 1.442695
  %v918 = vpow.pop %v917
  %v919 = vmul.f32 %v910, 1.442695
  %v920 = vpow.pop %v919
  %v921 = vmul.f32 %v911, 1.442695
  %v922 = vpow.pop %v921
  %v923 = vmul.f32 %v912, 1.442695
  %v924 = vpow.pop %v923
  %v925 = vmul.f32 %v913, 1.442695
  %v926 = vpow.pop %v925
  %v927 = vmul.f32 %v914, 1.442695
  %v928 = vpow.pop %v927
  %v929 = vsel %vm327, %v916, 0.0
  %930 = vadd.xlane.f32.xlu0 %v929
  %v931 = vpop.xlane.xlu0 %930
  %v932 = vsel %vm327, %v918, 0.0
  %933 = vadd.xlane.f32.xlu0 %v932
  %v934 = vpop.xlane.xlu0 %933
  %v935 = vsel %vm327, %v920, 0.0
  %936 = vadd.xlane.f32.xlu0 %v935
  %v937 = vpop.xlane.xlu0 %936
  %v938 = vsel %vm327, %v922, 0.0
  %939 = vadd.xlane.f32.xlu0 %v938
  %v940 = vpop.xlane.xlu0 %939
  %v941 = vsel %vm327, %v924, 0.0
  %942 = vadd.xlane.f32.xlu0 %v941
  %v943 = vpop.xlane.xlu0 %942
  %v944 = vsel %vm327, %v926, 0.0
  %945 = vadd.xlane.f32.xlu0 %v944
  %v946 = vpop.xlane.xlu0 %945
  %v947 = vsel %vm327, %v928, 0.0
  %948 = vadd.xlane.f32.xlu0 %v947
  %v949 = vpop.xlane.xlu0 %948
  %v950 = vrcp.pop %v931
  %v951 = vrcp.pop %v934
  %v952 = vrcp.pop %v937
  %v953 = vrcp.pop %v940
  %v954 = vrcp.pop %v943
  %v955 = vrcp.pop %v946
  %v956 = vrcp.pop %v949
  %v957 = vmul.f32 %v916, %v950
  %v958 = vmul.f32 %v918, %v951
  %v959 = vmul.f32 %v920, %v952
  %v960 = vmul.f32 %v922, %v953
  %v961 = vmul.f32 %v924, %v954
  %v962 = vmul.f32 %v926, %v955
  %v963 = vmul.f32 %v928, %v956
  %v964 = vpack.c.bf16 %v785, %v785
  %v965 = vpack.c.bf16 %v958, %v957
  %v966 = vpack.c.bf16 %v960, %v959
  %v967 = vpack.c.bf16 %v962, %v961
  %v968 = vpack.c.bf16 %v963, %v963
  %v970 = vsel %vm327, %v964, 0
  %v973 = vsel %vm327, %v965, 0
  %v976 = vsel %vm327, %v966, 0
  %v979 = vsel %vm327, %v967, 0
  %v982 = vsel %vm327, %v968, 0
  %984 = vmatprep.subr.bf16.mxu0 0
  %985 = vmatpush1.bf16.xpose.msra.mxu0 0
  %986 = vmatprep.subr.bf16.mxu0 0
  %987 = vmatpush1.bf16.xpose.msra.mxu0 0
  %988 = vmatprep.subr.bf16.mxu0 0
  %989 = vmatpush1.bf16.xpose.msra.mxu0 0
  %990 = vmatprep.subr.bf16.mxu0 0
  %991 = vmatpush1.bf16.xpose.msra.mxu0 0
  %992 = vmatprep.subr.bf16.mxu0 0
  %993 = vmatpush1.bf16.xpose.msra.mxu0 %v982
  %994 = vmatprep.subr.bf16.mxu0 0
  %995 = vmatpush1.bf16.xpose.msra.mxu0 %v979
  %996 = vmatprep.subr.bf16.mxu0 0
  %997 = vmatpush1.bf16.xpose.msra.mxu0 %v976
  %998 = vmatprep.subr.bf16.mxu0 0
  %999 = vmatpush1.bf16.xpose.msra.mxu0 %v973
  %1000 = vmatprep.subr.bf16.mxu0 0
  %1001 = vmatpush2.bf16.xpose.msra.mxu0 0
  %1002 = vmatprep.subr.bf16.mxu0 0
  %1003 = vmatpush2.bf16.xpose.msra.mxu0 0
  %1004 = vmatprep.subr.bf16.mxu0 0
  %1005 = vmatpush2.bf16.xpose.msra.mxu0 0
  %1006 = vmatprep.subr.bf16.mxu0 0
  %1007 = vmatpush2.bf16.xpose.msra.mxu0 0
  %1008 = vmatprep.subr.bf16.mxu0 0
  %1009 = vmatpush2.bf16.xpose.msra.mxu0 0
  %1010 = vmatprep.subr.bf16.mxu0 0
  %1011 = vmatpush2.bf16.xpose.msra.mxu0 0
  %1012 = vmatprep.subr.bf16.mxu0 0
  %1013 = vmatpush2.bf16.xpose.msra.mxu0 0
  %1014 = vmatprep.subr.bf16.mxu0 0
  %1015 = vmatpush2.bf16.xpose.msra.mxu0 0
  %1016 = vmatprep.mubr.bf16.mxu0 0
  %1017 = vmatmul.mubr.bf16.gmra.mxu0 %v970
  %v1018 = vpop.f32.mrf.mxu0
  %v1019 = vadd.f32 0.0, %v1018
  %v1020 = vpop.f32.mrf.mxu0
  %v1021 = vpop.f32.mrf.mxu0
  %v1022 = vpop.f32.mrf.mxu0
  %1023 = vdwg.mxu0
  %s1024 = scalar_lea.vmem %s6, 8
  %v1025 = vld [vmem:[%s1024] sm:$0xff]
  %v1026 = vpack.c.bf16 %v1025, %v1025
  %v1027 = vpack.c.bf16 %v1019, %v1019
  %v1029 = vsel %vm246, %v1026, 0
  %v1032 = vsel %vm259, %v1027, 0
  %1034 = vmatprep.subr.bf16.mxu0 0
  %1035 = vmatpush1.bf16.msra.mxu0 0
  %1036 = vmatprep.subr.bf16.mxu0 0
  %1037 = vmatpush1.bf16.msra.mxu0 0
  %1038 = vmatprep.subr.bf16.mxu0 0
  %1039 = vmatpush1.bf16.msra.mxu0 0
  %1040 = vmatprep.subr.bf16.mxu0 0
  %1041 = vmatpush1.bf16.msra.mxu0 0
  %1042 = vmatprep.subr.bf16.mxu0 0
  %1043 = vmatpush1.bf16.msra.mxu0 0
  %1044 = vmatprep.subr.bf16.mxu0 0
  %1045 = vmatpush1.bf16.msra.mxu0 0
  %1046 = vmatprep.subr.bf16.mxu0 0
  %1047 = vmatpush1.bf16.msra.mxu0 0
  %1048 = vmatprep.subr.bf16.mxu0 0
  %1049 = vmatpush1.bf16.msra.mxu0 %v1032
  %1050 = vmatprep.subr.bf16.mxu0 0
  %1051 = vmatpush2.bf16.msra.mxu0 0
  %1052 = vmatprep.subr.bf16.mxu0 0
  %1053 = vmatpush2.bf16.msra.mxu0 0
  %1054 = vmatprep.subr.bf16.mxu0 0
  %1055 = vmatpush2.bf16.msra.mxu0 0
  %1056 = vmatprep.subr.bf16.mxu0 0
  %1057 = vmatpush2.bf16.msra.mxu0 0
  %1058 = vmatprep.subr.bf16.mxu0 0
  %1059 = vmatpush2.bf16.msra.mxu0 0
  %1060 = vmatprep.subr.bf16.mxu0 0
  %1061 = vmatpush2.bf16.msra.mxu0 0
  %1062 = vmatprep.subr.bf16.mxu0 0
  %1063 = vmatpush2.bf16.msra.mxu0 0
  %1064 = vmatprep.subr.bf16.mxu0 0
  %1065 = vmatpush2.bf16.msra.mxu0 0
  %1066 = vmatprep.mubr.bf16.mxu0 0
  %1067 = vmatmul.mubr.bf16.gmra.mxu0 %v1029
  %v1068 = vpop.f32.mrf.mxu0
  %v1069 = vadd.f32 0.0, %v1068
  %v1070 = vpop.f32.mrf.mxu0
  %v1071 = vpop.f32.mrf.mxu0
  %v1072 = vpop.f32.mrf.mxu0
  %1073 = vdwg.mxu0
  %v1074 = vadd.f32 %v626, %v1069
  %s1075 = scalar_lea.vmem %s7, 8
  %v1076 = vld [vmem:[%s1075] sm:$0xff]
  %v1077 = vpack.c.bf16 %v1076, %v1076
  %v1078 = vpack.c.bf16 %v1074, %v1074
  %s1079 = scalar_lea.vmem %s8, 8
  %v1080 = vld [vmem:[%s1079] sm:$0xff]
  %1082 = vset.pattern.permute.xlu0 0
  %1083 = vperm.xlu0 %1082, %v1080
  %v1084 = vpop.permute.xlu0 %1083
  %v1087 = vsel %vm181, %v1077, 0
  %v1090 = vsel %vm89, %v1078, 0
  %1092 = vmatprep.subr.bf16.mxu0 0
  %1093 = vmatpush1.bf16.msra.mxu0 0
  %1094 = vmatprep.subr.bf16.mxu0 0
  %1095 = vmatpush1.bf16.msra.mxu0 0
  %1096 = vmatprep.subr.bf16.mxu0 0
  %1097 = vmatpush1.bf16.msra.mxu0 0
  %1098 = vmatprep.subr.bf16.mxu0 0
  %1099 = vmatpush1.bf16.msra.mxu0 0
  %1100 = vmatprep.subr.bf16.mxu0 0
  %1101 = vmatpush1.bf16.msra.mxu0 0
  %1102 = vmatprep.subr.bf16.mxu0 0
  %1103 = vmatpush1.bf16.msra.mxu0 0
  %1104 = vmatprep.subr.bf16.mxu0 0
  %1105 = vmatpush1.bf16.msra.mxu0 0
  %1106 = vmatprep.subr.bf16.mxu0 0
  %1107 = vmatpush1.bf16.msra.mxu0 %v1090
  %1108 = vmatprep.subr.bf16.mxu0 0
  %1109 = vmatpush2.bf16.msra.mxu0 0
  %1110 = vmatprep.subr.bf16.mxu0 0
  %1111 = vmatpush2.bf16.msra.mxu0 0
  %1112 = vmatprep.subr.bf16.mxu0 0
  %1113 = vmatpush2.bf16.msra.mxu0 0
  %1114 = vmatprep.subr.bf16.mxu0 0
  %1115 = vmatpush2.bf16.msra.mxu0 0
  %1116 = vmatprep.subr.bf16.mxu0 0
  %1117 = vmatpush2.bf16.msra.mxu0 0
  %1118 = vmatprep.subr.bf16.mxu0 0
  %1119 = vmatpush2.bf16.msra.mxu0 0
  %1120 = vmatprep.subr.bf16.mxu0 0
  %1121 = vmatpush2.bf16.msra.mxu0 0
  %1122 = vmatprep.subr.bf16.mxu0 0
  %1123 = vmatpush2.bf16.msra.mxu0 0
  %1124 = vmatprep.mubr.bf16.mxu0 0
  %1125 = vmatmul.mubr.bf16.gmra.mxu0 %v1087
  %v1126 = vpop.f32.mrf.mxu0
  %v1127 = vadd.f32 %v1084, %v1126
  %v1128 = vpop.f32.mrf.mxu0
  %v1129 = vpop.f32.mrf.mxu0
  %v1130 = vpop.f32.mrf.mxu0
  %1131 = vdwg.mxu0
  %v1132 = vmax.f32 %v1127, 0.0
  %s1133 = scalar_lea.vmem %s9, 8
  %v1134 = vld [vmem:[%s1133] sm:$0xff]
  %v1135 = vpack.c.bf16 %v1134, %v1134
  %v1136 = vpack.c.bf16 %v1132, %v1132
  %s1137 = scalar_lea.vmem %s10, 8
  %v1138 = vld [vmem:[%s1137] sm:$0xff]
  %1140 = vset.pattern.permute.xlu0 0
  %1141 = vperm.xlu0 %1140, %v1138
  %v1142 = vpop.permute.xlu0 %1141
  %v1145 = vsel %vm181, %v1135, 0
  %v1148 = vsel %vm89, %v1136, 0
  %1150 = vmatprep.subr.bf16.mxu0 0
  %1151 = vmatpush1.bf16.msra.mxu0 0
  %1152 = vmatprep.subr.bf16.mxu0 0
  %1153 = vmatpush1.bf16.msra.mxu0 0
  %1154 = vmatprep.subr.bf16.mxu0 0
  %1155 = vmatpush1.bf16.msra.mxu0 0
  %1156 = vmatprep.subr.bf16.mxu0 0
  %1157 = vmatpush1.bf16.msra.mxu0 0
  %1158 = vmatprep.subr.bf16.mxu0 0
  %1159 = vmatpush1.bf16.msra.mxu0 0
  %1160 = vmatprep.subr.bf16.mxu0 0
  %1161 = vmatpush1.bf16.msra.mxu0 0
  %1162 = vmatprep.subr.bf16.mxu0 0
  %1163 = vmatpush1.bf16.msra.mxu0 0
  %1164 = vmatprep.subr.bf16.mxu0 0
  %1165 = vmatpush1.bf16.msra.mxu0 %v1148
  %1166 = vmatprep.subr.bf16.mxu0 0
  %1167 = vmatpush2.bf16.msra.mxu0 0
  %1168 = vmatprep.subr.bf16.mxu0 0
  %1169 = vmatpush2.bf16.msra.mxu0 0
  %1170 = vmatprep.subr.bf16.mxu0 0
  %1171 = vmatpush2.bf16.msra.mxu0 0
  %1172 = vmatprep.subr.bf16.mxu0 0
  %1173 = vmatpush2.bf16.msra.mxu0 0
  %1174 = vmatprep.subr.bf16.mxu0 0
  %1175 = vmatpush2.bf16.msra.mxu0 0
  %1176 = vmatprep.subr.bf16.mxu0 0
  %1177 = vmatpush2.bf16.msra.mxu0 0
  %1178 = vmatprep.subr.bf16.mxu0 0
  %1179 = vmatpush2.bf16.msra.mxu0 0
  %1180 = vmatprep.subr.bf16.mxu0 0
  %1181 = vmatpush2.bf16.msra.mxu0 0
  %1182 = vmatprep.mubr.bf16.mxu0 0
  %1183 = vmatmul.mubr.bf16.gmra.mxu0 %v1145
  %v1184 = vpop.f32.mrf.mxu0
  %v1185 = vadd.f32 %v1142, %v1184
  %v1186 = vpop.f32.mrf.mxu0
  %v1187 = vpop.f32.mrf.mxu0
  %v1188 = vpop.f32.mrf.mxu0
  %1189 = vdwg.mxu0
  %v1190 = vadd.f32 %v1074, %v1185
  %1191 = vst.msk [vmem:[%s11] sm:$0xff] %vm327, %v1190
  // Predicated region
  $region46: #{transformer_forward.6} parent=0 // pred_check
    _
  $region47: #{transformer_forward.6} parent=0 // pred_check_branch
    %1193 = sbr.rel (0) target = $region49
  $region48: #{transformer_forward.6} parent=0 // pred_region
    _
  $region49: #{transformer_forward.6} parent=0 // pred_fallthru
    _
  // Predicated region
  $region50: #{transformer_forward.6} parent=0 // pred_check
    _
  $region51: #{transformer_forward.6} parent=0 // pred_check_branch
    %1195 = sbr.rel (0) target = $region53
  $region52: #{transformer_forward.6} parent=0 // pred_region
    _
  $region53: #{transformer_forward.6} parent=0 // pred_fallthru
    _

</llo_original>
